<compile_context>
chip_gen: v6e
topology: v6e:2x2x1
jax: 0.10.0
libtpu: 0.0.40
codegen_flags: <defaults>
</compile_context>

<pallas_src>
import jax
import jax.numpy as jnp
from jax.experimental import pallas as pl
from jax.experimental.pallas import tpu as pltpu


HIDDEN = 512
OUT_PAD = 128          # MXU-friendly padding of the out=1 projection
WEIGHT_DTYPE = jnp.bfloat16


def _gelu_tanh(x):
    # tanh-approximate GELU (== jax.nn.gelu(approximate=True)); tanh -> EUP.
    c = 0.7978845608028654  # sqrt(2/pi)
    return 0.5 * x * (1.0 + jnp.tanh(c * (x + 0.044715 * (x * x * x))))


def critic_head_kernel(
    s_ref, a_ref,
    w1s, w1a, b1, w2, b2, w3, b3, w4, b4, w5, b5,
    out_ref,
):
    # One grid point = one Q head (axis 0) x one batch tile (axis 1).
    dt = w1s.dtype

    # Layer 1 with the concat fused: dot(state, W1[:sd]) + dot(action, W1[sd:]).
    y = (
        jnp.dot(s_ref[...].astype(dt), w1s[0], preferred_element_type=jnp.float32)
        + jnp.dot(a_ref[...].astype(dt), w1a[0], preferred_element_type=jnp.float32)
        + b1[0]
    )
    h = _gelu_tanh(y).astype(dt)

    # Hidden layers 2..4.
    for w, b in ((w2, b2), (w3, b3), (w4, b4)):
        y = jnp.dot(h, w[0], preferred_element_type=jnp.float32) + b[0]
        h = _gelu_tanh(y).astype(dt)

    # Final projection (padded to OUT_PAD columns for the MXU); keep lane 0.
    q = jnp.dot(h, w5[0], preferred_element_type=jnp.float32) + b5[0]   # (bb, OUT_PAD)
    out_ref[0] = q[:, :1].astype(out_ref.dtype)                         # compact (bb, 1)


def _init_linear(key, in_features, out_features):
    """Mimics nn.Linear's uniform(-1/sqrt(fan_in), 1/sqrt(fan_in)) init."""
    kw, kb = jax.random.split(key)
    bound = 1.0 / (in_features ** 0.5)
    w = jax.random.uniform(kw, (in_features, out_features), jnp.float32, -bound, bound)
    b = jax.random.uniform(kb, (1, out_features), jnp.float32, -bound, bound)
    return w, b


def make_critic_params(key, state_dim, action_dim, weight_dtype=WEIGHT_DTYPE):
    """Returns the flat param list [w1s, w1a, b1, w2, b2, w3, b3, w4, b4, w5, b5].

    Each weight is (2, in, out) in `weight_dtype` (head-stacked, transposed vs
    PyTorch); biases are (2, 1, out) f32.  W1 is split into state/action parts
    (concat fused into the kernel); the final layer is padded to OUT_PAD cols.
    """
    sa_dim = state_dim + action_dim
    layer_dims = [(sa_dim, HIDDEN), (HIDDEN, HIDDEN), (HIDDEN, HIDDEN),
                  (HIDDEN, HIDDEN), (HIDDEN, 1)]
    keys = jax.random.split(key, 10)       # l1..l5 (head 0), l6..l10 (head 1)

    heads = []
    for h in range(2):
        layers = []
        for li, (din, dout) in enumerate(layer_dims):
            layers.append(_init_linear(keys[h * 5 + li], din, dout))
        heads.append(layers)

    def stacked(li):
        w = jnp.stack([heads[0][li][0], heads[1][li][0]])   # (2, din, dout)
        b = jnp.stack([heads[0][li][1], heads[1][li][1]])   # (2, 1,  dout)
        return w, b

    w1, b1 = stacked(0)
    w1s, w1a = w1[:, :state_dim, :], w1[:, state_dim:, :]
    w2, b2 = stacked(1)
    w3, b3 = stacked(2)
    w4, b4 = stacked(3)
    w5, b5 = stacked(4)
    w5 = jnp.pad(w5, ((0, 0), (0, 0), (0, OUT_PAD - 1)))
    b5 = jnp.pad(b5, ((0, 0), (0, 0), (0, OUT_PAD - 1)))

    c = lambda w: w.astype(weight_dtype)
    f = lambda b: b.astype(jnp.float32)
    return [c(w1s), c(w1a), f(b1), c(w2), f(b2), c(w3), f(b3),
            c(w4), f(b4), c(w5), f(b5)]


def critic_forward(state, action, params):
    """Returns (q1, q2), each (batch, 1) f32."""
    batch, state_dim = state.shape
    _, action_dim = action.shape

    # Batch tiling: single block up to 512 rows, 512-row tiles beyond that.
    bb = batch if batch <= 512 else 512
    n_batch_blocks = pl.cdiv(batch, bb)
    grid = (2, n_batch_blocks)                      # (head, batch-tile)

    def param_spec(arr):
        # Weights/biases select only on the head axis -> VMEM-resident across
        # the (inner) batch-tile loop for a given head.
        _, d1, d2 = arr.shape
        return pl.BlockSpec((1, d1, d2), lambda h, b: (h, 0, 0))

    in_specs = [
        pl.BlockSpec((bb, state_dim), lambda h, b: (b, 0)),
        pl.BlockSpec((bb, action_dim), lambda h, b: (b, 0)),
    ] + [param_spec(p) for p in params]

    out_spec = pl.BlockSpec((1, bb, 1), lambda h, b: (h, b, 0))
    out_shape = jax.ShapeDtypeStruct((2, batch, 1), jnp.float32)

    out = pl.pallas_call(
        critic_head_kernel,
        out_shape=out_shape,
        grid=grid,
        in_specs=in_specs,
        out_specs=out_spec,
        compiler_params=pltpu.CompilerParams(
            # Head axis parallel (megacore splits heads across v7x's 2 TCs);
            # batch axis arbitrary so megacore never splits on it.
            dimension_semantics=("parallel", "arbitrary"),
            vmem_limit_bytes=32 << 20,
        ),
    )(state, action, *params)

    return out[0], out[1]


def critic_forward_ref(state, action, params):
    """Pure-JAX reference mirroring the kernel's cast points and GELU."""
    w1s, w1a, b1, w2, b2, w3, b3, w4, b4, w5, b5 = params
    dt = w1s.dtype

    qs = []
    for h in range(2):
        y = (jnp.dot(state.astype(dt), w1s[h], preferred_element_type=jnp.float32)
             + jnp.dot(action.astype(dt), w1a[h], preferred_element_type=jnp.float32)
             + b1[h])
        x = _gelu_tanh(y).astype(dt)
        for w, b in ((w2, b2), (w3, b3), (w4, b4)):
            y = jnp.dot(x, w[h], preferred_element_type=jnp.float32) + b[h]
            x = _gelu_tanh(y).astype(dt)
        q = jnp.dot(x, w5[h], preferred_element_type=jnp.float32) + b5[h]
        qs.append(q[:, :1])
    return qs[0], qs[1]


if __name__ == "__main__":
    key = jax.random.PRNGKey(0)
    k_state, k_action, k_params = jax.random.split(key, 3)

    batch = 8
    state_dim = 24
    action_dim = 8

    state = jax.random.normal(k_state, (batch, state_dim), jnp.float32)
    action = jax.random.normal(k_action, (batch, action_dim), jnp.float32)
    params = make_critic_params(k_params, state_dim, action_dim)

    q1, q2 = critic_forward(state, action, params)
    jax.block_until_ready((q1, q2))

    q1_ref, q2_ref = critic_forward_ref(state, action, params)
    assert q1.shape == (batch, 1) and q2.shape == (batch, 1)
    assert jnp.allclose(q1, q1_ref, atol=2e-3, rtol=2e-3)
    assert jnp.allclose(q2, q2_ref, atol=2e-3, rtol=2e-3)

    print("KERNEL_OK")
</pallas_src>

<mosaic_0001>
module attributes {stable_mosaic.version = 11 : i64} {
  func.func @critic_head_kernel(%arg0: i32, %arg1: i32, %arg2: memref<8x24xf32, #tpu.memory_space<vmem>>, %arg3: memref<8x8xf32, #tpu.memory_space<vmem>>, %arg4: memref<1x24x512xbf16, #tpu.memory_space<vmem>>, %arg5: memref<1x8x512xbf16, #tpu.memory_space<vmem>>, %arg6: memref<1x1x512xf32, #tpu.memory_space<vmem>>, %arg7: memref<1x512x512xbf16, #tpu.memory_space<vmem>>, %arg8: memref<1x1x512xf32, #tpu.memory_space<vmem>>, %arg9: memref<1x512x512xbf16, #tpu.memory_space<vmem>>, %arg10: memref<1x1x512xf32, #tpu.memory_space<vmem>>, %arg11: memref<1x512x512xbf16, #tpu.memory_space<vmem>>, %arg12: memref<1x1x512xf32, #tpu.memory_space<vmem>>, %arg13: memref<1x512x128xbf16, #tpu.memory_space<vmem>>, %arg14: memref<1x1x128xf32, #tpu.memory_space<vmem>>, %arg15: memref<1x8x1xf32, #tpu.memory_space<vmem>>) attributes {dimension_semantics = [#tpu.dimension_semantics<parallel>, #tpu.dimension_semantics<arbitrary>], iteration_bounds = array<i64: 2, 1>, scalar_prefetch = 0 : i64, scratch_operands = 0 : i64, tpu.core_type = #tpu.core_type<tc>, window_params = [{transform_indices = @transform_0, window_bounds = array<i64: 8, 24>}, {transform_indices = @transform_1, window_bounds = array<i64: 8, 8>}, {transform_indices = @transform_2, window_bounds = array<i64: 1, 24, 512>}, {transform_indices = @transform_3, window_bounds = array<i64: 1, 8, 512>}, {transform_indices = @transform_4, window_bounds = array<i64: 1, 1, 512>}, {transform_indices = @transform_5, window_bounds = array<i64: 1, 512, 512>}, {transform_indices = @transform_6, window_bounds = array<i64: 1, 1, 512>}, {transform_indices = @transform_7, window_bounds = array<i64: 1, 512, 512>}, {transform_indices = @transform_8, window_bounds = array<i64: 1, 1, 512>}, {transform_indices = @transform_9, window_bounds = array<i64: 1, 512, 512>}, {transform_indices = @transform_10, window_bounds = array<i64: 1, 1, 512>}, {transform_indices = @transform_11, window_bounds = array<i64: 1, 512, 128>}, {transform_indices = @transform_12, window_bounds = array<i64: 1, 1, 128>}, {transform_indices = @transform_13, window_bounds = array<i64: 1, 8, 1>}]} {
    %c0 = arith.constant 0 : index
    %c0_0 = arith.constant 0 : index
    %0 = vector.load %arg2[%c0, %c0_0] : memref<8x24xf32, #tpu.memory_space<vmem>>, vector<8x24xf32>
    %1 = arith.truncf %0 : vector<8x24xf32> to vector<8x24xbf16>
    %c0_1 = arith.constant 0 : index
    %c0_2 = arith.constant 0 : index
    %c0_3 = arith.constant 0 : index
    %2 = vector.load %arg4[%c0_1, %c0_2, %c0_3] : memref<1x24x512xbf16, #tpu.memory_space<vmem>>, vector<1x24x512xbf16>
    %3 = vector.shape_cast %2 : vector<1x24x512xbf16> to vector<24x512xbf16>
    %cst = arith.constant dense<0.000000e+00> : vector<8x512xf32>
    %4 = tpu.matmul %1, %3, %cst {dimension_numbers = #tpu.dot_dimension_numbers<[1], [0], [0], [1], [0, 0, 1, 1], [], []>} : vector<8x24xbf16>, vector<24x512xbf16>, vector<8x512xf32> -> vector<8x512xf32>
    %c0_4 = arith.constant 0 : index
    %c0_5 = arith.constant 0 : index
    %5 = vector.load %arg3[%c0_4, %c0_5] : memref<8x8xf32, #tpu.memory_space<vmem>>, vector<8x8xf32>
    %6 = arith.truncf %5 : vector<8x8xf32> to vector<8x8xbf16>
    %c0_6 = arith.constant 0 : index
    %c0_7 = arith.constant 0 : index
    %c0_8 = arith.constant 0 : index
    %7 = vector.load %arg5[%c0_6, %c0_7, %c0_8] : memref<1x8x512xbf16, #tpu.memory_space<vmem>>, vector<1x8x512xbf16>
    %8 = vector.shape_cast %7 : vector<1x8x512xbf16> to vector<8x512xbf16>
    %cst_9 = arith.constant dense<0.000000e+00> : vector<8x512xf32>
    %9 = tpu.matmul %6, %8, %cst_9 {dimension_numbers = #tpu.dot_dimension_numbers<[1], [0], [0], [1], [0, 0, 1, 1], [], []>} : vector<8x8xbf16>, vector<8x512xbf16>, vector<8x512xf32> -> vector<8x512xf32>
    %10 = arith.addf %4, %9 : vector<8x512xf32>
    %c0_10 = arith.constant 0 : index
    %c0_11 = arith.constant 0 : index
    %c0_12 = arith.constant 0 : index
    %11 = vector.load %arg6[%c0_10, %c0_11, %c0_12] : memref<1x1x512xf32, #tpu.memory_space<vmem>>, vector<1x1x512xf32>
    %12 = vector.shape_cast %11 : vector<1x1x512xf32> to vector<1x512xf32>
    %13 = vector.broadcast %12 : vector<1x512xf32> to vector<8x512xf32>
    %14 = arith.addf %10, %13 : vector<8x512xf32>
    %cst_13 = arith.constant 5.000000e-01 : f32
    %15 = vector.broadcast %cst_13 : f32 to vector<8x512xf32>
    %16 = arith.mulf %15, %14 : vector<8x512xf32>
    %17 = arith.mulf %14, %14 : vector<8x512xf32>
    %18 = arith.mulf %17, %14 : vector<8x512xf32>
    %cst_14 = arith.constant 4.471500e-02 : f32
    %19 = vector.broadcast %cst_14 : f32 to vector<8x512xf32>
    %20 = arith.mulf %19, %18 : vector<8x512xf32>
    %21 = arith.addf %14, %20 : vector<8x512xf32>
    %cst_15 = arith.constant 0.797884583 : f32
    %22 = vector.broadcast %cst_15 : f32 to vector<8x512xf32>
    %23 = arith.mulf %22, %21 : vector<8x512xf32>
    %24 = math.tanh %23 : vector<8x512xf32>
    %cst_16 = arith.constant 1.000000e+00 : f32
    %25 = vector.broadcast %cst_16 : f32 to vector<8x512xf32>
    %26 = arith.addf %25, %24 : vector<8x512xf32>
    %27 = arith.mulf %16, %26 : vector<8x512xf32>
    %28 = arith.truncf %27 : vector<8x512xf32> to vector<8x512xbf16>
    %c0_17 = arith.constant 0 : index
    %c0_18 = arith.constant 0 : index
    %c0_19 = arith.constant 0 : index
    %29 = vector.load %arg7[%c0_17, %c0_18, %c0_19] : memref<1x512x512xbf16, #tpu.memory_space<vmem>>, vector<1x512x512xbf16>
    %30 = vector.shape_cast %29 : vector<1x512x512xbf16> to vector<512x512xbf16>
    %cst_20 = arith.constant dense<0.000000e+00> : vector<8x512xf32>
    %31 = tpu.matmul %28, %30, %cst_20 {dimension_numbers = #tpu.dot_dimension_numbers<[1], [0], [0], [1], [0, 0, 1, 1], [], []>} : vector<8x512xbf16>, vector<512x512xbf16>, vector<8x512xf32> -> vector<8x512xf32>
    %c0_21 = arith.constant 0 : index
    %c0_22 = arith.constant 0 : index
    %c0_23 = arith.constant 0 : index
    %32 = vector.load %arg8[%c0_21, %c0_22, %c0_23] : memref<1x1x512xf32, #tpu.memory_space<vmem>>, vector<1x1x512xf32>
    %33 = vector.shape_cast %32 : vector<1x1x512xf32> to vector<1x512xf32>
    %34 = vector.broadcast %33 : vector<1x512xf32> to vector<8x512xf32>
    %35 = arith.addf %31, %34 : vector<8x512xf32>
    %cst_24 = arith.constant 5.000000e-01 : f32
    %36 = vector.broadcast %cst_24 : f32 to vector<8x512xf32>
    %37 = arith.mulf %36, %35 : vector<8x512xf32>
    %38 = arith.mulf %35, %35 : vector<8x512xf32>
    %39 = arith.mulf %38, %35 : vector<8x512xf32>
    %cst_25 = arith.constant 4.471500e-02 : f32
    %40 = vector.broadcast %cst_25 : f32 to vector<8x512xf32>
    %41 = arith.mulf %40, %39 : vector<8x512xf32>
    %42 = arith.addf %35, %41 : vector<8x512xf32>
    %cst_26 = arith.constant 0.797884583 : f32
    %43 = vector.broadcast %cst_26 : f32 to vector<8x512xf32>
    %44 = arith.mulf %43, %42 : vector<8x512xf32>
    %45 = math.tanh %44 : vector<8x512xf32>
    %cst_27 = arith.constant 1.000000e+00 : f32
    %46 = vector.broadcast %cst_27 : f32 to vector<8x512xf32>
    %47 = arith.addf %46, %45 : vector<8x512xf32>
    %48 = arith.mulf %37, %47 : vector<8x512xf32>
    %49 = arith.truncf %48 : vector<8x512xf32> to vector<8x512xbf16>
    %c0_28 = arith.constant 0 : index
    %c0_29 = arith.constant 0 : index
    %c0_30 = arith.constant 0 : index
    %50 = vector.load %arg9[%c0_28, %c0_29, %c0_30] : memref<1x512x512xbf16, #tpu.memory_space<vmem>>, vector<1x512x512xbf16>
    %51 = vector.shape_cast %50 : vector<1x512x512xbf16> to vector<512x512xbf16>
    %cst_31 = arith.constant dense<0.000000e+00> : vector<8x512xf32>
    %52 = tpu.matmul %49, %51, %cst_31 {dimension_numbers = #tpu.dot_dimension_numbers<[1], [0], [0], [1], [0, 0, 1, 1], [], []>} : vector<8x512xbf16>, vector<512x512xbf16>, vector<8x512xf32> -> vector<8x512xf32>
    %c0_32 = arith.constant 0 : index
    %c0_33 = arith.constant 0 : index
    %c0_34 = arith.constant 0 : index
    %53 = vector.load %arg10[%c0_32, %c0_33, %c0_34] : memref<1x1x512xf32, #tpu.memory_space<vmem>>, vector<1x1x512xf32>
    %54 = vector.shape_cast %53 : vector<1x1x512xf32> to vector<1x512xf32>
    %55 = vector.broadcast %54 : vector<1x512xf32> to vector<8x512xf32>
    %56 = arith.addf %52, %55 : vector<8x512xf32>
    %cst_35 = arith.constant 5.000000e-01 : f32
    %57 = vector.broadcast %cst_35 : f32 to vector<8x512xf32>
    %58 = arith.mulf %57, %56 : vector<8x512xf32>
    %59 = arith.mulf %56, %56 : vector<8x512xf32>
    %60 = arith.mulf %59, %56 : vector<8x512xf32>
    %cst_36 = arith.constant 4.471500e-02 : f32
    %61 = vector.broadcast %cst_36 : f32 to vector<8x512xf32>
    %62 = arith.mulf %61, %60 : vector<8x512xf32>
    %63 = arith.addf %56, %62 : vector<8x512xf32>
    %cst_37 = arith.constant 0.797884583 : f32
    %64 = vector.broadcast %cst_37 : f32 to vector<8x512xf32>
    %65 = arith.mulf %64, %63 : vector<8x512xf32>
    %66 = math.tanh %65 : vector<8x512xf32>
    %cst_38 = arith.constant 1.000000e+00 : f32
    %67 = vector.broadcast %cst_38 : f32 to vector<8x512xf32>
    %68 = arith.addf %67, %66 : vector<8x512xf32>
    %69 = arith.mulf %58, %68 : vector<8x512xf32>
    %70 = arith.truncf %69 : vector<8x512xf32> to vector<8x512xbf16>
    %c0_39 = arith.constant 0 : index
    %c0_40 = arith.constant 0 : index
    %c0_41 = arith.constant 0 : index
    %71 = vector.load %arg11[%c0_39, %c0_40, %c0_41] : memref<1x512x512xbf16, #tpu.memory_space<vmem>>, vector<1x512x512xbf16>
    %72 = vector.shape_cast %71 : vector<1x512x512xbf16> to vector<512x512xbf16>
    %cst_42 = arith.constant dense<0.000000e+00> : vector<8x512xf32>
    %73 = tpu.matmul %70, %72, %cst_42 {dimension_numbers = #tpu.dot_dimension_numbers<[1], [0], [0], [1], [0, 0, 1, 1], [], []>} : vector<8x512xbf16>, vector<512x512xbf16>, vector<8x512xf32> -> vector<8x512xf32>
    %c0_43 = arith.constant 0 : index
    %c0_44 = arith.constant 0 : index
    %c0_45 = arith.constant 0 : index
    %74 = vector.load %arg12[%c0_43, %c0_44, %c0_45] : memref<1x1x512xf32, #tpu.memory_space<vmem>>, vector<1x1x512xf32>
    %75 = vector.shape_cast %74 : vector<1x1x512xf32> to vector<1x512xf32>
    %76 = vector.broadcast %75 : vector<1x512xf32> to vector<8x512xf32>
    %77 = arith.addf %73, %76 : vector<8x512xf32>
    %cst_46 = arith.constant 5.000000e-01 : f32
    %78 = vector.broadcast %cst_46 : f32 to vector<8x512xf32>
    %79 = arith.mulf %78, %77 : vector<8x512xf32>
    %80 = arith.mulf %77, %77 : vector<8x512xf32>
    %81 = arith.mulf %80, %77 : vector<8x512xf32>
    %cst_47 = arith.constant 4.471500e-02 : f32
    %82 = vector.broadcast %cst_47 : f32 to vector<8x512xf32>
    %83 = arith.mulf %82, %81 : vector<8x512xf32>
    %84 = arith.addf %77, %83 : vector<8x512xf32>
    %cst_48 = arith.constant 0.797884583 : f32
    %85 = vector.broadcast %cst_48 : f32 to vector<8x512xf32>
    %86 = arith.mulf %85, %84 : vector<8x512xf32>
    %87 = math.tanh %86 : vector<8x512xf32>
    %cst_49 = arith.constant 1.000000e+00 : f32
    %88 = vector.broadcast %cst_49 : f32 to vector<8x512xf32>
    %89 = arith.addf %88, %87 : vector<8x512xf32>
    %90 = arith.mulf %79, %89 : vector<8x512xf32>
    %91 = arith.truncf %90 : vector<8x512xf32> to vector<8x512xbf16>
    %c0_50 = arith.constant 0 : index
    %c0_51 = arith.constant 0 : index
    %c0_52 = arith.constant 0 : index
    %92 = vector.load %arg13[%c0_50, %c0_51, %c0_52] : memref<1x512x128xbf16, #tpu.memory_space<vmem>>, vector<1x512x128xbf16>
    %93 = vector.shape_cast %92 : vector<1x512x128xbf16> to vector<512x128xbf16>
    %cst_53 = arith.constant dense<0.000000e+00> : vector<8x128xf32>
    %94 = tpu.matmul %91, %93, %cst_53 {dimension_numbers = #tpu.dot_dimension_numbers<[1], [0], [0], [1], [0, 0, 1, 1], [], []>} : vector<8x512xbf16>, vector<512x128xbf16>, vector<8x128xf32> -> vector<8x128xf32>
    %c0_54 = arith.constant 0 : index
    %c0_55 = arith.constant 0 : index
    %c0_56 = arith.constant 0 : index
    %95 = vector.load %arg14[%c0_54, %c0_55, %c0_56] : memref<1x1x128xf32, #tpu.memory_space<vmem>>, vector<1x1x128xf32>
    %96 = vector.shape_cast %95 : vector<1x1x128xf32> to vector<1x128xf32>
    %97 = vector.broadcast %96 : vector<1x128xf32> to vector<8x128xf32>
    %98 = arith.addf %94, %97 : vector<8x128xf32>
    %99 = vector.extract_strided_slice %98 {offsets = [0, 0], sizes = [8, 1], strides = [1, 1]} : vector<8x128xf32> to vector<8x1xf32>
    %c0_57 = arith.constant 0 : index
    %c0_58 = arith.constant 0 : index
    %c0_59 = arith.constant 0 : index
    %100 = vector.load %arg15[%c0_57, %c0_58, %c0_59] : memref<1x8x1xf32, #tpu.memory_space<vmem>>, vector<1x8x1xf32>
    %101 = vector.shape_cast %100 : vector<1x8x1xf32> to vector<8x1xf32>
    %102 = vector.shape_cast %99 : vector<8x1xf32> to vector<1x8x1xf32>
    tpu.vector_store %arg15[%c0_57, %c0_58, %c0_59], %102 {strides = array<i32>} : memref<1x8x1xf32, #tpu.memory_space<vmem>>, vector<1x8x1xf32>,
    return
  }
  func.func @transform_0(%arg0: i32, %arg1: i32) -> (i32, i32) {
    %c0_i32 = arith.constant 0 : i32
    %c0_i32_0 = arith.constant 0 : i32
    return %arg1, %c0_i32 : i32, i32
  }
  func.func @transform_1(%arg0: i32, %arg1: i32) -> (i32, i32) {
    %c0_i32 = arith.constant 0 : i32
    %c0_i32_0 = arith.constant 0 : i32
    return %arg1, %c0_i32 : i32, i32
  }
  func.func @transform_2(%arg0: i32, %arg1: i32) -> (i32, i32, i32) {
    %c0_i32 = arith.constant 0 : i32
    %c0_i32_0 = arith.constant 0 : i32
    %c0_i32_1 = arith.constant 0 : i32
    return %arg0, %c0_i32, %c0_i32_0 : i32, i32, i32
  }
  func.func @transform_3(%arg0: i32, %arg1: i32) -> (i32, i32, i32) {
    %c0_i32 = arith.constant 0 : i32
    %c0_i32_0 = arith.constant 0 : i32
    %c0_i32_1 = arith.constant 0 : i32
    return %arg0, %c0_i32, %c0_i32_0 : i32, i32, i32
  }
  func.func @transform_4(%arg0: i32, %arg1: i32) -> (i32, i32, i32) {
    %c0_i32 = arith.constant 0 : i32
    %c0_i32_0 = arith.constant 0 : i32
    %c0_i32_1 = arith.constant 0 : i32
    return %arg0, %c0_i32, %c0_i32_0 : i32, i32, i32
  }
  func.func @transform_5(%arg0: i32, %arg1: i32) -> (i32, i32, i32) {
    %c0_i32 = arith.constant 0 : i32
    %c0_i32_0 = arith.constant 0 : i32
    %c0_i32_1 = arith.constant 0 : i32
    return %arg0, %c0_i32, %c0_i32_0 : i32, i32, i32
  }
  func.func @transform_6(%arg0: i32, %arg1: i32) -> (i32, i32, i32) {
    %c0_i32 = arith.constant 0 : i32
    %c0_i32_0 = arith.constant 0 : i32
    %c0_i32_1 = arith.constant 0 : i32
    return %arg0, %c0_i32, %c0_i32_0 : i32, i32, i32
  }
  func.func @transform_7(%arg0: i32, %arg1: i32) -> (i32, i32, i32) {
    %c0_i32 = arith.constant 0 : i32
    %c0_i32_0 = arith.constant 0 : i32
    %c0_i32_1 = arith.constant 0 : i32
    return %arg0, %c0_i32, %c0_i32_0 : i32, i32, i32
  }
  func.func @transform_8(%arg0: i32, %arg1: i32) -> (i32, i32, i32) {
    %c0_i32 = arith.constant 0 : i32
    %c0_i32_0 = arith.constant 0 : i32
    %c0_i32_1 = arith.constant 0 : i32
    return %arg0, %c0_i32, %c0_i32_0 : i32, i32, i32
  }
  func.func @transform_9(%arg0: i32, %arg1: i32) -> (i32, i32, i32) {
    %c0_i32 = arith.constant 0 : i32
    %c0_i32_0 = arith.constant 0 : i32
    %c0_i32_1 = arith.constant 0 : i32
    return %arg0, %c0_i32, %c0_i32_0 : i32, i32, i32
  }
  func.func @transform_10(%arg0: i32, %arg1: i32) -> (i32, i32, i32) {
    %c0_i32 = arith.constant 0 : i32
    %c0_i32_0 = arith.constant 0 : i32
    %c0_i32_1 = arith.constant 0 : i32
    return %arg0, %c0_i32, %c0_i32_0 : i32, i32, i32
  }
  func.func @transform_11(%arg0: i32, %arg1: i32) -> (i32, i32, i32) {
    %c0_i32 = arith.constant 0 : i32
    %c0_i32_0 = arith.constant 0 : i32
    %c0_i32_1 = arith.constant 0 : i32
    return %arg0, %c0_i32, %c0_i32_0 : i32, i32, i32
  }
  func.func @transform_12(%arg0: i32, %arg1: i32) -> (i32, i32, i32) {
    %c0_i32 = arith.constant 0 : i32
    %c0_i32_0 = arith.constant 0 : i32
    %c0_i32_1 = arith.constant 0 : i32
    return %arg0, %c0_i32, %c0_i32_0 : i32, i32, i32
  }
  func.func @transform_13(%arg0: i32, %arg1: i32) -> (i32, i32, i32) {
    %c0_i32 = arith.constant 0 : i32
    %c0_i32_0 = arith.constant 0 : i32
    return %arg0, %arg1, %c0_i32 : i32, i32, i32
  }
}

</mosaic_0001>

<llo_original>
// kernel: tpu_custom_call.1
$region0: #{tpu_custom_call.1}
  #allocation0 [shape = 'u32[]', space=smem, size = 0x4, offset = 0x4, fixed_abs, tag = 'smem constant byte address 0x4 - core index']
  #allocation1 [shape = 'u32[144,128]{1,0:T(1,128)}', space=vmem, size = 0x12000, scoped, tag = 'internal scratch']
  %s0 = inlined_call_operand.hbm [shape: f32[8,24], index: 0, kind: input, shape index: {}]
  %s1 = inlined_call_operand.hbm [shape: f32[8,8], index: 1, kind: input, shape index: {}]
  %s2 = inlined_call_operand.hbm [shape: bf16[2,24,512], index: 2, kind: input, shape index: {}]
  %s3 = inlined_call_operand.hbm [shape: bf16[2,8,512], index: 3, kind: input, shape index: {}]
  %s4 = inlined_call_operand.hbm [shape: f32[2,1,512], index: 4, kind: input, shape index: {}]
  %s5 = inlined_call_operand.hbm [shape: bf16[2,512,512], index: 5, kind: input, shape index: {}]
  %s6 = inlined_call_operand.vmem [shape: f32[2,1,512], index: 6, kind: input, shape index: {}]
  %s7 = inlined_call_operand.hbm [shape: bf16[2,512,512], index: 7, kind: input, shape index: {}]
  %s8 = inlined_call_operand.hbm [shape: f32[2,1,512], index: 8, kind: input, shape index: {}]
  %s9 = inlined_call_operand.hbm [shape: bf16[2,512,512], index: 9, kind: input, shape index: {}]
  %s10 = inlined_call_operand.vmem [shape: f32[2,1,512], index: 10, kind: input, shape index: {}]
  %s11 = inlined_call_operand.hbm [shape: bf16[2,512,128], index: 11, kind: input, shape index: {}]
  %s12 = inlined_call_operand.vmem [shape: f32[2,1,128], index: 12, kind: input, shape index: {}]
  %s13 = inlined_call_operand.vmem [shape: f32[2,8,1], index: 13, kind: output, shape index: {}]
  %s14 = sld [smem:[#allocation0]]
  $region125: #{tpu_custom_call.1} parent=0
    _
  %s16 = ssub.s32 1, %s14
  %s17 = scalar_select 0, %s16, %s14
  $region1: #{tpu_custom_call.1} parent=0
    #allocation2 [shape = 'u8[4096]{0}', space=vmem, size = 0x1000, scoped, tag = 'input window, operand 0, single buffered']
    #allocation3 [shape = 's32[2]{0}', space=sflag, size = 0x8, scoped, tag = 'scoped memory for tpu_custom_call.1']
    #allocation4 [shape = 'u8[4096]{0}', space=vmem, size = 0x1000, scoped, tag = 'input window, operand 1, single buffered']
    #allocation5 [shape = 's32[1]{0}', space=sflag, size = 0x4, scoped, tag = 'scoped memory for tpu_custom_call.1']
    #allocation6 [shape = 'u8[49152]{0}', space=vmem, size = 0xc000, scoped, tag = 'input window, operand 2']
    #allocation7 [shape = 'u8[16384]{0}', space=vmem, size = 0x4000, scoped, tag = 'input window, operand 3']
    #allocation8 [shape = 'u8[4096]{0}', space=vmem, size = 0x1000, scoped, tag = 'input window, operand 4']
    #allocation9 [shape = 'u8[1048576]{0}', space=vmem, size = 0x100000, scoped, tag = 'input window, operand 5']
    #allocation10 [shape = 'u8[1048576]{0}', space=vmem, size = 0x100000, scoped, tag = 'input window, operand 7']
    #allocation11 [shape = 'u8[4096]{0}', space=vmem, size = 0x1000, scoped, tag = 'input window, operand 8']
    #allocation12 [shape = 'u8[1048576]{0}', space=vmem, size = 0x100000, scoped, tag = 'input window, operand 9']
    #allocation13 [shape = 'u8[262144]{0}', space=vmem, size = 0x40000, scoped, tag = 'input window, operand 11']
    %18 = vsyncpa [#allocation3], 0
    %19 = vsyncpa [#allocation5], 0
    loop: start=0, step=1, limit=4
    $region2: #{tpu_custom_call.1} parent=1 // loop_pre_header
      _
    $region3: #{tpu_custom_call.1} parent=1 // loop_header
      %s21 = sphi 0, %s25
      %p22 = scmp.ge.s32.totalorder %s21, 4
      %s28 = sphi 0, %s40
      %s29 = sphi 0, %s36
      %s30 = sphi 0, %s28
      %s31 = sphi 0, %s29
      %s32 = sphi 0, %s30
      %s33 = sphi 0, %s31
      %s43 = sphi 0, %s45
      %s46 = sphi 0, %s43
      %s47 = sphi 0, %s46
      %s63 = sphi 0, %s47
      %s69 = sphi 0, %s71
      %s72 = sphi 0, %s69
      %s73 = sphi 0, %s72
      %s89 = sphi 0, %s73
      %s95 = sphi 0, %s97
      %s98 = sphi 0, %s95
      %s99 = sphi 0, %s98
      %s115 = sphi 0, %s99
      %s121 = sphi 0, %s123
      %s124 = sphi 0, %s121
      %s125 = sphi 0, %s124
      %s141 = sphi 0, %s125
      %s147 = sphi 0, %s149
      %s150 = sphi 0, %s147
      %s151 = sphi 0, %s150
      %s167 = sphi 0, %s151
      %s173 = sphi 0, %s175
      %s176 = sphi 0, %s173
      %s177 = sphi 0, %s176
      %s193 = sphi 0, %s177
      %s199 = sphi 0, %s201
      %s202 = sphi 0, %s199
      %s203 = sphi 0, %s202
      %s219 = sphi 0, %s203
      %s225 = sphi 0, %s227
      %s228 = sphi 0, %s225
      %s229 = sphi 0, %s228
      %s245 = sphi 0, %s229
      %s251 = sphi 0, %s253
      %s254 = sphi 0, %s251
      %s255 = sphi 0, %s254
      %s271 = sphi 0, %s255
      %s277 = sphi 0, %s279
      %s280 = sphi 0, %s277
      %s281 = sphi 0, %s280
      %s297 = sphi 0, %s281
      %s303 = sphi 0, %s305
      %s306 = sphi 0, %s303
      %s307 = sphi 0, %s306
      %s323 = sphi 0, %s307
      %s329 = sphi 0, %s331
      %s332 = sphi 0, %s329
      %s333 = sphi 0, %s332
      %s349 = sphi 0, %s333
      %s355 = sphi 0, %s357
      %s358 = sphi 0, %s355
      %s359 = sphi 0, %s358
      %s375 = sphi 0, %s359
      %s383 = sphi 0, %s385
      %s386 = sphi 0, %s383
      %s387 = sphi 0, %s386
      %s403 = sphi 0, %s387
    $region4: #{tpu_custom_call.1} parent=1 // loop_header_branch
      %24 = sbr.rel (%p22) target = $region8
    $region5: #{tpu_custom_call.1} parent=1 // loop_body
      %s26 = ssub.s32 %s21, 1
      %s27 = ssub.s32 %s21, 2
      %s34 = sadd.s32 1, %s29
      %p35 = scmp.ge.s32.totalorder %s34, 1
      %s36 = scalar_select %p35, 0, %s34
      %s37 = sadd.s32 1, %s28
      %s38 = scalar_select %p35, %s37, %s28
      %p39 = scmp.ge.s32.totalorder %s38, 2
      %s40 = scalar_select %p39, 0, %s38
      %s41 = ssub.s32 %s29, %s36
      %p42 = scmp.eq.s32.totalorder %s41, 0
      %s44 = sadd.s32 %s43, 1
      %s45 = scalar_select %p42, %s43, %s44
      %p48 = pneg %p42
      %p49 = scmp.eq.s32.totalorder %s21, 1
      %p50 = por %p48, %p49
      %p51 = scmp.ne.s32.totalorder %s43, %s46
      %p52 = scmp.eq.s32.totalorder %s21, 0
      %p53 = por %p51, %p52
      %p54 = scmp.ne.s32.totalorder %s43, %s46
      %p55 = scmp.eq.s32.totalorder %s26, 1
      %p56 = por %p54, %p55
      %p57 = scmp.ne.s32.totalorder %s46, %s47
      %p58 = scmp.eq.s32.totalorder %s26, 0
      %p59 = por %p57, %p58
      %p60 = scmp.ne.s32.totalorder %s46, %s47
      %p61 = scmp.eq.s32.totalorder %s27, 1
      %p62 = por %p60, %p61
      %p64 = scmp.ne.s32.totalorder %s47, %s63
      %p65 = scmp.eq.s32.totalorder %s27, 0
      %p66 = por %p64, %p65
      %s67 = ssub.s32 %s29, %s36
      %p68 = scmp.eq.s32.totalorder %s67, 0
      %s70 = sadd.s32 %s69, 1
      %s71 = scalar_select %p68, %s69, %s70
      %p74 = pneg %p68
      %p75 = scmp.eq.s32.totalorder %s21, 1
      %p76 = por %p74, %p75
      %p77 = scmp.ne.s32.totalorder %s69, %s72
      %p78 = scmp.eq.s32.totalorder %s21, 0
      %p79 = por %p77, %p78
      %p80 = scmp.ne.s32.totalorder %s69, %s72
      %p81 = scmp.eq.s32.totalorder %s26, 1
      %p82 = por %p80, %p81
      %p83 = scmp.ne.s32.totalorder %s72, %s73
      %p84 = scmp.eq.s32.totalorder %s26, 0
      %p85 = por %p83, %p84
      %p86 = scmp.ne.s32.totalorder %s72, %s73
      %p87 = scmp.eq.s32.totalorder %s27, 1
      %p88 = por %p86, %p87
      %p90 = scmp.ne.s32.totalorder %s73, %s89
      %p91 = scmp.eq.s32.totalorder %s27, 0
      %p92 = por %p90, %p91
      %s93 = ssub.s32 %s28, %s40
      %p94 = scmp.eq.s32.totalorder %s93, 0
      %s96 = sadd.s32 %s95, 1
      %s97 = scalar_select %p94, %s95, %s96
      %p100 = pneg %p94
      %p101 = scmp.eq.s32.totalorder %s21, 1
      %p102 = por %p100, %p101
      %p103 = scmp.ne.s32.totalorder %s95, %s98
      %p104 = scmp.eq.s32.totalorder %s21, 0
      %p105 = por %p103, %p104
      %p106 = scmp.ne.s32.totalorder %s95, %s98
      %p107 = scmp.eq.s32.totalorder %s26, 1
      %p108 = por %p106, %p107
      %p109 = scmp.ne.s32.totalorder %s98, %s99
      %p110 = scmp.eq.s32.totalorder %s26, 0
      %p111 = por %p109, %p110
      %p112 = scmp.ne.s32.totalorder %s98, %s99
      %p113 = scmp.eq.s32.totalorder %s27, 1
      %p114 = por %p112, %p113
      %p116 = scmp.ne.s32.totalorder %s99, %s115
      %p117 = scmp.eq.s32.totalorder %s27, 0
      %p118 = por %p116, %p117
      %s119 = ssub.s32 %s28, %s40
      %p120 = scmp.eq.s32.totalorder %s119, 0
      %s122 = sadd.s32 %s121, 1
      %s123 = scalar_select %p120, %s121, %s122
      %p126 = pneg %p120
      %p127 = scmp.eq.s32.totalorder %s21, 1
      %p128 = por %p126, %p127
      %p129 = scmp.ne.s32.totalorder %s121, %s124
      %p130 = scmp.eq.s32.totalorder %s21, 0
      %p131 = por %p129, %p130
      %p132 = scmp.ne.s32.totalorder %s121, %s124
      %p133 = scmp.eq.s32.totalorder %s26, 1
      %p134 = por %p132, %p133
      %p135 = scmp.ne.s32.totalorder %s124, %s125
      %p136 = scmp.eq.s32.totalorder %s26, 0
      %p137 = por %p135, %p136
      %p138 = scmp.ne.s32.totalorder %s124, %s125
      %p139 = scmp.eq.s32.totalorder %s27, 1
      %p140 = por %p138, %p139
      %p142 = scmp.ne.s32.totalorder %s125, %s141
      %p143 = scmp.eq.s32.totalorder %s27, 0
      %p144 = por %p142, %p143
      %s145 = ssub.s32 %s28, %s40
      %p146 = scmp.eq.s32.totalorder %s145, 0
      %s148 = sadd.s32 %s147, 1
      %s149 = scalar_select %p146, %s147, %s148
      %p152 = pneg %p146
      %p153 = scmp.eq.s32.totalorder %s21, 1
      %p154 = por %p152, %p153
      %p155 = scmp.ne.s32.totalorder %s147, %s150
      %p156 = scmp.eq.s32.totalorder %s21, 0
      %p157 = por %p155, %p156
      %p158 = scmp.ne.s32.totalorder %s147, %s150
      %p159 = scmp.eq.s32.totalorder %s26, 1
      %p160 = por %p158, %p159
      %p161 = scmp.ne.s32.totalorder %s150, %s151
      %p162 = scmp.eq.s32.totalorder %s26, 0
      %p163 = por %p161, %p162
      %p164 = scmp.ne.s32.totalorder %s150, %s151
      %p165 = scmp.eq.s32.totalorder %s27, 1
      %p166 = por %p164, %p165
      %p168 = scmp.ne.s32.totalorder %s151, %s167
      %p169 = scmp.eq.s32.totalorder %s27, 0
      %p170 = por %p168, %p169
      %s171 = ssub.s32 %s28, %s40
      %p172 = scmp.eq.s32.totalorder %s171, 0
      %s174 = sadd.s32 %s173, 1
      %s175 = scalar_select %p172, %s173, %s174
      %p178 = pneg %p172
      %p179 = scmp.eq.s32.totalorder %s21, 1
      %p180 = por %p178, %p179
      %p181 = scmp.ne.s32.totalorder %s173, %s176
      %p182 = scmp.eq.s32.totalorder %s21, 0
      %p183 = por %p181, %p182
      %p184 = scmp.ne.s32.totalorder %s173, %s176
      %p185 = scmp.eq.s32.totalorder %s26, 1
      %p186 = por %p184, %p185
      %p187 = scmp.ne.s32.totalorder %s176, %s177
      %p188 = scmp.eq.s32.totalorder %s26, 0
      %p189 = por %p187, %p188
      %p190 = scmp.ne.s32.totalorder %s176, %s177
      %p191 = scmp.eq.s32.totalorder %s27, 1
      %p192 = por %p190, %p191
      %p194 = scmp.ne.s32.totalorder %s177, %s193
      %p195 = scmp.eq.s32.totalorder %s27, 0
      %p196 = por %p194, %p195
      %s197 = ssub.s32 %s28, %s40
      %p198 = scmp.eq.s32.totalorder %s197, 0
      %s200 = sadd.s32 %s199, 1
      %s201 = scalar_select %p198, %s199, %s200
      %p204 = pneg %p198
      %p205 = scmp.eq.s32.totalorder %s21, 1
      %p206 = por %p204, %p205
      %p207 = scmp.ne.s32.totalorder %s199, %s202
      %p208 = scmp.eq.s32.totalorder %s21, 0
      %p209 = por %p207, %p208
      %p210 = scmp.ne.s32.totalorder %s199, %s202
      %p211 = scmp.eq.s32.totalorder %s26, 1
      %p212 = por %p210, %p211
      %p213 = scmp.ne.s32.totalorder %s202, %s203
      %p214 = scmp.eq.s32.totalorder %s26, 0
      %p215 = por %p213, %p214
      %p216 = scmp.ne.s32.totalorder %s202, %s203
      %p217 = scmp.eq.s32.totalorder %s27, 1
      %p218 = por %p216, %p217
      %p220 = scmp.ne.s32.totalorder %s203, %s219
      %p221 = scmp.eq.s32.totalorder %s27, 0
      %p222 = por %p220, %p221
      %s223 = ssub.s32 %s28, %s40
      %p224 = scmp.eq.s32.totalorder %s223, 0
      %s226 = sadd.s32 %s225, 1
      %s227 = scalar_select %p224, %s225, %s226
      %p230 = pneg %p224
      %p231 = scmp.eq.s32.totalorder %s21, 1
      %p232 = por %p230, %p231
      %p233 = scmp.ne.s32.totalorder %s225, %s228
      %p234 = scmp.eq.s32.totalorder %s21, 0
      %p235 = por %p233, %p234
      %p236 = scmp.ne.s32.totalorder %s225, %s228
      %p237 = scmp.eq.s32.totalorder %s26, 1
      %p238 = por %p236, %p237
      %p239 = scmp.ne.s32.totalorder %s228, %s229
      %p240 = scmp.eq.s32.totalorder %s26, 0
      %p241 = por %p239, %p240
      %p242 = scmp.ne.s32.totalorder %s228, %s229
      %p243 = scmp.eq.s32.totalorder %s27, 1
      %p244 = por %p242, %p243
      %p246 = scmp.ne.s32.totalorder %s229, %s245
      %p247 = scmp.eq.s32.totalorder %s27, 0
      %p248 = por %p246, %p247
      %s249 = ssub.s32 %s28, %s40
      %p250 = scmp.eq.s32.totalorder %s249, 0
      %s252 = sadd.s32 %s251, 1
      %s253 = scalar_select %p250, %s251, %s252
      %p256 = pneg %p250
      %p257 = scmp.eq.s32.totalorder %s21, 1
      %p258 = por %p256, %p257
      %p259 = scmp.ne.s32.totalorder %s251, %s254
      %p260 = scmp.eq.s32.totalorder %s21, 0
      %p261 = por %p259, %p260
      %p262 = scmp.ne.s32.totalorder %s251, %s254
      %p263 = scmp.eq.s32.totalorder %s26, 1
      %p264 = por %p262, %p263
      %p265 = scmp.ne.s32.totalorder %s254, %s255
      %p266 = scmp.eq.s32.totalorder %s26, 0
      %p267 = por %p265, %p266
      %p268 = scmp.ne.s32.totalorder %s254, %s255
      %p269 = scmp.eq.s32.totalorder %s27, 1
      %p270 = por %p268, %p269
      %p272 = scmp.ne.s32.totalorder %s255, %s271
      %p273 = scmp.eq.s32.totalorder %s27, 0
      %p274 = por %p272, %p273
      %s275 = ssub.s32 %s28, %s40
      %p276 = scmp.eq.s32.totalorder %s275, 0
      %s278 = sadd.s32 %s277, 1
      %s279 = scalar_select %p276, %s277, %s278
      %p282 = pneg %p276
      %p283 = scmp.eq.s32.totalorder %s21, 1
      %p284 = por %p282, %p283
      %p285 = scmp.ne.s32.totalorder %s277, %s280
      %p286 = scmp.eq.s32.totalorder %s21, 0
      %p287 = por %p285, %p286
      %p288 = scmp.ne.s32.totalorder %s277, %s280
      %p289 = scmp.eq.s32.totalorder %s26, 1
      %p290 = por %p288, %p289
      %p291 = scmp.ne.s32.totalorder %s280, %s281
      %p292 = scmp.eq.s32.totalorder %s26, 0
      %p293 = por %p291, %p292
      %p294 = scmp.ne.s32.totalorder %s280, %s281
      %p295 = scmp.eq.s32.totalorder %s27, 1
      %p296 = por %p294, %p295
      %p298 = scmp.ne.s32.totalorder %s281, %s297
      %p299 = scmp.eq.s32.totalorder %s27, 0
      %p300 = por %p298, %p299
      %s301 = ssub.s32 %s28, %s40
      %p302 = scmp.eq.s32.totalorder %s301, 0
      %s304 = sadd.s32 %s303, 1
      %s305 = scalar_select %p302, %s303, %s304
      %p308 = pneg %p302
      %p309 = scmp.eq.s32.totalorder %s21, 1
      %p310 = por %p308, %p309
      %p311 = scmp.ne.s32.totalorder %s303, %s306
      %p312 = scmp.eq.s32.totalorder %s21, 0
      %p313 = por %p311, %p312
      %p314 = scmp.ne.s32.totalorder %s303, %s306
      %p315 = scmp.eq.s32.totalorder %s26, 1
      %p316 = por %p314, %p315
      %p317 = scmp.ne.s32.totalorder %s306, %s307
      %p318 = scmp.eq.s32.totalorder %s26, 0
      %p319 = por %p317, %p318
      %p320 = scmp.ne.s32.totalorder %s306, %s307
      %p321 = scmp.eq.s32.totalorder %s27, 1
      %p322 = por %p320, %p321
      %p324 = scmp.ne.s32.totalorder %s307, %s323
      %p325 = scmp.eq.s32.totalorder %s27, 0
      %p326 = por %p324, %p325
      %s327 = ssub.s32 %s28, %s40
      %p328 = scmp.eq.s32.totalorder %s327, 0
      %s330 = sadd.s32 %s329, 1
      %s331 = scalar_select %p328, %s329, %s330
      %p334 = pneg %p328
      %p335 = scmp.eq.s32.totalorder %s21, 1
      %p336 = por %p334, %p335
      %p337 = scmp.ne.s32.totalorder %s329, %s332
      %p338 = scmp.eq.s32.totalorder %s21, 0
      %p339 = por %p337, %p338
      %p340 = scmp.ne.s32.totalorder %s329, %s332
      %p341 = scmp.eq.s32.totalorder %s26, 1
      %p342 = por %p340, %p341
      %p343 = scmp.ne.s32.totalorder %s332, %s333
      %p344 = scmp.eq.s32.totalorder %s26, 0
      %p345 = por %p343, %p344
      %p346 = scmp.ne.s32.totalorder %s332, %s333
      %p347 = scmp.eq.s32.totalorder %s27, 1
      %p348 = por %p346, %p347
      %p350 = scmp.ne.s32.totalorder %s333, %s349
      %p351 = scmp.eq.s32.totalorder %s27, 0
      %p352 = por %p350, %p351
      %s353 = ssub.s32 %s28, %s40
      %p354 = scmp.eq.s32.totalorder %s353, 0
      %s356 = sadd.s32 %s355, 1
      %s357 = scalar_select %p354, %s355, %s356
      %p360 = pneg %p354
      %p361 = scmp.eq.s32.totalorder %s21, 1
      %p362 = por %p360, %p361
      %p363 = scmp.ne.s32.totalorder %s355, %s358
      %p364 = scmp.eq.s32.totalorder %s21, 0
      %p365 = por %p363, %p364
      %p366 = scmp.ne.s32.totalorder %s355, %s358
      %p367 = scmp.eq.s32.totalorder %s26, 1
      %p368 = por %p366, %p367
      %p369 = scmp.ne.s32.totalorder %s358, %s359
      %p370 = scmp.eq.s32.totalorder %s26, 0
      %p371 = por %p369, %p370
      %p372 = scmp.ne.s32.totalorder %s358, %s359
      %p373 = scmp.eq.s32.totalorder %s27, 1
      %p374 = por %p372, %p373
      %p376 = scmp.ne.s32.totalorder %s359, %s375
      %p377 = scmp.eq.s32.totalorder %s27, 0
      %p378 = por %p376, %p377
      %s379 = ssub.s32 %s28, %s40
      %s380 = ssub.s32 %s29, %s36
      %s381 = sor.u32 %s379, %s380
      %p382 = scmp.eq.s32.totalorder %s381, 0
      %s384 = sadd.s32 %s383, 1
      %s385 = scalar_select %p382, %s383, %s384
      %p388 = pneg %p382
      %p389 = scmp.eq.s32.totalorder %s21, 1
      %p390 = por %p388, %p389
      %p391 = scmp.ne.s32.totalorder %s383, %s386
      %p392 = scmp.eq.s32.totalorder %s21, 0
      %p393 = por %p391, %p392
      %p394 = scmp.ne.s32.totalorder %s383, %s386
      %p395 = scmp.eq.s32.totalorder %s26, 1
      %p396 = por %p394, %p395
      %p397 = scmp.ne.s32.totalorder %s386, %s387
      %p398 = scmp.eq.s32.totalorder %s26, 0
      %p399 = por %p397, %p398
      %p400 = scmp.ne.s32.totalorder %s386, %s387
      %p401 = scmp.eq.s32.totalorder %s27, 1
      %p402 = por %p400, %p401
      %p404 = scmp.ne.s32.totalorder %s387, %s403
      %p405 = scmp.eq.s32.totalorder %s27, 0
      %p406 = por %p404, %p405
      %p407 = scmp.le.s32.totalorder 1, %s21
      %p408 = scmp.lt.s32.totalorder %s21, 3
      %p409 = pnand %p407, %p408
      %p410 = pneg %p409
      // Predicated region
      $region9: #{tpu_custom_call.1} parent=5 // pred_check
        _
      $region10: #{tpu_custom_call.1} parent=5 // pred_check_branch
        %412 = sbr.rel (%p409) target = $region12
      $region11: #{tpu_custom_call.1} parent=5 // pred_region
        %s413 = ssub.s32 %s21, 1
        // Predicated region
        $region13: #{tpu_custom_call.1} parent=11 // pred_check
          %p414 = pneg %p59
        $region14: #{tpu_custom_call.1} parent=11 // pred_check_branch
          %416 = sbr.rel (%p414) target = $region16
        $region15: #{tpu_custom_call.1} parent=11 // pred_region
          %s418 = ssub.s32 128, 128
          %419 = vsyncadd [#allocation3], %s418
          %s420 = smul.addr %s31, 128
          %s421 = scalar_lea.hbm %s0, %s420
          %s423 = sshll.u32 [#allocation2], 4
          %s424 = int_to_ptr.vmem [resolvable:$true] %s423
          %426 = dma.hbm_to_vmem [thread:$0]  %s421, 128, %s424, [#allocation3]
        $region16: #{tpu_custom_call.1} parent=11 // pred_fallthru
          _
        // Predicated region
        $region17: #{tpu_custom_call.1} parent=11 // pred_check
          %p427 = pneg %p85
        $region18: #{tpu_custom_call.1} parent=11 // pred_check_branch
          %429 = sbr.rel (%p427) target = $region20
        $region19: #{tpu_custom_call.1} parent=11 // pred_region
          %s431 = ssub.s32 128, 128
          %432 = vsyncadd [#allocation5], %s431
          %s433 = smul.addr %s31, 128
          %s434 = scalar_lea.hbm %s1, %s433
          %s436 = sshll.u32 [#allocation4], 4
          %s437 = int_to_ptr.vmem [resolvable:$true] %s436
          %439 = dma.hbm_to_vmem [thread:$0]  %s434, 128, %s437, [#allocation5]
        $region20: #{tpu_custom_call.1} parent=11 // pred_fallthru
          _
      $region12: #{tpu_custom_call.1} parent=5 // pred_fallthru
        _
      %p440 = scmp.lt.s32.totalorder %s21, 2
      // Predicated region
      $region21: #{tpu_custom_call.1} parent=5 // pred_check
        %p441 = pneg %p440
      $region22: #{tpu_custom_call.1} parent=5 // pred_check_branch
        %443 = sbr.rel (%p441) target = $region24
      $region23: #{tpu_custom_call.1} parent=5 // pred_region
        // Predicated region
        $region25: #{tpu_custom_call.1} parent=23 // pred_check
          %p444 = pneg %p105
        $region26: #{tpu_custom_call.1} parent=23 // pred_check_branch
          %446 = sbr.rel (%p444) target = $region28
        $region27: #{tpu_custom_call.1} parent=23 // pred_region
          %s447 = sand.u32 %s21, 1
          %s448 = scalar_lea.sflag [#allocation3], %s447
          %s449 = sand.u32 %s95, 1
          %s450 = smul.addr %s449, 48
          %s451 = scalar_lea.vmem [#allocation6], %s450
          %s453 = ssub.s32 768, 768
          %454 = vsyncadd %s448, %s453
          %s455 = smul.addr %s28, 12
          %s456 = smul.addr %s455, 64
          %s457 = scalar_lea.hbm %s2, %s456
          %s458 = sshll.u32 %s451, 4
          %s459 = int_to_ptr.vmem [resolvable:$true] %s458
          %464 = dma.hbm_to_vmem [thread:$0]  %s457, 768, %s459, %s448, 256, 256, 16
        $region28: #{tpu_custom_call.1} parent=23 // pred_fallthru
          _
        // Predicated region
        $region29: #{tpu_custom_call.1} parent=23 // pred_check
          %p465 = pneg %p131
        $region30: #{tpu_custom_call.1} parent=23 // pred_check_branch
          %467 = sbr.rel (%p465) target = $region32
        $region31: #{tpu_custom_call.1} parent=23 // pred_region
          %s468 = sand.u32 %s21, 1
          %s469 = scalar_lea.sflag [#allocation3], %s468
          %s470 = sand.u32 %s121, 1
          %s471 = smul.addr %s470, 16
          %s472 = scalar_lea.vmem [#allocation7], %s471
          %s474 = ssub.s32 256, 256
          %475 = vsyncadd %s469, %s474
          %s476 = smul.addr %s28, 4
          %s477 = smul.addr %s476, 64
          %s478 = scalar_lea.hbm %s3, %s477
          %s480 = sshll.u32 %s472, 4
          %s481 = int_to_ptr.vmem [resolvable:$true] %s480
          %483 = dma.hbm_to_vmem [thread:$0]  %s478, 256, %s481, %s469
        $region32: #{tpu_custom_call.1} parent=23 // pred_fallthru
          _
        // Predicated region
        $region33: #{tpu_custom_call.1} parent=23 // pred_check
          %p484 = pneg %p157
        $region34: #{tpu_custom_call.1} parent=23 // pred_check_branch
          %486 = sbr.rel (%p484) target = $region36
        $region35: #{tpu_custom_call.1} parent=23 // pred_region
          %s487 = sand.u32 %s21, 1
          %s488 = scalar_lea.sflag [#allocation3], %s487
          %s489 = sand.u32 %s147, 1
          %s490 = smul.addr %s489, 4
          %s491 = scalar_lea.vmem [#allocation8], %s490
          %s493 = ssub.s32 64, 64
          %494 = vsyncadd %s488, %s493
          %s495 = smul.addr %s28, 4
          %s496 = smul.addr %s495, 16
          %s497 = scalar_lea.hbm %s4, %s496
          %s499 = sshll.u32 %s491, 4
          %s500 = int_to_ptr.vmem [resolvable:$true] %s499
          %502 = dma.hbm_to_vmem [thread:$0]  %s497, 64, %s500, %s488
        $region36: #{tpu_custom_call.1} parent=23 // pred_fallthru
          _
        // Predicated region
        $region37: #{tpu_custom_call.1} parent=23 // pred_check
          %p503 = pneg %p183
        $region38: #{tpu_custom_call.1} parent=23 // pred_check_branch
          %505 = sbr.rel (%p503) target = $region40
        $region39: #{tpu_custom_call.1} parent=23 // pred_region
          %s506 = sand.u32 %s21, 1
          %s507 = scalar_lea.sflag [#allocation3], %s506
          %s508 = sand.u32 %s173, 1
          %s509 = smul.addr %s508, 1024
          %s510 = scalar_lea.vmem [#allocation9], %s509
          %s512 = ssub.s32 16384, 16384
          %513 = vsyncadd %s507, %s512
          %s514 = smul.addr %s28, 256
          %s515 = smul.addr %s514, 64
          %s516 = scalar_lea.hbm %s5, %s515
          %s517 = sshll.u32 %s510, 4
          %s518 = int_to_ptr.vmem [resolvable:$true] %s517
          %523 = dma.hbm_to_vmem [thread:$0]  %s516, 16384, %s518, %s507, 256, 256, 16
        $region40: #{tpu_custom_call.1} parent=23 // pred_fallthru
          _
        // Predicated region
        $region41: #{tpu_custom_call.1} parent=23 // pred_check
          %p524 = pneg %p209
        $region42: #{tpu_custom_call.1} parent=23 // pred_check_branch
          %526 = sbr.rel (%p524) target = $region44
        $region43: #{tpu_custom_call.1} parent=23 // pred_region
          %p527 = scmp.lt.s32.totalorder %s28, 1
          %s528 = scalar_select %p527, %s28, 1
          %s529 = smul.addr %s528, 4
          %s530 = scalar_lea.vmem %s6, %s529
        $region44: #{tpu_custom_call.1} parent=23 // pred_fallthru
          _
        // Predicated region
        $region45: #{tpu_custom_call.1} parent=23 // pred_check
          %p531 = pneg %p235
        $region46: #{tpu_custom_call.1} parent=23 // pred_check_branch
          %533 = sbr.rel (%p531) target = $region48
        $region47: #{tpu_custom_call.1} parent=23 // pred_region
          %s534 = sand.u32 %s21, 1
          %s535 = scalar_lea.sflag [#allocation3], %s534
          %s536 = sand.u32 %s225, 1
          %s537 = smul.addr %s536, 1024
          %s538 = scalar_lea.vmem [#allocation10], %s537
          %s540 = ssub.s32 16384, 16384
          %541 = vsyncadd %s535, %s540
          %s542 = smul.addr %s28, 256
          %s543 = smul.addr %s542, 64
          %s544 = scalar_lea.hbm %s7, %s543
          %s545 = sshll.u32 %s538, 4
          %s546 = int_to_ptr.vmem [resolvable:$true] %s545
          %551 = dma.hbm_to_vmem [thread:$0]  %s544, 16384, %s546, %s535, 256, 256, 16
        $region48: #{tpu_custom_call.1} parent=23 // pred_fallthru
          _
        // Predicated region
        $region49: #{tpu_custom_call.1} parent=23 // pred_check
          %p552 = pneg %p261
        $region50: #{tpu_custom_call.1} parent=23 // pred_check_branch
          %554 = sbr.rel (%p552) target = $region52
        $region51: #{tpu_custom_call.1} parent=23 // pred_region
          %s555 = sand.u32 %s21, 1
          %s556 = scalar_lea.sflag [#allocation3], %s555
          %s557 = sand.u32 %s251, 1
          %s558 = smul.addr %s557, 4
          %s559 = scalar_lea.vmem [#allocation11], %s558
          %s561 = ssub.s32 64, 64
          %562 = vsyncadd %s556, %s561
          %s563 = smul.addr %s28, 4
          %s564 = smul.addr %s563, 16
          %s565 = scalar_lea.hbm %s8, %s564
          %s567 = sshll.u32 %s559, 4
          %s568 = int_to_ptr.vmem [resolvable:$true] %s567
          %570 = dma.hbm_to_vmem [thread:$0]  %s565, 64, %s568, %s556
        $region52: #{tpu_custom_call.1} parent=23 // pred_fallthru
          _
        // Predicated region
        $region53: #{tpu_custom_call.1} parent=23 // pred_check
          %p571 = pneg %p287
        $region54: #{tpu_custom_call.1} parent=23 // pred_check_branch
          %573 = sbr.rel (%p571) target = $region56
        $region55: #{tpu_custom_call.1} parent=23 // pred_region
          %s574 = sand.u32 %s21, 1
          %s575 = scalar_lea.sflag [#allocation3], %s574
          %s576 = sand.u32 %s277, 1
          %s577 = smul.addr %s576, 1024
          %s578 = scalar_lea.vmem [#allocation12], %s577
          %s580 = ssub.s32 16384, 16384
          %581 = vsyncadd %s575, %s580
          %s582 = smul.addr %s28, 256
          %s583 = smul.addr %s582, 64
          %s584 = scalar_lea.hbm %s9, %s583
          %s585 = sshll.u32 %s578, 4
          %s586 = int_to_ptr.vmem [resolvable:$true] %s585
          %591 = dma.hbm_to_vmem [thread:$0]  %s584, 16384, %s586, %s575, 256, 256, 16
        $region56: #{tpu_custom_call.1} parent=23 // pred_fallthru
          _
        // Predicated region
        $region57: #{tpu_custom_call.1} parent=23 // pred_check
          %p592 = pneg %p313
        $region58: #{tpu_custom_call.1} parent=23 // pred_check_branch
          %594 = sbr.rel (%p592) target = $region60
        $region59: #{tpu_custom_call.1} parent=23 // pred_region
          %p595 = scmp.lt.s32.totalorder %s28, 1
          %s596 = scalar_select %p595, %s28, 1
          %s597 = smul.addr %s596, 4
          %s598 = scalar_lea.vmem %s10, %s597
        $region60: #{tpu_custom_call.1} parent=23 // pred_fallthru
          _
        // Predicated region
        $region61: #{tpu_custom_call.1} parent=23 // pred_check
          %p599 = pneg %p339
        $region62: #{tpu_custom_call.1} parent=23 // pred_check_branch
          %601 = sbr.rel (%p599) target = $region64
        $region63: #{tpu_custom_call.1} parent=23 // pred_region
          %s602 = sand.u32 %s21, 1
          %s603 = scalar_lea.sflag [#allocation3], %s602
          %s604 = sand.u32 %s329, 1
          %s605 = smul.addr %s604, 256
          %s606 = scalar_lea.vmem [#allocation13], %s605
          %s608 = ssub.s32 4096, 4096
          %609 = vsyncadd %s603, %s608
          %s610 = smul.addr %s28, 64
          %s611 = smul.addr %s610, 64
          %s612 = scalar_lea.hbm %s11, %s611
          %s613 = sshll.u32 %s606, 4
          %s614 = int_to_ptr.vmem [resolvable:$true] %s613
          %619 = dma.hbm_to_vmem [thread:$0]  %s612, 4096, %s614, %s603, 64, 64, 4
        $region64: #{tpu_custom_call.1} parent=23 // pred_fallthru
          _
        // Predicated region
        $region65: #{tpu_custom_call.1} parent=23 // pred_check
          %p620 = pneg %p365
        $region66: #{tpu_custom_call.1} parent=23 // pred_check_branch
          %622 = sbr.rel (%p620) target = $region68
        $region67: #{tpu_custom_call.1} parent=23 // pred_region
          %p623 = scmp.lt.s32.totalorder %s28, 1
          %s624 = scalar_select %p623, %s28, 1
          %s625 = scalar_lea.vmem %s12, %s624
        $region68: #{tpu_custom_call.1} parent=23 // pred_fallthru
          _
      $region24: #{tpu_custom_call.1} parent=5 // pred_fallthru
        _
      %p626 = scmp.le.s32.totalorder 1, %s21
      %p627 = scmp.lt.s32.totalorder %s21, 3
      %p628 = pnand %p626, %p627
      %p629 = pneg %p628
      // Predicated region
      $region69: #{tpu_custom_call.1} parent=5 // pred_check
        _
      $region70: #{tpu_custom_call.1} parent=5 // pred_check_branch
        %631 = sbr.rel (%p628) target = $region72
      $region71: #{tpu_custom_call.1} parent=5 // pred_region
        %s632 = ssub.s32 %s21, 1
        // Predicated region
        $region73: #{tpu_custom_call.1} parent=71 // pred_check
          %p633 = pneg %p59
        $region74: #{tpu_custom_call.1} parent=71 // pred_check_branch
          %635 = sbr.rel (%p633) target = $region76
        $region75: #{tpu_custom_call.1} parent=71 // pred_region
          %636 = dma.done [#allocation3], 128
        $region76: #{tpu_custom_call.1} parent=71 // pred_fallthru
          _
        // Predicated region
        $region77: #{tpu_custom_call.1} parent=71 // pred_check
          %p637 = pneg %p85
        $region78: #{tpu_custom_call.1} parent=71 // pred_check_branch
          %639 = sbr.rel (%p637) target = $region80
        $region79: #{tpu_custom_call.1} parent=71 // pred_region
          %640 = dma.done [#allocation5], 128
        $region80: #{tpu_custom_call.1} parent=71 // pred_fallthru
          _
        %s641 = sand.u32 %s26, 1
        %s642 = scalar_lea.sflag [#allocation3], %s641
        %s643 = sand.u32 %s98, 1
        %s644 = smul.addr %s643, 48
        %s645 = scalar_lea.vmem [#allocation6], %s644
        // Predicated region
        $region81: #{tpu_custom_call.1} parent=71 // pred_check
          %p646 = pneg %p111
        $region82: #{tpu_custom_call.1} parent=71 // pred_check_branch
          %648 = sbr.rel (%p646) target = $region84
        $region83: #{tpu_custom_call.1} parent=71 // pred_region
          %649 = dma.done %s642, 768
        $region84: #{tpu_custom_call.1} parent=71 // pred_fallthru
          _
        %s650 = sand.u32 %s26, 1
        %s651 = scalar_lea.sflag [#allocation3], %s650
        %s652 = sand.u32 %s124, 1
        %s653 = smul.addr %s652, 16
        %s654 = scalar_lea.vmem [#allocation7], %s653
        // Predicated region
        $region85: #{tpu_custom_call.1} parent=71 // pred_check
          %p655 = pneg %p137
        $region86: #{tpu_custom_call.1} parent=71 // pred_check_branch
          %657 = sbr.rel (%p655) target = $region88
        $region87: #{tpu_custom_call.1} parent=71 // pred_region
          %658 = dma.done %s651, 256
        $region88: #{tpu_custom_call.1} parent=71 // pred_fallthru
          _
        %s659 = sand.u32 %s26, 1
        %s660 = scalar_lea.sflag [#allocation3], %s659
        %s661 = sand.u32 %s150, 1
        %s662 = smul.addr %s661, 4
        %s663 = scalar_lea.vmem [#allocation8], %s662
        // Predicated region
        $region89: #{tpu_custom_call.1} parent=71 // pred_check
          %p664 = pneg %p163
        $region90: #{tpu_custom_call.1} parent=71 // pred_check_branch
          %666 = sbr.rel (%p664) target = $region92
        $region91: #{tpu_custom_call.1} parent=71 // pred_region
          %667 = dma.done %s660, 64
        $region92: #{tpu_custom_call.1} parent=71 // pred_fallthru
          _
        %s668 = sand.u32 %s26, 1
        %s669 = scalar_lea.sflag [#allocation3], %s668
        %s670 = sand.u32 %s176, 1
        %s671 = smul.addr %s670, 1024
        %s672 = scalar_lea.vmem [#allocation9], %s671
        // Predicated region
        $region93: #{tpu_custom_call.1} parent=71 // pred_check
          %p673 = pneg %p189
        $region94: #{tpu_custom_call.1} parent=71 // pred_check_branch
          %675 = sbr.rel (%p673) target = $region96
        $region95: #{tpu_custom_call.1} parent=71 // pred_region
          %676 = dma.done %s669, 16384
        $region96: #{tpu_custom_call.1} parent=71 // pred_fallthru
          _
        %s677 = sand.u32 %s26, 1
        %s678 = scalar_lea.sflag [#allocation3], %s677
        %s679 = sand.u32 %s228, 1
        %s680 = smul.addr %s679, 1024
        %s681 = scalar_lea.vmem [#allocation10], %s680
        // Predicated region
        $region97: #{tpu_custom_call.1} parent=71 // pred_check
          %p682 = pneg %p241
        $region98: #{tpu_custom_call.1} parent=71 // pred_check_branch
          %684 = sbr.rel (%p682) target = $region100
        $region99: #{tpu_custom_call.1} parent=71 // pred_region
          %685 = dma.done %s678, 16384
        $region100: #{tpu_custom_call.1} parent=71 // pred_fallthru
          _
        %s686 = sand.u32 %s26, 1
        %s687 = scalar_lea.sflag [#allocation3], %s686
        %s688 = sand.u32 %s254, 1
        %s689 = smul.addr %s688, 4
        %s690 = scalar_lea.vmem [#allocation11], %s689
        // Predicated region
        $region101: #{tpu_custom_call.1} parent=71 // pred_check
          %p691 = pneg %p267
        $region102: #{tpu_custom_call.1} parent=71 // pred_check_branch
          %693 = sbr.rel (%p691) target = $region104
        $region103: #{tpu_custom_call.1} parent=71 // pred_region
          %694 = dma.done %s687, 64
        $region104: #{tpu_custom_call.1} parent=71 // pred_fallthru
          _
        %s695 = sand.u32 %s26, 1
        %s696 = scalar_lea.sflag [#allocation3], %s695
        %s697 = sand.u32 %s280, 1
        %s698 = smul.addr %s697, 1024
        %s699 = scalar_lea.vmem [#allocation12], %s698
        // Predicated region
        $region105: #{tpu_custom_call.1} parent=71 // pred_check
          %p700 = pneg %p293
        $region106: #{tpu_custom_call.1} parent=71 // pred_check_branch
          %702 = sbr.rel (%p700) target = $region108
        $region107: #{tpu_custom_call.1} parent=71 // pred_region
          %703 = dma.done %s696, 16384
        $region108: #{tpu_custom_call.1} parent=71 // pred_fallthru
          _
        %s704 = sand.u32 %s26, 1
        %s705 = scalar_lea.sflag [#allocation3], %s704
        %s706 = sand.u32 %s332, 1
        %s707 = smul.addr %s706, 256
        %s708 = scalar_lea.vmem [#allocation13], %s707
        // Predicated region
        $region109: #{tpu_custom_call.1} parent=71 // pred_check
          %p709 = pneg %p345
        $region110: #{tpu_custom_call.1} parent=71 // pred_check_branch
          %711 = sbr.rel (%p709) target = $region112
        $region111: #{tpu_custom_call.1} parent=71 // pred_region
          %712 = dma.done %s705, 4096
        $region112: #{tpu_custom_call.1} parent=71 // pred_fallthru
          _
        %p713 = pneg %p59
        %p714 = pneg %p56
        %p715 = pneg %p85
        %p716 = pneg %p82
        %s717 = sand.u32 %s26, 1
        %s718 = scalar_lea.sflag [#allocation3], %s717
        %s719 = sand.u32 %s98, 1
        %s720 = smul.addr %s719, 48
        %s721 = scalar_lea.vmem [#allocation6], %s720
        %p722 = pneg %p111
        %p723 = pneg %p108
        %s724 = sand.u32 %s26, 1
        %s725 = scalar_lea.sflag [#allocation3], %s724
        %s726 = sand.u32 %s124, 1
        %s727 = smul.addr %s726, 16
        %s728 = scalar_lea.vmem [#allocation7], %s727
        %p729 = pneg %p137
        %p730 = pneg %p134
        %s731 = sand.u32 %s26, 1
        %s732 = scalar_lea.sflag [#allocation3], %s731
        %s733 = sand.u32 %s150, 1
        %s734 = smul.addr %s733, 4
        %s735 = scalar_lea.vmem [#allocation8], %s734
        %p736 = pneg %p163
        %p737 = pneg %p160
        %s738 = sand.u32 %s26, 1
        %s739 = scalar_lea.sflag [#allocation3], %s738
        %s740 = sand.u32 %s176, 1
        %s741 = smul.addr %s740, 1024
        %s742 = scalar_lea.vmem [#allocation9], %s741
        %p743 = pneg %p189
        %p744 = pneg %p186
        %p745 = scmp.lt.s32.totalorder %s30, 1
        %s746 = scalar_select %p745, %s30, 1
        %s747 = smul.addr %s746, 4
        %s748 = scalar_lea.vmem %s6, %s747
        %p749 = pneg %p215
        %p750 = pneg %p212
        %s751 = sand.u32 %s26, 1
        %s752 = scalar_lea.sflag [#allocation3], %s751
        %s753 = sand.u32 %s228, 1
        %s754 = smul.addr %s753, 1024
        %s755 = scalar_lea.vmem [#allocation10], %s754
        %p756 = pneg %p241
        %p757 = pneg %p238
        %s758 = sand.u32 %s26, 1
        %s759 = scalar_lea.sflag [#allocation3], %s758
        %s760 = sand.u32 %s254, 1
        %s761 = smul.addr %s760, 4
        %s762 = scalar_lea.vmem [#allocation11], %s761
        %p763 = pneg %p267
        %p764 = pneg %p264
        %s765 = sand.u32 %s26, 1
        %s766 = scalar_lea.sflag [#allocation3], %s765
        %s767 = sand.u32 %s280, 1
        %s768 = smul.addr %s767, 1024
        %s769 = scalar_lea.vmem [#allocation12], %s768
        %p770 = pneg %p293
        %p771 = pneg %p290
        %p772 = scmp.lt.s32.totalorder %s30, 1
        %s773 = scalar_select %p772, %s30, 1
        %s774 = smul.addr %s773, 4
        %s775 = scalar_lea.vmem %s10, %s774
        %p776 = pneg %p319
        %p777 = pneg %p316
        %s778 = sand.u32 %s26, 1
        %s779 = scalar_lea.sflag [#allocation3], %s778
        %s780 = sand.u32 %s332, 1
        %s781 = smul.addr %s780, 256
        %s782 = scalar_lea.vmem [#allocation13], %s781
        %p783 = pneg %p345
        %p784 = pneg %p342
        %p785 = scmp.lt.s32.totalorder %s30, 1
        %s786 = scalar_select %p785, %s30, 1
        %s787 = scalar_lea.vmem %s12, %s786
        %p788 = pneg %p371
        %p789 = pneg %p368
        %p790 = pneg %p399
        %p791 = pneg %p396
        %p792 = scmp.lt.s32.totalorder %s30, 1
        %s793 = scalar_select %p792, %s30, 1
        %p794 = scmp.lt.s32.totalorder %s31, 0
        %s795 = scalar_select %p794, %s31, 0
        %s796 = sadd.s32 %s795, %s793
        %s797 = smul.addr %s796, 8
        %s798 = scalar_lea.vmem %s13, %s797
        %p799 = scmp.lt.s32.totalorder %s30, 1
        %s800 = scalar_select %p799, %s30, 1
        %s801 = smul.addr %s800, 4
        %s802 = scalar_lea.vmem %s6, %s801
        %p803 = scmp.lt.s32.totalorder %s30, 1
        %s804 = scalar_select %p803, %s30, 1
        %s805 = smul.addr %s804, 4
        %s806 = scalar_lea.vmem %s10, %s805
        %p807 = scmp.lt.s32.totalorder %s30, 1
        %s808 = scalar_select %p807, %s30, 1
        %s809 = scalar_lea.vmem %s12, %s808
        %p810 = scmp.lt.s32.totalorder %s30, 1
        %s811 = scalar_select %p810, %s30, 1
        %p812 = scmp.lt.s32.totalorder %s31, 0
        %s813 = scalar_select %p812, %s31, 0
        %s814 = sadd.s32 %s813, %s811
        %s815 = smul.addr %s814, 8
        %s816 = scalar_lea.vmem %s13, %s815
        %v818 = vld [vmem:[#allocation2] sm:$0xff]
        %v819 = vpack.c.bf16 %v818, %v818
        %v820 = vld [vmem:[%s645] sm:$0xff]
        %v821 = vld [vmem:[%s645 + $0x8] sm:$0xff]
        %v822 = vld [vmem:[%s645 + $0x10] sm:$0xff]
        %v823 = vld [vmem:[%s645 + $0x18] sm:$0xff]
        %v824 = vld [vmem:[%s645 + $0x20] sm:$0xff]
        %v825 = vld [vmem:[%s645 + $0x28] sm:$0xff]
        %v826 = vld [vmem:[#allocation4] sm:$0xff]
        %v827 = vpack.c.bf16 %v826, %v826
        %v828 = vld [vmem:[%s654] sm:$0xff]
        %v829 = vld [vmem:[%s654 + $0x8] sm:$0xff]
        %v832 = vunpack.c.l.b16 %v828
        %v833 = vunpack.c.h.b16 %v828
        %v834 = vunpack.c.l.b16 %v829
        %v835 = vunpack.c.h.b16 %v829
        %v836 = vpack.c.b16 %v832, %v832
        %v837 = vpack.c.b16 %v833, %v833
        %v838 = vpack.c.b16 %v834, %v834
        %v839 = vpack.c.b16 %v835, %v835
        %vm840 = vcmask 64512
        %v842 = vsel %vm840, %v827, 0
        %vm844 = vcmask 1043456
        %v846 = vsel %vm844, %v836, 0
        %v849 = vsel %vm844, %v837, 0
        %v852 = vsel %vm844, %v838, 0
        %v855 = vsel %vm844, %v839, 0
        %857 = vmatprep.subr.bf16.mxu0 0
        %858 = vmatpush1.bf16.msra.mxu0 0
        %859 = vmatprep.subr.bf16.mxu0 0
        %860 = vmatpush1.bf16.msra.mxu0 0
        %861 = vmatprep.subr.bf16.mxu0 0
        %862 = vmatpush1.bf16.msra.mxu0 0
        %863 = vmatprep.subr.bf16.mxu0 0
        %864 = vmatpush1.bf16.msra.mxu0 0
        %865 = vmatprep.subr.bf16.mxu0 0
        %866 = vmatpush1.bf16.msra.mxu0 0
        %867 = vmatprep.subr.bf16.mxu0 0
        %868 = vmatpush1.bf16.msra.mxu0 0
        %869 = vmatprep.subr.bf16.mxu0 0
        %870 = vmatpush1.bf16.msra.mxu0 0
        %871 = vmatprep.subr.bf16.mxu0 %v849
        %872 = vmatpush1.bf16.msra.mxu0 %v846
        %873 = vmatprep.subr.bf16.mxu0 0
        %874 = vmatpush2.bf16.msra.mxu0 0
        %875 = vmatprep.subr.bf16.mxu0 0
        %876 = vmatpush2.bf16.msra.mxu0 0
        %877 = vmatprep.subr.bf16.mxu0 0
        %878 = vmatpush2.bf16.msra.mxu0 0
        %879 = vmatprep.subr.bf16.mxu0 0
        %880 = vmatpush2.bf16.msra.mxu0 0
        %881 = vmatprep.subr.bf16.mxu0 0
        %882 = vmatpush2.bf16.msra.mxu0 0
        %883 = vmatprep.subr.bf16.mxu0 0
        %884 = vmatpush2.bf16.msra.mxu0 0
        %885 = vmatprep.subr.bf16.mxu0 0
        %886 = vmatpush2.bf16.msra.mxu0 0
        %887 = vmatprep.subr.bf16.mxu0 0
        %888 = vmatpush2.bf16.msra.mxu0 0
        %889 = vmatprep.mubr.bf16.mxu0 0
        %890 = vmatmul.mubr.bf16.gmra.mxu0 %v842
        %v891 = vpop.f32.mrf.mxu0
        %v892 = vadd.f32 0.0, %v891
        %v893 = vpop.f32.mrf.mxu0
        %v894 = vadd.f32 0.0, %v893
        %v895 = vpop.f32.mrf.mxu0
        %v896 = vpop.f32.mrf.mxu0
        %897 = vdwg.mxu0
        %898 = vmatprep.subr.bf16.mxu0 0
        %899 = vmatpush1.bf16.msra.mxu0 0
        %900 = vmatprep.subr.bf16.mxu0 0
        %901 = vmatpush1.bf16.msra.mxu0 0
        %902 = vmatprep.subr.bf16.mxu0 0
        %903 = vmatpush1.bf16.msra.mxu0 0
        %904 = vmatprep.subr.bf16.mxu0 0
        %905 = vmatpush1.bf16.msra.mxu0 0
        %906 = vmatprep.subr.bf16.mxu0 0
        %907 = vmatpush1.bf16.msra.mxu0 0
        %908 = vmatprep.subr.bf16.mxu0 0
        %909 = vmatpush1.bf16.msra.mxu0 0
        %910 = vmatprep.subr.bf16.mxu0 0
        %911 = vmatpush1.bf16.msra.mxu0 0
        %912 = vmatprep.subr.bf16.mxu0 %v855
        %913 = vmatpush1.bf16.msra.mxu0 %v852
        %914 = vmatprep.subr.bf16.mxu0 0
        %915 = vmatpush2.bf16.msra.mxu0 0
        %916 = vmatprep.subr.bf16.mxu0 0
        %917 = vmatpush2.bf16.msra.mxu0 0
        %918 = vmatprep.subr.bf16.mxu0 0
        %919 = vmatpush2.bf16.msra.mxu0 0
        %920 = vmatprep.subr.bf16.mxu0 0
        %921 = vmatpush2.bf16.msra.mxu0 0
        %922 = vmatprep.subr.bf16.mxu0 0
        %923 = vmatpush2.bf16.msra.mxu0 0
        %924 = vmatprep.subr.bf16.mxu0 0
        %925 = vmatpush2.bf16.msra.mxu0 0
        %926 = vmatprep.subr.bf16.mxu0 0
        %927 = vmatpush2.bf16.msra.mxu0 0
        %928 = vmatprep.subr.bf16.mxu0 0
        %929 = vmatpush2.bf16.msra.mxu0 0
        %930 = vmatprep.mubr.bf16.mxu0 0
        %931 = vmatmul.mubr.bf16.gmra.mxu0 %v842
        %v932 = vpop.f32.mrf.mxu0
        %v933 = vadd.f32 0.0, %v932
        %v934 = vpop.f32.mrf.mxu0
        %v935 = vadd.f32 0.0, %v934
        %v936 = vpop.f32.mrf.mxu0
        %v937 = vpop.f32.mrf.mxu0
        %938 = vdwg.mxu0
        %v945 = vunpack.c.l.b16 %v820
        %v946 = vunpack.c.h.b16 %v820
        %v947 = vunpack.c.l.b16 %v821
        %v948 = vunpack.c.h.b16 %v821
        %v949 = vunpack.c.l.b16 %v822
        %v950 = vunpack.c.h.b16 %v822
        %v951 = vunpack.c.l.b16 %v823
        %v952 = vunpack.c.h.b16 %v823
        %v953 = vunpack.c.l.b16 %v824
        %v954 = vunpack.c.h.b16 %v824
        %v955 = vunpack.c.l.b16 %v825
        %v956 = vunpack.c.h.b16 %v825
        %v957 = vpack.c.b16 %v949, %v945
        %v958 = vpack.c.b16 %v950, %v946
        %v959 = vpack.c.b16 %v951, %v947
        %v960 = vpack.c.b16 %v952, %v948
        %v961 = vpack.c.b16 %v953, %v953
        %v962 = vpack.c.b16 %v954, %v954
        %v963 = vpack.c.b16 %v955, %v955
        %v964 = vpack.c.b16 %v956, %v956
        %vm969 = vcmask 195584
        %v971 = vsel %vm969, %v819, 0
        %v974 = vsel %vm844, %v961, 0
        %v977 = vsel %vm844, %v962, 0
        %v980 = vsel %vm844, %v963, 0
        %v983 = vsel %vm844, %v964, 0
        %985 = vmatprep.subr.bf16.mxu0 0
        %986 = vmatpush1.bf16.msra.mxu0 0
        %987 = vmatprep.subr.bf16.mxu0 0
        %988 = vmatpush1.bf16.msra.mxu0 0
        %989 = vmatprep.subr.bf16.mxu0 0
        %990 = vmatpush1.bf16.msra.mxu0 0
        %991 = vmatprep.subr.bf16.mxu0 0
        %992 = vmatpush1.bf16.msra.mxu0 0
        %993 = vmatprep.subr.bf16.mxu0 0
        %994 = vmatpush1.bf16.msra.mxu0 0
        %995 = vmatprep.subr.bf16.mxu0 0
        %996 = vmatpush1.bf16.msra.mxu0 0
        %997 = vmatprep.subr.bf16.mxu0 %v977
        %998 = vmatpush1.bf16.msra.mxu0 %v974
        %999 = vmatprep.subr.bf16.mxu0 %v958
        %1000 = vmatpush1.bf16.msra.mxu0 %v957
        %1001 = vmatprep.subr.bf16.mxu0 0
        %1002 = vmatpush2.bf16.msra.mxu0 0
        %1003 = vmatprep.subr.bf16.mxu0 0
        %1004 = vmatpush2.bf16.msra.mxu0 0
        %1005 = vmatprep.subr.bf16.mxu0 0
        %1006 = vmatpush2.bf16.msra.mxu0 0
        %1007 = vmatprep.subr.bf16.mxu0 0
        %1008 = vmatpush2.bf16.msra.mxu0 0
        %1009 = vmatprep.subr.bf16.mxu0 0
        %1010 = vmatpush2.bf16.msra.mxu0 0
        %1011 = vmatprep.subr.bf16.mxu0 0
        %1012 = vmatpush2.bf16.msra.mxu0 0
        %1013 = vmatprep.subr.bf16.mxu0 0
        %1014 = vmatpush2.bf16.msra.mxu0 0
        %1015 = vmatprep.subr.bf16.mxu0 0
        %1016 = vmatpush2.bf16.msra.mxu0 0
        %1017 = vmatprep.mubr.bf16.mxu0 0
        %1018 = vmatmul.mubr.bf16.gmra.mxu0 %v971
        %v1019 = vpop.f32.mrf.mxu0
        %v1020 = vadd.f32 %v892, %v1019
        %v1021 = vpop.f32.mrf.mxu0
        %v1022 = vadd.f32 %v894, %v1021
        %v1023 = vpop.f32.mrf.mxu0
        %v1024 = vpop.f32.mrf.mxu0
        %1025 = vdwg.mxu0
        %1026 = vmatprep.subr.bf16.mxu0 0
        %1027 = vmatpush1.bf16.msra.mxu0 0
        %1028 = vmatprep.subr.bf16.mxu0 0
        %1029 = vmatpush1.bf16.msra.mxu0 0
        %1030 = vmatprep.subr.bf16.mxu0 0
        %1031 = vmatpush1.bf16.msra.mxu0 0
        %1032 = vmatprep.subr.bf16.mxu0 0
        %1033 = vmatpush1.bf16.msra.mxu0 0
        %1034 = vmatprep.subr.bf16.mxu0 0
        %1035 = vmatpush1.bf16.msra.mxu0 0
        %1036 = vmatprep.subr.bf16.mxu0 0
        %1037 = vmatpush1.bf16.msra.mxu0 0
        %1038 = vmatprep.subr.bf16.mxu0 %v983
        %1039 = vmatpush1.bf16.msra.mxu0 %v980
        %1040 = vmatprep.subr.bf16.mxu0 %v960
        %1041 = vmatpush1.bf16.msra.mxu0 %v959
        %1042 = vmatprep.subr.bf16.mxu0 0
        %1043 = vmatpush2.bf16.msra.mxu0 0
        %1044 = vmatprep.subr.bf16.mxu0 0
        %1045 = vmatpush2.bf16.msra.mxu0 0
        %1046 = vmatprep.subr.bf16.mxu0 0
        %1047 = vmatpush2.bf16.msra.mxu0 0
        %1048 = vmatprep.subr.bf16.mxu0 0
        %1049 = vmatpush2.bf16.msra.mxu0 0
        %1050 = vmatprep.subr.bf16.mxu0 0
        %1051 = vmatpush2.bf16.msra.mxu0 0
        %1052 = vmatprep.subr.bf16.mxu0 0
        %1053 = vmatpush2.bf16.msra.mxu0 0
        %1054 = vmatprep.subr.bf16.mxu0 0
        %1055 = vmatpush2.bf16.msra.mxu0 0
        %1056 = vmatprep.subr.bf16.mxu0 0
        %1057 = vmatpush2.bf16.msra.mxu0 0
        %1058 = vmatprep.mubr.bf16.mxu0 0
        %1059 = vmatmul.mubr.bf16.gmra.mxu0 %v971
        %v1060 = vpop.f32.mrf.mxu0
        %v1061 = vadd.f32 %v933, %v1060
        %v1062 = vpop.f32.mrf.mxu0
        %v1063 = vadd.f32 %v935, %v1062
        %v1064 = vpop.f32.mrf.mxu0
        %v1065 = vpop.f32.mrf.mxu0
        %1066 = vdwg.mxu0
        %v1067 = vld [vmem:[%s663] sm:$0xf]
        %v1069 = vlaneseq
        %v1070 = vshrl.u32 %v1069, 7
        %v1071 = vsub.s32 0, %v1070
        %v1072 = vrot.slane %v1067, %v1071
        %v1073 = vlaneseq
        %v1074 = vshrl.u32 %v1073, 7
        %v1075 = vsub.s32 1, %v1074
        %v1076 = vrot.slane %v1067, %v1075
        %v1077 = vlaneseq
        %v1078 = vshrl.u32 %v1077, 7
        %v1079 = vsub.s32 2, %v1078
        %v1080 = vrot.slane %v1067, %v1079
        %v1081 = vlaneseq
        %v1082 = vshrl.u32 %v1081, 7
        %v1083 = vsub.s32 3, %v1082
        %v1084 = vrot.slane %v1067, %v1083
        %v1089 = vadd.f32 %v1020, %v1072
        %v1090 = vadd.f32 %v1022, %v1076
        %v1091 = vadd.f32 %v1061, %v1080
        %v1092 = vadd.f32 %v1063, %v1084
        %v1093 = vmul.f32 %v1089, 0.5
        %v1094 = vmul.f32 %v1090, 0.5
        %v1095 = vmul.f32 %v1091, 0.5
        %v1096 = vmul.f32 %v1092, 0.5
        %v1097 = vmul.f32 %v1089, %v1089
        %v1098 = vmul.f32 %v1090, %v1090
        %v1099 = vmul.f32 %v1091, %v1091
        %v1100 = vmul.f32 %v1092, %v1092
        %v1101 = vmul.f32 %v1097, %v1089
        %v1102 = vmul.f32 %v1098, %v1090
        %v1103 = vmul.f32 %v1099, %v1091
        %v1104 = vmul.f32 %v1100, %v1092
        %v1105 = vmul.f32 %v1101, 0.044715
        %v1106 = vmul.f32 %v1102, 0.044715
        %v1107 = vmul.f32 %v1103, 0.044715
        %v1108 = vmul.f32 %v1104, 0.044715
        %v1109 = vadd.f32 %v1089, %v1105
        %v1110 = vadd.f32 %v1090, %v1106
        %v1111 = vadd.f32 %v1091, %v1107
        %v1112 = vadd.f32 %v1092, %v1108
        %v1113 = vmul.f32 %v1109, 0.7978846
        %v1114 = vmul.f32 %v1110, 0.7978846
        %v1115 = vmul.f32 %v1111, 0.7978846
        %v1116 = vmul.f32 %v1112, 0.7978846
        %v1117 = vtanh.pop %v1113
        %v1118 = vtanh.pop %v1114
        %v1119 = vtanh.pop %v1115
        %v1120 = vtanh.pop %v1116
        %v1121 = vadd.f32 %v1117, 1.0
        %v1122 = vadd.f32 %v1118, 1.0
        %v1123 = vadd.f32 %v1119, 1.0
        %v1124 = vadd.f32 %v1120, 1.0
        %v1125 = vmul.f32 %v1093, %v1121
        %v1126 = vmul.f32 %v1094, %v1122
        %v1127 = vmul.f32 %v1095, %v1123
        %v1128 = vmul.f32 %v1096, %v1124
        %v1129 = vpack.c.bf16 %v1125, %v1125
        %v1130 = vpack.c.bf16 %v1126, %v1126
        %v1131 = vpack.c.bf16 %v1127, %v1127
        %v1132 = vpack.c.bf16 %v1128, %v1128
        %v1133 = vld [vmem:[%s672] sm:$0xff]
        %v1134 = vld [vmem:[%s672 + $0x8] sm:$0xff]
        %v1135 = vld [vmem:[%s672 + $0x10] sm:$0xff]
        %v1136 = vld [vmem:[%s672 + $0x18] sm:$0xff]
        %v1137 = vld [vmem:[%s672 + $0x20] sm:$0xff]
        %v1138 = vld [vmem:[%s672 + $0x28] sm:$0xff]
        %v1139 = vld [vmem:[%s672 + $0x30] sm:$0xff]
        %v1140 = vld [vmem:[%s672 + $0x38] sm:$0xff]
        %v1141 = vld [vmem:[%s672 + $0x40] sm:$0xff]
        %v1142 = vld [vmem:[%s672 + $0x48] sm:$0xff]
        %v1143 = vld [vmem:[%s672 + $0x50] sm:$0xff]
        %v1144 = vld [vmem:[%s672 + $0x58] sm:$0xff]
        %v1145 = vld [vmem:[%s672 + $0x60] sm:$0xff]
        %v1146 = vld [vmem:[%s672 + $0x68] sm:$0xff]
        %v1147 = vld [vmem:[%s672 + $0x70] sm:$0xff]
        %v1148 = vld [vmem:[%s672 + $0x78] sm:$0xff]
        %v1149 = vld [vmem:[%s672 + $0x80] sm:$0xff]
        %v1150 = vld [vmem:[%s672 + $0x88] sm:$0xff]
        %v1151 = vld [vmem:[%s672 + $0x90] sm:$0xff]
        %v1152 = vld [vmem:[%s672 + $0x98] sm:$0xff]
        %v1153 = vld [vmem:[%s672 + $0xa0] sm:$0xff]
        %v1154 = vld [vmem:[%s672 + $0xa8] sm:$0xff]
        %v1155 = vld [vmem:[%s672 + $0xb0] sm:$0xff]
        %v1156 = vld [vmem:[%s672 + $0xb8] sm:$0xff]
        %v1157 = vld [vmem:[%s672 + $0xc0] sm:$0xff]
        %v1158 = vld [vmem:[%s672 + $0xc8] sm:$0xff]
        %v1159 = vld [vmem:[%s672 + $0xd0] sm:$0xff]
        %v1160 = vld [vmem:[%s672 + $0xd8] sm:$0xff]
        %v1161 = vld [vmem:[%s672 + $0xe0] sm:$0xff]
        %v1162 = vld [vmem:[%s672 + $0xe8] sm:$0xff]
        %v1163 = vld [vmem:[%s672 + $0xf0] sm:$0xff]
        %v1164 = vld [vmem:[%s672 + $0xf8] sm:$0xff]
        %v1165 = vld [vmem:[%s672 + $0x100] sm:$0xff]
        %v1166 = vld [vmem:[%s672 + $0x108] sm:$0xff]
        %v1167 = vld [vmem:[%s672 + $0x110] sm:$0xff]
        %v1168 = vld [vmem:[%s672 + $0x118] sm:$0xff]
        %v1169 = vld [vmem:[%s672 + $0x120] sm:$0xff]
        %v1170 = vld [vmem:[%s672 + $0x128] sm:$0xff]
        %v1171 = vld [vmem:[%s672 + $0x130] sm:$0xff]
        %v1172 = vld [vmem:[%s672 + $0x138] sm:$0xff]
        %v1173 = vld [vmem:[%s672 + $0x140] sm:$0xff]
        %v1174 = vld [vmem:[%s672 + $0x148] sm:$0xff]
        %v1175 = vld [vmem:[%s672 + $0x150] sm:$0xff]
        %v1176 = vld [vmem:[%s672 + $0x158] sm:$0xff]
        %v1177 = vld [vmem:[%s672 + $0x160] sm:$0xff]
        %v1178 = vld [vmem:[%s672 + $0x168] sm:$0xff]
        %v1179 = vld [vmem:[%s672 + $0x170] sm:$0xff]
        %v1180 = vld [vmem:[%s672 + $0x178] sm:$0xff]
        %v1181 = vld [vmem:[%s672 + $0x180] sm:$0xff]
        %v1182 = vld [vmem:[%s672 + $0x188] sm:$0xff]
        %v1183 = vld [vmem:[%s672 + $0x190] sm:$0xff]
        %v1184 = vld [vmem:[%s672 + $0x198] sm:$0xff]
        %v1185 = vld [vmem:[%s672 + $0x1a0] sm:$0xff]
        %v1186 = vld [vmem:[%s672 + $0x1a8] sm:$0xff]
        %v1187 = vld [vmem:[%s672 + $0x1b0] sm:$0xff]
        %v1188 = vld [vmem:[%s672 + $0x1b8] sm:$0xff]
        %v1189 = vld [vmem:[%s672 + $0x1c0] sm:$0xff]
        %v1190 = vld [vmem:[%s672 + $0x1c8] sm:$0xff]
        %v1191 = vld [vmem:[%s672 + $0x1d0] sm:$0xff]
        %v1192 = vld [vmem:[%s672 + $0x1d8] sm:$0xff]
        %v1193 = vld [vmem:[%s672 + $0x1e0] sm:$0xff]
        %v1194 = vld [vmem:[%s672 + $0x1e8] sm:$0xff]
        %v1195 = vld [vmem:[%s672 + $0x1f0] sm:$0xff]
        %v1196 = vld [vmem:[%s672 + $0x1f8] sm:$0xff]
        %v1197 = vld [vmem:[%s672 + $0x200] sm:$0xff]
        %v1198 = vld [vmem:[%s672 + $0x208] sm:$0xff]
        %v1199 = vld [vmem:[%s672 + $0x210] sm:$0xff]
        %v1200 = vld [vmem:[%s672 + $0x218] sm:$0xff]
        %v1201 = vld [vmem:[%s672 + $0x220] sm:$0xff]
        %v1202 = vld [vmem:[%s672 + $0x228] sm:$0xff]
        %v1203 = vld [vmem:[%s672 + $0x230] sm:$0xff]
        %v1204 = vld [vmem:[%s672 + $0x238] sm:$0xff]
        %v1205 = vld [vmem:[%s672 + $0x240] sm:$0xff]
        %v1206 = vld [vmem:[%s672 + $0x248] sm:$0xff]
        %v1207 = vld [vmem:[%s672 + $0x250] sm:$0xff]
        %v1208 = vld [vmem:[%s672 + $0x258] sm:$0xff]
        %v1209 = vld [vmem:[%s672 + $0x260] sm:$0xff]
        %v1210 = vld [vmem:[%s672 + $0x268] sm:$0xff]
        %v1211 = vld [vmem:[%s672 + $0x270] sm:$0xff]
        %v1212 = vld [vmem:[%s672 + $0x278] sm:$0xff]
        %v1213 = vld [vmem:[%s672 + $0x280] sm:$0xff]
        %v1214 = vld [vmem:[%s672 + $0x288] sm:$0xff]
        %v1215 = vld [vmem:[%s672 + $0x290] sm:$0xff]
        %v1216 = vld [vmem:[%s672 + $0x298] sm:$0xff]
        %v1217 = vld [vmem:[%s672 + $0x2a0] sm:$0xff]
        %v1218 = vld [vmem:[%s672 + $0x2a8] sm:$0xff]
        %v1219 = vld [vmem:[%s672 + $0x2b0] sm:$0xff]
        %v1220 = vld [vmem:[%s672 + $0x2b8] sm:$0xff]
        %v1221 = vld [vmem:[%s672 + $0x2c0] sm:$0xff]
        %v1222 = vld [vmem:[%s672 + $0x2c8] sm:$0xff]
        %v1223 = vld [vmem:[%s672 + $0x2d0] sm:$0xff]
        %v1224 = vld [vmem:[%s672 + $0x2d8] sm:$0xff]
        %v1225 = vld [vmem:[%s672 + $0x2e0] sm:$0xff]
        %v1226 = vld [vmem:[%s672 + $0x2e8] sm:$0xff]
        %v1227 = vld [vmem:[%s672 + $0x2f0] sm:$0xff]
        %v1228 = vld [vmem:[%s672 + $0x2f8] sm:$0xff]
        %v1229 = vld [vmem:[%s672 + $0x300] sm:$0xff]
        %v1230 = vld [vmem:[%s672 + $0x308] sm:$0xff]
        %v1231 = vld [vmem:[%s672 + $0x310] sm:$0xff]
        %v1232 = vld [vmem:[%s672 + $0x318] sm:$0xff]
        %v1233 = vld [vmem:[%s672 + $0x320] sm:$0xff]
        %v1234 = vld [vmem:[%s672 + $0x328] sm:$0xff]
        %v1235 = vld [vmem:[%s672 + $0x330] sm:$0xff]
        %v1236 = vld [vmem:[%s672 + $0x338] sm:$0xff]
        %v1237 = vld [vmem:[%s672 + $0x340] sm:$0xff]
        %v1238 = vld [vmem:[%s672 + $0x348] sm:$0xff]
        %v1239 = vld [vmem:[%s672 + $0x350] sm:$0xff]
        %v1240 = vld [vmem:[%s672 + $0x358] sm:$0xff]
        %v1241 = vld [vmem:[%s672 + $0x360] sm:$0xff]
        %v1242 = vld [vmem:[%s672 + $0x368] sm:$0xff]
        %v1243 = vld [vmem:[%s672 + $0x370] sm:$0xff]
        %v1244 = vld [vmem:[%s672 + $0x378] sm:$0xff]
        %v1245 = vld [vmem:[%s672 + $0x380] sm:$0xff]
        %v1246 = vld [vmem:[%s672 + $0x388] sm:$0xff]
        %v1247 = vld [vmem:[%s672 + $0x390] sm:$0xff]
        %v1248 = vld [vmem:[%s672 + $0x398] sm:$0xff]
        %v1249 = vld [vmem:[%s672 + $0x3a0] sm:$0xff]
        %v1250 = vld [vmem:[%s672 + $0x3a8] sm:$0xff]
        %v1251 = vld [vmem:[%s672 + $0x3b0] sm:$0xff]
        %v1252 = vld [vmem:[%s672 + $0x3b8] sm:$0xff]
        %v1253 = vld [vmem:[%s672 + $0x3c0] sm:$0xff]
        %v1254 = vld [vmem:[%s672 + $0x3c8] sm:$0xff]
        %v1255 = vld [vmem:[%s672 + $0x3d0] sm:$0xff]
        %v1256 = vld [vmem:[%s672 + $0x3d8] sm:$0xff]
        %v1257 = vld [vmem:[%s672 + $0x3e0] sm:$0xff]
        %v1258 = vld [vmem:[%s672 + $0x3e8] sm:$0xff]
        %v1259 = vld [vmem:[%s672 + $0x3f0] sm:$0xff]
        %v1260 = vld [vmem:[%s672 + $0x3f8] sm:$0xff]
        %v1261 = vld [vmem:[%s802] sm:$0xf]
        %v1263 = vlaneseq
        %v1264 = vshrl.u32 %v1263, 7
        %v1265 = vsub.s32 0, %v1264
        %v1266 = vrot.slane %v1261, %v1265
        %v1267 = vlaneseq
        %v1268 = vshrl.u32 %v1267, 7
        %v1269 = vsub.s32 1, %v1268
        %v1270 = vrot.slane %v1261, %v1269
        %v1271 = vlaneseq
        %v1272 = vshrl.u32 %v1271, 7
        %v1273 = vsub.s32 2, %v1272
        %v1274 = vrot.slane %v1261, %v1273
        %v1275 = vlaneseq
        %v1276 = vshrl.u32 %v1275, 7
        %v1277 = vsub.s32 3, %v1276
        %v1278 = vrot.slane %v1261, %v1277
        %v1411 = vunpack.c.l.b16 %v1133
        %v1412 = vunpack.c.h.b16 %v1133
        %v1413 = vunpack.c.l.b16 %v1134
        %v1414 = vunpack.c.h.b16 %v1134
        %v1415 = vunpack.c.l.b16 %v1135
        %v1416 = vunpack.c.h.b16 %v1135
        %v1417 = vunpack.c.l.b16 %v1136
        %v1418 = vunpack.c.h.b16 %v1136
        %v1419 = vunpack.c.l.b16 %v1137
        %v1420 = vunpack.c.h.b16 %v1137
        %v1421 = vunpack.c.l.b16 %v1138
        %v1422 = vunpack.c.h.b16 %v1138
        %v1423 = vunpack.c.l.b16 %v1139
        %v1424 = vunpack.c.h.b16 %v1139
        %v1425 = vunpack.c.l.b16 %v1140
        %v1426 = vunpack.c.h.b16 %v1140
        %v1427 = vunpack.c.l.b16 %v1141
        %v1428 = vunpack.c.h.b16 %v1141
        %v1429 = vunpack.c.l.b16 %v1142
        %v1430 = vunpack.c.h.b16 %v1142
        %v1431 = vunpack.c.l.b16 %v1143
        %v1432 = vunpack.c.h.b16 %v1143
        %v1433 = vunpack.c.l.b16 %v1144
        %v1434 = vunpack.c.h.b16 %v1144
        %v1435 = vunpack.c.l.b16 %v1145
        %v1436 = vunpack.c.h.b16 %v1145
        %v1437 = vunpack.c.l.b16 %v1146
        %v1438 = vunpack.c.h.b16 %v1146
        %v1439 = vunpack.c.l.b16 %v1147
        %v1440 = vunpack.c.h.b16 %v1147
        %v1441 = vunpack.c.l.b16 %v1148
        %v1442 = vunpack.c.h.b16 %v1148
        %v1443 = vunpack.c.l.b16 %v1149
        %v1444 = vunpack.c.h.b16 %v1149
        %v1445 = vunpack.c.l.b16 %v1150
        %v1446 = vunpack.c.h.b16 %v1150
        %v1447 = vunpack.c.l.b16 %v1151
        %v1448 = vunpack.c.h.b16 %v1151
        %v1449 = vunpack.c.l.b16 %v1152
        %v1450 = vunpack.c.h.b16 %v1152
        %v1451 = vunpack.c.l.b16 %v1153
        %v1452 = vunpack.c.h.b16 %v1153
        %v1453 = vunpack.c.l.b16 %v1154
        %v1454 = vunpack.c.h.b16 %v1154
        %v1455 = vunpack.c.l.b16 %v1155
        %v1456 = vunpack.c.h.b16 %v1155
        %v1457 = vunpack.c.l.b16 %v1156
        %v1458 = vunpack.c.h.b16 %v1156
        %v1459 = vunpack.c.l.b16 %v1157
        %v1460 = vunpack.c.h.b16 %v1157
        %v1461 = vunpack.c.l.b16 %v1158
        %v1462 = vunpack.c.h.b16 %v1158
        %v1463 = vunpack.c.l.b16 %v1159
        %v1464 = vunpack.c.h.b16 %v1159
        %v1465 = vunpack.c.l.b16 %v1160
        %v1466 = vunpack.c.h.b16 %v1160
        %v1467 = vunpack.c.l.b16 %v1161
        %v1468 = vunpack.c.h.b16 %v1161
        %v1469 = vunpack.c.l.b16 %v1162
        %v1470 = vunpack.c.h.b16 %v1162
        %v1471 = vunpack.c.l.b16 %v1163
        %v1472 = vunpack.c.h.b16 %v1163
        %v1473 = vunpack.c.l.b16 %v1164
        %v1474 = vunpack.c.h.b16 %v1164
        %v1475 = vunpack.c.l.b16 %v1165
        %v1476 = vunpack.c.h.b16 %v1165
        %v1477 = vunpack.c.l.b16 %v1166
        %v1478 = vunpack.c.h.b16 %v1166
        %v1479 = vunpack.c.l.b16 %v1167
        %v1480 = vunpack.c.h.b16 %v1167
        %v1481 = vunpack.c.l.b16 %v1168
        %v1482 = vunpack.c.h.b16 %v1168
        %v1483 = vunpack.c.l.b16 %v1169
        %v1484 = vunpack.c.h.b16 %v1169
        %v1485 = vunpack.c.l.b16 %v1170
        %v1486 = vunpack.c.h.b16 %v1170
        %v1487 = vunpack.c.l.b16 %v1171
        %v1488 = vunpack.c.h.b16 %v1171
        %v1489 = vunpack.c.l.b16 %v1172
        %v1490 = vunpack.c.h.b16 %v1172
        %v1491 = vunpack.c.l.b16 %v1173
        %v1492 = vunpack.c.h.b16 %v1173
        %v1493 = vunpack.c.l.b16 %v1174
        %v1494 = vunpack.c.h.b16 %v1174
        %v1495 = vunpack.c.l.b16 %v1175
        %v1496 = vunpack.c.h.b16 %v1175
        %v1497 = vunpack.c.l.b16 %v1176
        %v1498 = vunpack.c.h.b16 %v1176
        %v1499 = vunpack.c.l.b16 %v1177
        %v1500 = vunpack.c.h.b16 %v1177
        %v1501 = vunpack.c.l.b16 %v1178
        %v1502 = vunpack.c.h.b16 %v1178
        %v1503 = vunpack.c.l.b16 %v1179
        %v1504 = vunpack.c.h.b16 %v1179
        %v1505 = vunpack.c.l.b16 %v1180
        %v1506 = vunpack.c.h.b16 %v1180
        %v1507 = vunpack.c.l.b16 %v1181
        %v1508 = vunpack.c.h.b16 %v1181
        %v1509 = vunpack.c.l.b16 %v1182
        %v1510 = vunpack.c.h.b16 %v1182
        %v1511 = vunpack.c.l.b16 %v1183
        %v1512 = vunpack.c.h.b16 %v1183
        %v1513 = vunpack.c.l.b16 %v1184
        %v1514 = vunpack.c.h.b16 %v1184
        %v1515 = vunpack.c.l.b16 %v1185
        %v1516 = vunpack.c.h.b16 %v1185
        %v1517 = vunpack.c.l.b16 %v1186
        %v1518 = vunpack.c.h.b16 %v1186
        %v1519 = vunpack.c.l.b16 %v1187
        %v1520 = vunpack.c.h.b16 %v1187
        %v1521 = vunpack.c.l.b16 %v1188
        %v1522 = vunpack.c.h.b16 %v1188
        %v1523 = vunpack.c.l.b16 %v1189
        %v1524 = vunpack.c.h.b16 %v1189
        %v1525 = vunpack.c.l.b16 %v1190
        %v1526 = vunpack.c.h.b16 %v1190
        %v1527 = vunpack.c.l.b16 %v1191
        %v1528 = vunpack.c.h.b16 %v1191
        %v1529 = vunpack.c.l.b16 %v1192
        %v1530 = vunpack.c.h.b16 %v1192
        %v1531 = vunpack.c.l.b16 %v1193
        %v1532 = vunpack.c.h.b16 %v1193
        %v1533 = vunpack.c.l.b16 %v1194
        %v1534 = vunpack.c.h.b16 %v1194
        %v1535 = vunpack.c.l.b16 %v1195
        %v1536 = vunpack.c.h.b16 %v1195
        %v1537 = vunpack.c.l.b16 %v1196
        %v1538 = vunpack.c.h.b16 %v1196
        %v1539 = vunpack.c.l.b16 %v1197
        %v1540 = vunpack.c.h.b16 %v1197
        %v1541 = vunpack.c.l.b16 %v1198
        %v1542 = vunpack.c.h.b16 %v1198
        %v1543 = vunpack.c.l.b16 %v1199
        %v1544 = vunpack.c.h.b16 %v1199
        %v1545 = vunpack.c.l.b16 %v1200
        %v1546 = vunpack.c.h.b16 %v1200
        %v1547 = vunpack.c.l.b16 %v1201
        %v1548 = vunpack.c.h.b16 %v1201
        %v1549 = vunpack.c.l.b16 %v1202
        %v1550 = vunpack.c.h.b16 %v1202
        %v1551 = vunpack.c.l.b16 %v1203
        %v1552 = vunpack.c.h.b16 %v1203
        %v1553 = vunpack.c.l.b16 %v1204
        %v1554 = vunpack.c.h.b16 %v1204
        %v1555 = vunpack.c.l.b16 %v1205
        %v1556 = vunpack.c.h.b16 %v1205
        %v1557 = vunpack.c.l.b16 %v1206
        %v1558 = vunpack.c.h.b16 %v1206
        %v1559 = vunpack.c.l.b16 %v1207
        %v1560 = vunpack.c.h.b16 %v1207
        %v1561 = vunpack.c.l.b16 %v1208
        %v1562 = vunpack.c.h.b16 %v1208
        %v1563 = vunpack.c.l.b16 %v1209
        %v1564 = vunpack.c.h.b16 %v1209
        %v1565 = vunpack.c.l.b16 %v1210
        %v1566 = vunpack.c.h.b16 %v1210
        %v1567 = vunpack.c.l.b16 %v1211
        %v1568 = vunpack.c.h.b16 %v1211
        %v1569 = vunpack.c.l.b16 %v1212
        %v1570 = vunpack.c.h.b16 %v1212
        %v1571 = vunpack.c.l.b16 %v1213
        %v1572 = vunpack.c.h.b16 %v1213
        %v1573 = vunpack.c.l.b16 %v1214
        %v1574 = vunpack.c.h.b16 %v1214
        %v1575 = vunpack.c.l.b16 %v1215
        %v1576 = vunpack.c.h.b16 %v1215
        %v1577 = vunpack.c.l.b16 %v1216
        %v1578 = vunpack.c.h.b16 %v1216
        %v1579 = vunpack.c.l.b16 %v1217
        %v1580 = vunpack.c.h.b16 %v1217
        %v1581 = vunpack.c.l.b16 %v1218
        %v1582 = vunpack.c.h.b16 %v1218
        %v1583 = vunpack.c.l.b16 %v1219
        %v1584 = vunpack.c.h.b16 %v1219
        %v1585 = vunpack.c.l.b16 %v1220
        %v1586 = vunpack.c.h.b16 %v1220
        %v1587 = vunpack.c.l.b16 %v1221
        %v1588 = vunpack.c.h.b16 %v1221
        %v1589 = vunpack.c.l.b16 %v1222
        %v1590 = vunpack.c.h.b16 %v1222
        %v1591 = vunpack.c.l.b16 %v1223
        %v1592 = vunpack.c.h.b16 %v1223
        %v1593 = vunpack.c.l.b16 %v1224
        %v1594 = vunpack.c.h.b16 %v1224
        %v1595 = vunpack.c.l.b16 %v1225
        %v1596 = vunpack.c.h.b16 %v1225
        %v1597 = vunpack.c.l.b16 %v1226
        %v1598 = vunpack.c.h.b16 %v1226
        %v1599 = vunpack.c.l.b16 %v1227
        %v1600 = vunpack.c.h.b16 %v1227
        %v1601 = vunpack.c.l.b16 %v1228
        %v1602 = vunpack.c.h.b16 %v1228
        %v1603 = vunpack.c.l.b16 %v1229
        %v1604 = vunpack.c.h.b16 %v1229
        %v1605 = vunpack.c.l.b16 %v1230
        %v1606 = vunpack.c.h.b16 %v1230
        %v1607 = vunpack.c.l.b16 %v1231
        %v1608 = vunpack.c.h.b16 %v1231
        %v1609 = vunpack.c.l.b16 %v1232
        %v1610 = vunpack.c.h.b16 %v1232
        %v1611 = vunpack.c.l.b16 %v1233
        %v1612 = vunpack.c.h.b16 %v1233
        %v1613 = vunpack.c.l.b16 %v1234
        %v1614 = vunpack.c.h.b16 %v1234
        %v1615 = vunpack.c.l.b16 %v1235
        %v1616 = vunpack.c.h.b16 %v1235
        %v1617 = vunpack.c.l.b16 %v1236
        %v1618 = vunpack.c.h.b16 %v1236
        %v1619 = vunpack.c.l.b16 %v1237
        %v1620 = vunpack.c.h.b16 %v1237
        %v1621 = vunpack.c.l.b16 %v1238
        %v1622 = vunpack.c.h.b16 %v1238
        %v1623 = vunpack.c.l.b16 %v1239
        %v1624 = vunpack.c.h.b16 %v1239
        %v1625 = vunpack.c.l.b16 %v1240
        %v1626 = vunpack.c.h.b16 %v1240
        %v1627 = vunpack.c.l.b16 %v1241
        %v1628 = vunpack.c.h.b16 %v1241
        %v1629 = vunpack.c.l.b16 %v1242
        %v1630 = vunpack.c.h.b16 %v1242
        %v1631 = vunpack.c.l.b16 %v1243
        %v1632 = vunpack.c.h.b16 %v1243
        %v1633 = vunpack.c.l.b16 %v1244
        %v1634 = vunpack.c.h.b16 %v1244
        %v1635 = vunpack.c.l.b16 %v1245
        %v1636 = vunpack.c.h.b16 %v1245
        %v1637 = vunpack.c.l.b16 %v1246
        %v1638 = vunpack.c.h.b16 %v1246
        %v1639 = vunpack.c.l.b16 %v1247
        %v1640 = vunpack.c.h.b16 %v1247
        %v1641 = vunpack.c.l.b16 %v1248
        %v1642 = vunpack.c.h.b16 %v1248
        %v1643 = vunpack.c.l.b16 %v1249
        %v1644 = vunpack.c.h.b16 %v1249
        %v1645 = vunpack.c.l.b16 %v1250
        %v1646 = vunpack.c.h.b16 %v1250
        %v1647 = vunpack.c.l.b16 %v1251
        %v1648 = vunpack.c.h.b16 %v1251
        %v1649 = vunpack.c.l.b16 %v1252
        %v1650 = vunpack.c.h.b16 %v1252
        %v1651 = vunpack.c.l.b16 %v1253
        %v1652 = vunpack.c.h.b16 %v1253
        %v1653 = vunpack.c.l.b16 %v1254
        %v1654 = vunpack.c.h.b16 %v1254
        %v1655 = vunpack.c.l.b16 %v1255
        %v1656 = vunpack.c.h.b16 %v1255
        %v1657 = vunpack.c.l.b16 %v1256
        %v1658 = vunpack.c.h.b16 %v1256
        %v1659 = vunpack.c.l.b16 %v1257
        %v1660 = vunpack.c.h.b16 %v1257
        %v1661 = vunpack.c.l.b16 %v1258
        %v1662 = vunpack.c.h.b16 %v1258
        %v1663 = vunpack.c.l.b16 %v1259
        %v1664 = vunpack.c.h.b16 %v1259
        %v1665 = vunpack.c.l.b16 %v1260
        %v1666 = vunpack.c.h.b16 %v1260
        %v1667 = vpack.c.b16 %v1415, %v1411
        %v1668 = vpack.c.b16 %v1416, %v1412
        %v1669 = vpack.c.b16 %v1417, %v1413
        %v1670 = vpack.c.b16 %v1418, %v1414
        %v1671 = vpack.c.b16 %v1423, %v1419
        %v1672 = vpack.c.b16 %v1424, %v1420
        %v1673 = vpack.c.b16 %v1425, %v1421
        %v1674 = vpack.c.b16 %v1426, %v1422
        %v1675 = vpack.c.b16 %v1431, %v1427
        %v1676 = vpack.c.b16 %v1432, %v1428
        %v1677 = vpack.c.b16 %v1433, %v1429
        %v1678 = vpack.c.b16 %v1434, %v1430
        %v1679 = vpack.c.b16 %v1439, %v1435
        %v1680 = vpack.c.b16 %v1440, %v1436
        %v1681 = vpack.c.b16 %v1441, %v1437
        %v1682 = vpack.c.b16 %v1442, %v1438
        %v1683 = vpack.c.b16 %v1447, %v1443
        %v1684 = vpack.c.b16 %v1448, %v1444
        %v1685 = vpack.c.b16 %v1449, %v1445
        %v1686 = vpack.c.b16 %v1450, %v1446
        %v1687 = vpack.c.b16 %v1455, %v1451
        %v1688 = vpack.c.b16 %v1456, %v1452
        %v1689 = vpack.c.b16 %v1457, %v1453
        %v1690 = vpack.c.b16 %v1458, %v1454
        %v1691 = vpack.c.b16 %v1463, %v1459
        %v1692 = vpack.c.b16 %v1464, %v1460
        %v1693 = vpack.c.b16 %v1465, %v1461
        %v1694 = vpack.c.b16 %v1466, %v1462
        %v1695 = vpack.c.b16 %v1471, %v1467
        %v1696 = vpack.c.b16 %v1472, %v1468
        %v1697 = vpack.c.b16 %v1473, %v1469
        %v1698 = vpack.c.b16 %v1474, %v1470
        %v1699 = vpack.c.b16 %v1479, %v1475
        %v1700 = vpack.c.b16 %v1480, %v1476
        %v1701 = vpack.c.b16 %v1481, %v1477
        %v1702 = vpack.c.b16 %v1482, %v1478
        %v1703 = vpack.c.b16 %v1487, %v1483
        %v1704 = vpack.c.b16 %v1488, %v1484
        %v1705 = vpack.c.b16 %v1489, %v1485
        %v1706 = vpack.c.b16 %v1490, %v1486
        %v1707 = vpack.c.b16 %v1495, %v1491
        %v1708 = vpack.c.b16 %v1496, %v1492
        %v1709 = vpack.c.b16 %v1497, %v1493
        %v1710 = vpack.c.b16 %v1498, %v1494
        %v1711 = vpack.c.b16 %v1503, %v1499
        %v1712 = vpack.c.b16 %v1504, %v1500
        %v1713 = vpack.c.b16 %v1505, %v1501
        %v1714 = vpack.c.b16 %v1506, %v1502
        %v1715 = vpack.c.b16 %v1511, %v1507
        %v1716 = vpack.c.b16 %v1512, %v1508
        %v1717 = vpack.c.b16 %v1513, %v1509
        %v1718 = vpack.c.b16 %v1514, %v1510
        %v1719 = vpack.c.b16 %v1519, %v1515
        %v1720 = vpack.c.b16 %v1520, %v1516
        %v1721 = vpack.c.b16 %v1521, %v1517
        %v1722 = vpack.c.b16 %v1522, %v1518
        %v1723 = vpack.c.b16 %v1527, %v1523
        %v1724 = vpack.c.b16 %v1528, %v1524
        %v1725 = vpack.c.b16 %v1529, %v1525
        %v1726 = vpack.c.b16 %v1530, %v1526
        %v1727 = vpack.c.b16 %v1535, %v1531
        %v1728 = vpack.c.b16 %v1536, %v1532
        %v1729 = vpack.c.b16 %v1537, %v1533
        %v1730 = vpack.c.b16 %v1538, %v1534
        %v1731 = vpack.c.b16 %v1543, %v1539
        %v1732 = vpack.c.b16 %v1544, %v1540
        %v1733 = vpack.c.b16 %v1545, %v1541
        %v1734 = vpack.c.b16 %v1546, %v1542
        %v1735 = vpack.c.b16 %v1551, %v1547
        %v1736 = vpack.c.b16 %v1552, %v1548
        %v1737 = vpack.c.b16 %v1553, %v1549
        %v1738 = vpack.c.b16 %v1554, %v1550
        %v1739 = vpack.c.b16 %v1559, %v1555
        %v1740 = vpack.c.b16 %v1560, %v1556
        %v1741 = vpack.c.b16 %v1561, %v1557
        %v1742 = vpack.c.b16 %v1562, %v1558
        %v1743 = vpack.c.b16 %v1567, %v1563
        %v1744 = vpack.c.b16 %v1568, %v1564
        %v1745 = vpack.c.b16 %v1569, %v1565
        %v1746 = vpack.c.b16 %v1570, %v1566
        %v1747 = vpack.c.b16 %v1575, %v1571
        %v1748 = vpack.c.b16 %v1576, %v1572
        %v1749 = vpack.c.b16 %v1577, %v1573
        %v1750 = vpack.c.b16 %v1578, %v1574
        %v1751 = vpack.c.b16 %v1583, %v1579
        %v1752 = vpack.c.b16 %v1584, %v1580
        %v1753 = vpack.c.b16 %v1585, %v1581
        %v1754 = vpack.c.b16 %v1586, %v1582
        %v1755 = vpack.c.b16 %v1591, %v1587
        %v1756 = vpack.c.b16 %v1592, %v1588
        %v1757 = vpack.c.b16 %v1593, %v1589
        %v1758 = vpack.c.b16 %v1594, %v1590
        %v1759 = vpack.c.b16 %v1599, %v1595
        %v1760 = vpack.c.b16 %v1600, %v1596
        %v1761 = vpack.c.b16 %v1601, %v1597
        %v1762 = vpack.c.b16 %v1602, %v1598
        %v1763 = vpack.c.b16 %v1607, %v1603
        %v1764 = vpack.c.b16 %v1608, %v1604
        %v1765 = vpack.c.b16 %v1609, %v1605
        %v1766 = vpack.c.b16 %v1610, %v1606
        %v1767 = vpack.c.b16 %v1615, %v1611
        %v1768 = vpack.c.b16 %v1616, %v1612
        %v1769 = vpack.c.b16 %v1617, %v1613
        %v1770 = vpack.c.b16 %v1618, %v1614
        %v1771 = vpack.c.b16 %v1623, %v1619
        %v1772 = vpack.c.b16 %v1624, %v1620
        %v1773 = vpack.c.b16 %v1625, %v1621
        %v1774 = vpack.c.b16 %v1626, %v1622
        %v1775 = vpack.c.b16 %v1631, %v1627
        %v1776 = vpack.c.b16 %v1632, %v1628
        %v1777 = vpack.c.b16 %v1633, %v1629
        %v1778 = vpack.c.b16 %v1634, %v1630
        %v1779 = vpack.c.b16 %v1639, %v1635
        %v1780 = vpack.c.b16 %v1640, %v1636
        %v1781 = vpack.c.b16 %v1641, %v1637
        %v1782 = vpack.c.b16 %v1642, %v1638
        %v1783 = vpack.c.b16 %v1647, %v1643
        %v1784 = vpack.c.b16 %v1648, %v1644
        %v1785 = vpack.c.b16 %v1649, %v1645
        %v1786 = vpack.c.b16 %v1650, %v1646
        %v1787 = vpack.c.b16 %v1655, %v1651
        %v1788 = vpack.c.b16 %v1656, %v1652
        %v1789 = vpack.c.b16 %v1657, %v1653
        %v1790 = vpack.c.b16 %v1658, %v1654
        %v1791 = vpack.c.b16 %v1663, %v1659
        %v1792 = vpack.c.b16 %v1664, %v1660
        %v1793 = vpack.c.b16 %v1665, %v1661
        %v1794 = vpack.c.b16 %v1666, %v1662
        %1923 = vmatprep.subr.bf16.mxu0 %v1696
        %1924 = vmatpush1.bf16.msra.mxu0 %v1695
        %1925 = vmatprep.subr.bf16.mxu0 %v1692
        %1926 = vmatpush1.bf16.msra.mxu0 %v1691
        %1927 = vmatprep.subr.bf16.mxu0 %v1688
        %1928 = vmatpush1.bf16.msra.mxu0 %v1687
        %1929 = vmatprep.subr.bf16.mxu0 %v1684
        %1930 = vmatpush1.bf16.msra.mxu0 %v1683
        %1931 = vmatprep.subr.bf16.mxu0 %v1680
        %1932 = vmatpush1.bf16.msra.mxu0 %v1679
        %1933 = vmatprep.subr.bf16.mxu0 %v1676
        %1934 = vmatpush1.bf16.msra.mxu0 %v1675
        %1935 = vmatprep.subr.bf16.mxu0 %v1672
        %1936 = vmatpush1.bf16.msra.mxu0 %v1671
        %1937 = vmatprep.subr.bf16.mxu0 %v1668
        %1938 = vmatpush1.bf16.msra.mxu0 %v1667
        %1939 = vmatprep.subr.bf16.mxu0 %v1728
        %1940 = vmatpush2.bf16.msra.mxu0 %v1727
        %1941 = vmatprep.subr.bf16.mxu0 %v1724
        %1942 = vmatpush2.bf16.msra.mxu0 %v1723
        %1943 = vmatprep.subr.bf16.mxu0 %v1720
        %1944 = vmatpush2.bf16.msra.mxu0 %v1719
        %1945 = vmatprep.subr.bf16.mxu0 %v1716
        %1946 = vmatpush2.bf16.msra.mxu0 %v1715
        %1947 = vmatprep.subr.bf16.mxu0 %v1712
        %1948 = vmatpush2.bf16.msra.mxu0 %v1711
        %1949 = vmatprep.subr.bf16.mxu0 %v1708
        %1950 = vmatpush2.bf16.msra.mxu0 %v1707
        %1951 = vmatprep.subr.bf16.mxu0 %v1704
        %1952 = vmatpush2.bf16.msra.mxu0 %v1703
        %1953 = vmatprep.subr.bf16.mxu0 %v1700
        %1954 = vmatpush2.bf16.msra.mxu0 %v1699
        %1955 = vmatprep.mubr.bf16.mxu0 %v1130
        %1956 = vmatmul.mubr.bf16.gmra.mxu0 %v1129
        %v1957 = vpop.f32.mrf.mxu0
        %v1958 = vadd.f32 %v1266, %v1957
        %v1959 = vpop.f32.mrf.mxu0
        %v1960 = vadd.f32 %v1270, %v1959
        %v1961 = vpop.f32.mrf.mxu0
        %v1962 = vpop.f32.mrf.mxu0
        %1963 = vdwg.mxu0
        %1964 = vmatprep.subr.bf16.mxu0 %v1760
        %1965 = vmatpush1.bf16.msra.mxu0 %v1759
        %1966 = vmatprep.subr.bf16.mxu0 %v1756
        %1967 = vmatpush1.bf16.msra.mxu0 %v1755
        %1968 = vmatprep.subr.bf16.mxu0 %v1752
        %1969 = vmatpush1.bf16.msra.mxu0 %v1751
        %1970 = vmatprep.subr.bf16.mxu0 %v1748
        %1971 = vmatpush1.bf16.msra.mxu0 %v1747
        %1972 = vmatprep.subr.bf16.mxu0 %v1744
        %1973 = vmatpush1.bf16.msra.mxu0 %v1743
        %1974 = vmatprep.subr.bf16.mxu0 %v1740
        %1975 = vmatpush1.bf16.msra.mxu0 %v1739
        %1976 = vmatprep.subr.bf16.mxu0 %v1736
        %1977 = vmatpush1.bf16.msra.mxu0 %v1735
        %1978 = vmatprep.subr.bf16.mxu0 %v1732
        %1979 = vmatpush1.bf16.msra.mxu0 %v1731
        %1980 = vmatprep.subr.bf16.mxu0 %v1792
        %1981 = vmatpush2.bf16.msra.mxu0 %v1791
        %1982 = vmatprep.subr.bf16.mxu0 %v1788
        %1983 = vmatpush2.bf16.msra.mxu0 %v1787
        %1984 = vmatprep.subr.bf16.mxu0 %v1784
        %1985 = vmatpush2.bf16.msra.mxu0 %v1783
        %1986 = vmatprep.subr.bf16.mxu0 %v1780
        %1987 = vmatpush2.bf16.msra.mxu0 %v1779
        %1988 = vmatprep.subr.bf16.mxu0 %v1776
        %1989 = vmatpush2.bf16.msra.mxu0 %v1775
        %1990 = vmatprep.subr.bf16.mxu0 %v1772
        %1991 = vmatpush2.bf16.msra.mxu0 %v1771
        %1992 = vmatprep.subr.bf16.mxu0 %v1768
        %1993 = vmatpush2.bf16.msra.mxu0 %v1767
        %1994 = vmatprep.subr.bf16.mxu0 %v1764
        %1995 = vmatpush2.bf16.msra.mxu0 %v1763
        %1996 = vmatprep.mubr.bf16.mxu0 %v1132
        %1997 = vmatmul.mubr.bf16.gmra.mxu0 %v1131
        %v1998 = vpop.f32.mrf.mxu0
        %v1999 = vadd.f32 %v1958, %v1998
        %v2000 = vpop.f32.mrf.mxu0
        %v2001 = vadd.f32 %v1960, %v2000
        %v2002 = vpop.f32.mrf.mxu0
        %v2003 = vpop.f32.mrf.mxu0
        %2004 = vdwg.mxu0
        %2005 = vmatprep.subr.bf16.mxu0 %v1698
        %2006 = vmatpush1.bf16.msra.mxu0 %v1697
        %2007 = vmatprep.subr.bf16.mxu0 %v1694
        %2008 = vmatpush1.bf16.msra.mxu0 %v1693
        %2009 = vmatprep.subr.bf16.mxu0 %v1690
        %2010 = vmatpush1.bf16.msra.mxu0 %v1689
        %2011 = vmatprep.subr.bf16.mxu0 %v1686
        %2012 = vmatpush1.bf16.msra.mxu0 %v1685
        %2013 = vmatprep.subr.bf16.mxu0 %v1682
        %2014 = vmatpush1.bf16.msra.mxu0 %v1681
        %2015 = vmatprep.subr.bf16.mxu0 %v1678
        %2016 = vmatpush1.bf16.msra.mxu0 %v1677
        %2017 = vmatprep.subr.bf16.mxu0 %v1674
        %2018 = vmatpush1.bf16.msra.mxu0 %v1673
        %2019 = vmatprep.subr.bf16.mxu0 %v1670
        %2020 = vmatpush1.bf16.msra.mxu0 %v1669
        %2021 = vmatprep.subr.bf16.mxu0 %v1730
        %2022 = vmatpush2.bf16.msra.mxu0 %v1729
        %2023 = vmatprep.subr.bf16.mxu0 %v1726
        %2024 = vmatpush2.bf16.msra.mxu0 %v1725
        %2025 = vmatprep.subr.bf16.mxu0 %v1722
        %2026 = vmatpush2.bf16.msra.mxu0 %v1721
        %2027 = vmatprep.subr.bf16.mxu0 %v1718
        %2028 = vmatpush2.bf16.msra.mxu0 %v1717
        %2029 = vmatprep.subr.bf16.mxu0 %v1714
        %2030 = vmatpush2.bf16.msra.mxu0 %v1713
        %2031 = vmatprep.subr.bf16.mxu0 %v1710
        %2032 = vmatpush2.bf16.msra.mxu0 %v1709
        %2033 = vmatprep.subr.bf16.mxu0 %v1706
        %2034 = vmatpush2.bf16.msra.mxu0 %v1705
        %2035 = vmatprep.subr.bf16.mxu0 %v1702
        %2036 = vmatpush2.bf16.msra.mxu0 %v1701
        %2037 = vmatprep.mubr.bf16.mxu0 %v1130
        %2038 = vmatmul.mubr.bf16.gmra.mxu0 %v1129
        %v2039 = vpop.f32.mrf.mxu0
        %v2040 = vadd.f32 %v1274, %v2039
        %v2041 = vpop.f32.mrf.mxu0
        %v2042 = vadd.f32 %v1278, %v2041
        %v2043 = vpop.f32.mrf.mxu0
        %v2044 = vpop.f32.mrf.mxu0
        %2045 = vdwg.mxu0
        %2046 = vmatprep.subr.bf16.mxu0 %v1762
        %2047 = vmatpush1.bf16.msra.mxu0 %v1761
        %2048 = vmatprep.subr.bf16.mxu0 %v1758
        %2049 = vmatpush1.bf16.msra.mxu0 %v1757
        %2050 = vmatprep.subr.bf16.mxu0 %v1754
        %2051 = vmatpush1.bf16.msra.mxu0 %v1753
        %2052 = vmatprep.subr.bf16.mxu0 %v1750
        %2053 = vmatpush1.bf16.msra.mxu0 %v1749
        %2054 = vmatprep.subr.bf16.mxu0 %v1746
        %2055 = vmatpush1.bf16.msra.mxu0 %v1745
        %2056 = vmatprep.subr.bf16.mxu0 %v1742
        %2057 = vmatpush1.bf16.msra.mxu0 %v1741
        %2058 = vmatprep.subr.bf16.mxu0 %v1738
        %2059 = vmatpush1.bf16.msra.mxu0 %v1737
        %2060 = vmatprep.subr.bf16.mxu0 %v1734
        %2061 = vmatpush1.bf16.msra.mxu0 %v1733
        %2062 = vmatprep.subr.bf16.mxu0 %v1794
        %2063 = vmatpush2.bf16.msra.mxu0 %v1793
        %2064 = vmatprep.subr.bf16.mxu0 %v1790
        %2065 = vmatpush2.bf16.msra.mxu0 %v1789
        %2066 = vmatprep.subr.bf16.mxu0 %v1786
        %2067 = vmatpush2.bf16.msra.mxu0 %v1785
        %2068 = vmatprep.subr.bf16.mxu0 %v1782
        %2069 = vmatpush2.bf16.msra.mxu0 %v1781
        %2070 = vmatprep.subr.bf16.mxu0 %v1778
        %2071 = vmatpush2.bf16.msra.mxu0 %v1777
        %2072 = vmatprep.subr.bf16.mxu0 %v1774
        %2073 = vmatpush2.bf16.msra.mxu0 %v1773
        %2074 = vmatprep.subr.bf16.mxu0 %v1770
        %2075 = vmatpush2.bf16.msra.mxu0 %v1769
        %2076 = vmatprep.subr.bf16.mxu0 %v1766
        %2077 = vmatpush2.bf16.msra.mxu0 %v1765
        %2078 = vmatprep.mubr.bf16.mxu0 %v1132
        %2079 = vmatmul.mubr.bf16.gmra.mxu0 %v1131
        %v2080 = vpop.f32.mrf.mxu0
        %v2081 = vadd.f32 %v2040, %v2080
        %v2082 = vpop.f32.mrf.mxu0
        %v2083 = vadd.f32 %v2042, %v2082
        %v2084 = vpop.f32.mrf.mxu0
        %v2085 = vpop.f32.mrf.mxu0
        %2086 = vdwg.mxu0
        %v2087 = vmul.f32 %v1999, 0.5
        %v2088 = vmul.f32 %v2001, 0.5
        %v2089 = vmul.f32 %v2081, 0.5
        %v2090 = vmul.f32 %v2083, 0.5
        %v2091 = vmul.f32 %v1999, %v1999
        %v2092 = vmul.f32 %v2001, %v2001
        %v2093 = vmul.f32 %v2081, %v2081
        %v2094 = vmul.f32 %v2083, %v2083
        %v2095 = vmul.f32 %v2091, %v1999
        %v2096 = vmul.f32 %v2092, %v2001
        %v2097 = vmul.f32 %v2093, %v2081
        %v2098 = vmul.f32 %v2094, %v2083
        %v2099 = vmul.f32 %v2095, 0.044715
        %v2100 = vmul.f32 %v2096, 0.044715
        %v2101 = vmul.f32 %v2097, 0.044715
        %v2102 = vmul.f32 %v2098, 0.044715
        %v2103 = vadd.f32 %v1999, %v2099
        %v2104 = vadd.f32 %v2001, %v2100
        %v2105 = vadd.f32 %v2081, %v2101
        %v2106 = vadd.f32 %v2083, %v2102
        %v2107 = vmul.f32 %v2103, 0.7978846
        %v2108 = vmul.f32 %v2104, 0.7978846
        %v2109 = vmul.f32 %v2105, 0.7978846
        %v2110 = vmul.f32 %v2106, 0.7978846
        %v2111 = vtanh.pop %v2107
        %v2112 = vtanh.pop %v2108
        %v2113 = vtanh.pop %v2109
        %v2114 = vtanh.pop %v2110
        %v2115 = vadd.f32 %v2111, 1.0
        %v2116 = vadd.f32 %v2112, 1.0
        %v2117 = vadd.f32 %v2113, 1.0
        %v2118 = vadd.f32 %v2114, 1.0
        %v2119 = vmul.f32 %v2087, %v2115
        %v2120 = vmul.f32 %v2088, %v2116
        %v2121 = vmul.f32 %v2089, %v2117
        %v2122 = vmul.f32 %v2090, %v2118
        %v2123 = vpack.c.bf16 %v2119, %v2119
        %v2124 = vpack.c.bf16 %v2120, %v2120
        %v2125 = vpack.c.bf16 %v2121, %v2121
        %v2126 = vpack.c.bf16 %v2122, %v2122
        %v2127 = vld [vmem:[%s681] sm:$0xff]
        %v2128 = vld [vmem:[%s681 + $0x8] sm:$0xff]
        %v2129 = vld [vmem:[%s681 + $0x10] sm:$0xff]
        %v2130 = vld [vmem:[%s681 + $0x18] sm:$0xff]
        %v2131 = vld [vmem:[%s681 + $0x20] sm:$0xff]
        %v2132 = vld [vmem:[%s681 + $0x28] sm:$0xff]
        %v2133 = vld [vmem:[%s681 + $0x30] sm:$0xff]
        %v2134 = vld [vmem:[%s681 + $0x38] sm:$0xff]
        %v2135 = vld [vmem:[%s681 + $0x40] sm:$0xff]
        %v2136 = vld [vmem:[%s681 + $0x48] sm:$0xff]
        %v2137 = vld [vmem:[%s681 + $0x50] sm:$0xff]
        %v2138 = vld [vmem:[%s681 + $0x58] sm:$0xff]
        %v2139 = vld [vmem:[%s681 + $0x60] sm:$0xff]
        %v2140 = vld [vmem:[%s681 + $0x68] sm:$0xff]
        %v2141 = vld [vmem:[%s681 + $0x70] sm:$0xff]
        %v2142 = vld [vmem:[%s681 + $0x78] sm:$0xff]
        %v2143 = vld [vmem:[%s681 + $0x80] sm:$0xff]
        %v2144 = vld [vmem:[%s681 + $0x88] sm:$0xff]
        %v2145 = vld [vmem:[%s681 + $0x90] sm:$0xff]
        %v2146 = vld [vmem:[%s681 + $0x98] sm:$0xff]
        %v2147 = vld [vmem:[%s681 + $0xa0] sm:$0xff]
        %v2148 = vld [vmem:[%s681 + $0xa8] sm:$0xff]
        %v2149 = vld [vmem:[%s681 + $0xb0] sm:$0xff]
        %v2150 = vld [vmem:[%s681 + $0xb8] sm:$0xff]
        %v2151 = vld [vmem:[%s681 + $0xc0] sm:$0xff]
        %v2152 = vld [vmem:[%s681 + $0xc8] sm:$0xff]
        %v2153 = vld [vmem:[%s681 + $0xd0] sm:$0xff]
        %v2154 = vld [vmem:[%s681 + $0xd8] sm:$0xff]
        %v2155 = vld [vmem:[%s681 + $0xe0] sm:$0xff]
        %v2156 = vld [vmem:[%s681 + $0xe8] sm:$0xff]
        %v2157 = vld [vmem:[%s681 + $0xf0] sm:$0xff]
        %v2158 = vld [vmem:[%s681 + $0xf8] sm:$0xff]
        %v2159 = vld [vmem:[%s681 + $0x100] sm:$0xff]
        %v2160 = vld [vmem:[%s681 + $0x108] sm:$0xff]
        %v2161 = vld [vmem:[%s681 + $0x110] sm:$0xff]
        %v2162 = vld [vmem:[%s681 + $0x118] sm:$0xff]
        %v2163 = vld [vmem:[%s681 + $0x120] sm:$0xff]
        %v2164 = vld [vmem:[%s681 + $0x128] sm:$0xff]
        %v2165 = vld [vmem:[%s681 + $0x130] sm:$0xff]
        %v2166 = vld [vmem:[%s681 + $0x138] sm:$0xff]
        %v2167 = vld [vmem:[%s681 + $0x140] sm:$0xff]
        %v2168 = vld [vmem:[%s681 + $0x148] sm:$0xff]
        %v2169 = vld [vmem:[%s681 + $0x150] sm:$0xff]
        %v2170 = vld [vmem:[%s681 + $0x158] sm:$0xff]
        %v2171 = vld [vmem:[%s681 + $0x160] sm:$0xff]
        %v2172 = vld [vmem:[%s681 + $0x168] sm:$0xff]
        %v2173 = vld [vmem:[%s681 + $0x170] sm:$0xff]
        %v2174 = vld [vmem:[%s681 + $0x178] sm:$0xff]
        %v2175 = vld [vmem:[%s681 + $0x180] sm:$0xff]
        %v2176 = vld [vmem:[%s681 + $0x188] sm:$0xff]
        %v2177 = vld [vmem:[%s681 + $0x190] sm:$0xff]
        %v2178 = vld [vmem:[%s681 + $0x198] sm:$0xff]
        %v2179 = vld [vmem:[%s681 + $0x1a0] sm:$0xff]
        %v2180 = vld [vmem:[%s681 + $0x1a8] sm:$0xff]
        %v2181 = vld [vmem:[%s681 + $0x1b0] sm:$0xff]
        %v2182 = vld [vmem:[%s681 + $0x1b8] sm:$0xff]
        %v2183 = vld [vmem:[%s681 + $0x1c0] sm:$0xff]
        %v2184 = vld [vmem:[%s681 + $0x1c8] sm:$0xff]
        %v2185 = vld [vmem:[%s681 + $0x1d0] sm:$0xff]
        %v2186 = vld [vmem:[%s681 + $0x1d8] sm:$0xff]
        %v2187 = vld [vmem:[%s681 + $0x1e0] sm:$0xff]
        %v2188 = vld [vmem:[%s681 + $0x1e8] sm:$0xff]
        %v2189 = vld [vmem:[%s681 + $0x1f0] sm:$0xff]
        %v2190 = vld [vmem:[%s681 + $0x1f8] sm:$0xff]
        %v2191 = vld [vmem:[%s681 + $0x200] sm:$0xff]
        %v2192 = vld [vmem:[%s681 + $0x208] sm:$0xff]
        %v2193 = vld [vmem:[%s681 + $0x210] sm:$0xff]
        %v2194 = vld [vmem:[%s681 + $0x218] sm:$0xff]
        %v2195 = vld [vmem:[%s681 + $0x220] sm:$0xff]
        %v2196 = vld [vmem:[%s681 + $0x228] sm:$0xff]
        %v2197 = vld [vmem:[%s681 + $0x230] sm:$0xff]
        %v2198 = vld [vmem:[%s681 + $0x238] sm:$0xff]
        %v2199 = vld [vmem:[%s681 + $0x240] sm:$0xff]
        %v2200 = vld [vmem:[%s681 + $0x248] sm:$0xff]
        %v2201 = vld [vmem:[%s681 + $0x250] sm:$0xff]
        %v2202 = vld [vmem:[%s681 + $0x258] sm:$0xff]
        %v2203 = vld [vmem:[%s681 + $0x260] sm:$0xff]
        %v2204 = vld [vmem:[%s681 + $0x268] sm:$0xff]
        %v2205 = vld [vmem:[%s681 + $0x270] sm:$0xff]
        %v2206 = vld [vmem:[%s681 + $0x278] sm:$0xff]
        %v2207 = vld [vmem:[%s681 + $0x280] sm:$0xff]
        %v2208 = vld [vmem:[%s681 + $0x288] sm:$0xff]
        %v2209 = vld [vmem:[%s681 + $0x290] sm:$0xff]
        %v2210 = vld [vmem:[%s681 + $0x298] sm:$0xff]
        %v2211 = vld [vmem:[%s681 + $0x2a0] sm:$0xff]
        %v2212 = vld [vmem:[%s681 + $0x2a8] sm:$0xff]
        %v2213 = vld [vmem:[%s681 + $0x2b0] sm:$0xff]
        %v2214 = vld [vmem:[%s681 + $0x2b8] sm:$0xff]
        %v2215 = vld [vmem:[%s681 + $0x2c0] sm:$0xff]
        %v2216 = vld [vmem:[%s681 + $0x2c8] sm:$0xff]
        %v2217 = vld [vmem:[%s681 + $0x2d0] sm:$0xff]
        %v2218 = vld [vmem:[%s681 + $0x2d8] sm:$0xff]
        %v2219 = vld [vmem:[%s681 + $0x2e0] sm:$0xff]
        %v2220 = vld [vmem:[%s681 + $0x2e8] sm:$0xff]
        %v2221 = vld [vmem:[%s681 + $0x2f0] sm:$0xff]
        %v2222 = vld [vmem:[%s681 + $0x2f8] sm:$0xff]
        %v2223 = vld [vmem:[%s681 + $0x300] sm:$0xff]
        %v2224 = vld [vmem:[%s681 + $0x308] sm:$0xff]
        %v2225 = vld [vmem:[%s681 + $0x310] sm:$0xff]
        %v2226 = vld [vmem:[%s681 + $0x318] sm:$0xff]
        %v2227 = vld [vmem:[%s681 + $0x320] sm:$0xff]
        %v2228 = vld [vmem:[%s681 + $0x328] sm:$0xff]
        %v2229 = vld [vmem:[%s681 + $0x330] sm:$0xff]
        %v2230 = vld [vmem:[%s681 + $0x338] sm:$0xff]
        %v2231 = vld [vmem:[%s681 + $0x340] sm:$0xff]
        %v2232 = vld [vmem:[%s681 + $0x348] sm:$0xff]
        %v2233 = vld [vmem:[%s681 + $0x350] sm:$0xff]
        %v2234 = vld [vmem:[%s681 + $0x358] sm:$0xff]
        %v2235 = vld [vmem:[%s681 + $0x360] sm:$0xff]
        %v2236 = vld [vmem:[%s681 + $0x368] sm:$0xff]
        %v2237 = vld [vmem:[%s681 + $0x370] sm:$0xff]
        %v2238 = vld [vmem:[%s681 + $0x378] sm:$0xff]
        %v2239 = vld [vmem:[%s681 + $0x380] sm:$0xff]
        %v2240 = vld [vmem:[%s681 + $0x388] sm:$0xff]
        %v2241 = vld [vmem:[%s681 + $0x390] sm:$0xff]
        %v2242 = vld [vmem:[%s681 + $0x398] sm:$0xff]
        %v2243 = vld [vmem:[%s681 + $0x3a0] sm:$0xff]
        %v2244 = vld [vmem:[%s681 + $0x3a8] sm:$0xff]
        %v2245 = vld [vmem:[%s681 + $0x3b0] sm:$0xff]
        %v2246 = vld [vmem:[%s681 + $0x3b8] sm:$0xff]
        %v2247 = vld [vmem:[%s681 + $0x3c0] sm:$0xff]
        %v2248 = vld [vmem:[%s681 + $0x3c8] sm:$0xff]
        %v2249 = vld [vmem:[%s681 + $0x3d0] sm:$0xff]
        %v2250 = vld [vmem:[%s681 + $0x3d8] sm:$0xff]
        %v2251 = vld [vmem:[%s681 + $0x3e0] sm:$0xff]
        %v2252 = vld [vmem:[%s681 + $0x3e8] sm:$0xff]
        %v2253 = vld [vmem:[%s681 + $0x3f0] sm:$0xff]
        %v2254 = vld [vmem:[%s681 + $0x3f8] sm:$0xff]
        %v2255 = vld [vmem:[%s690] sm:$0xf]
        %v2257 = vlaneseq
        %v2258 = vshrl.u32 %v2257, 7
        %v2259 = vsub.s32 0, %v2258
        %v2260 = vrot.slane %v2255, %v2259
        %v2261 = vlaneseq
        %v2262 = vshrl.u32 %v2261, 7
        %v2263 = vsub.s32 1, %v2262
        %v2264 = vrot.slane %v2255, %v2263
        %v2265 = vlaneseq
        %v2266 = vshrl.u32 %v2265, 7
        %v2267 = vsub.s32 2, %v2266
        %v2268 = vrot.slane %v2255, %v2267
        %v2269 = vlaneseq
        %v2270 = vshrl.u32 %v2269, 7
        %v2271 = vsub.s32 3, %v2270
        %v2272 = vrot.slane %v2255, %v2271
        %v2405 = vunpack.c.l.b16 %v2127
        %v2406 = vunpack.c.h.b16 %v2127
        %v2407 = vunpack.c.l.b16 %v2128
        %v2408 = vunpack.c.h.b16 %v2128
        %v2409 = vunpack.c.l.b16 %v2129
        %v2410 = vunpack.c.h.b16 %v2129
        %v2411 = vunpack.c.l.b16 %v2130
        %v2412 = vunpack.c.h.b16 %v2130
        %v2413 = vunpack.c.l.b16 %v2131
        %v2414 = vunpack.c.h.b16 %v2131
        %v2415 = vunpack.c.l.b16 %v2132
        %v2416 = vunpack.c.h.b16 %v2132
        %v2417 = vunpack.c.l.b16 %v2133
        %v2418 = vunpack.c.h.b16 %v2133
        %v2419 = vunpack.c.l.b16 %v2134
        %v2420 = vunpack.c.h.b16 %v2134
        %v2421 = vunpack.c.l.b16 %v2135
        %v2422 = vunpack.c.h.b16 %v2135
        %v2423 = vunpack.c.l.b16 %v2136
        %v2424 = vunpack.c.h.b16 %v2136
        %v2425 = vunpack.c.l.b16 %v2137
        %v2426 = vunpack.c.h.b16 %v2137
        %v2427 = vunpack.c.l.b16 %v2138
        %v2428 = vunpack.c.h.b16 %v2138
        %v2429 = vunpack.c.l.b16 %v2139
        %v2430 = vunpack.c.h.b16 %v2139
        %v2431 = vunpack.c.l.b16 %v2140
        %v2432 = vunpack.c.h.b16 %v2140
        %v2433 = vunpack.c.l.b16 %v2141
        %v2434 = vunpack.c.h.b16 %v2141
        %v2435 = vunpack.c.l.b16 %v2142
        %v2436 = vunpack.c.h.b16 %v2142
        %v2437 = vunpack.c.l.b16 %v2143
        %v2438 = vunpack.c.h.b16 %v2143
        %v2439 = vunpack.c.l.b16 %v2144
        %v2440 = vunpack.c.h.b16 %v2144
        %v2441 = vunpack.c.l.b16 %v2145
        %v2442 = vunpack.c.h.b16 %v2145
        %v2443 = vunpack.c.l.b16 %v2146
        %v2444 = vunpack.c.h.b16 %v2146
        %v2445 = vunpack.c.l.b16 %v2147
        %v2446 = vunpack.c.h.b16 %v2147
        %v2447 = vunpack.c.l.b16 %v2148
        %v2448 = vunpack.c.h.b16 %v2148
        %v2449 = vunpack.c.l.b16 %v2149
        %v2450 = vunpack.c.h.b16 %v2149
        %v2451 = vunpack.c.l.b16 %v2150
        %v2452 = vunpack.c.h.b16 %v2150
        %v2453 = vunpack.c.l.b16 %v2151
        %v2454 = vunpack.c.h.b16 %v2151
        %v2455 = vunpack.c.l.b16 %v2152
        %v2456 = vunpack.c.h.b16 %v2152
        %v2457 = vunpack.c.l.b16 %v2153
        %v2458 = vunpack.c.h.b16 %v2153
        %v2459 = vunpack.c.l.b16 %v2154
        %v2460 = vunpack.c.h.b16 %v2154
        %v2461 = vunpack.c.l.b16 %v2155
        %v2462 = vunpack.c.h.b16 %v2155
        %v2463 = vunpack.c.l.b16 %v2156
        %v2464 = vunpack.c.h.b16 %v2156
        %v2465 = vunpack.c.l.b16 %v2157
        %v2466 = vunpack.c.h.b16 %v2157
        %v2467 = vunpack.c.l.b16 %v2158
        %v2468 = vunpack.c.h.b16 %v2158
        %v2469 = vunpack.c.l.b16 %v2159
        %v2470 = vunpack.c.h.b16 %v2159
        %v2471 = vunpack.c.l.b16 %v2160
        %v2472 = vunpack.c.h.b16 %v2160
        %v2473 = vunpack.c.l.b16 %v2161
        %v2474 = vunpack.c.h.b16 %v2161
        %v2475 = vunpack.c.l.b16 %v2162
        %v2476 = vunpack.c.h.b16 %v2162
        %v2477 = vunpack.c.l.b16 %v2163
        %v2478 = vunpack.c.h.b16 %v2163
        %v2479 = vunpack.c.l.b16 %v2164
        %v2480 = vunpack.c.h.b16 %v2164
        %v2481 = vunpack.c.l.b16 %v2165
        %v2482 = vunpack.c.h.b16 %v2165
        %v2483 = vunpack.c.l.b16 %v2166
        %v2484 = vunpack.c.h.b16 %v2166
        %v2485 = vunpack.c.l.b16 %v2167
        %v2486 = vunpack.c.h.b16 %v2167
        %v2487 = vunpack.c.l.b16 %v2168
        %v2488 = vunpack.c.h.b16 %v2168
        %v2489 = vunpack.c.l.b16 %v2169
        %v2490 = vunpack.c.h.b16 %v2169
        %v2491 = vunpack.c.l.b16 %v2170
        %v2492 = vunpack.c.h.b16 %v2170
        %v2493 = vunpack.c.l.b16 %v2171
        %v2494 = vunpack.c.h.b16 %v2171
        %v2495 = vunpack.c.l.b16 %v2172
        %v2496 = vunpack.c.h.b16 %v2172
        %v2497 = vunpack.c.l.b16 %v2173
        %v2498 = vunpack.c.h.b16 %v2173
        %v2499 = vunpack.c.l.b16 %v2174
        %v2500 = vunpack.c.h.b16 %v2174
        %v2501 = vunpack.c.l.b16 %v2175
        %v2502 = vunpack.c.h.b16 %v2175
        %v2503 = vunpack.c.l.b16 %v2176
        %v2504 = vunpack.c.h.b16 %v2176
        %v2505 = vunpack.c.l.b16 %v2177
        %v2506 = vunpack.c.h.b16 %v2177
        %v2507 = vunpack.c.l.b16 %v2178
        %v2508 = vunpack.c.h.b16 %v2178
        %v2509 = vunpack.c.l.b16 %v2179
        %v2510 = vunpack.c.h.b16 %v2179
        %v2511 = vunpack.c.l.b16 %v2180
        %v2512 = vunpack.c.h.b16 %v2180
        %v2513 = vunpack.c.l.b16 %v2181
        %v2514 = vunpack.c.h.b16 %v2181
        %v2515 = vunpack.c.l.b16 %v2182
        %v2516 = vunpack.c.h.b16 %v2182
        %v2517 = vunpack.c.l.b16 %v2183
        %v2518 = vunpack.c.h.b16 %v2183
        %v2519 = vunpack.c.l.b16 %v2184
        %v2520 = vunpack.c.h.b16 %v2184
        %v2521 = vunpack.c.l.b16 %v2185
        %v2522 = vunpack.c.h.b16 %v2185
        %v2523 = vunpack.c.l.b16 %v2186
        %v2524 = vunpack.c.h.b16 %v2186
        %v2525 = vunpack.c.l.b16 %v2187
        %v2526 = vunpack.c.h.b16 %v2187
        %v2527 = vunpack.c.l.b16 %v2188
        %v2528 = vunpack.c.h.b16 %v2188
        %v2529 = vunpack.c.l.b16 %v2189
        %v2530 = vunpack.c.h.b16 %v2189
        %v2531 = vunpack.c.l.b16 %v2190
        %v2532 = vunpack.c.h.b16 %v2190
        %v2533 = vunpack.c.l.b16 %v2191
        %v2534 = vunpack.c.h.b16 %v2191
        %v2535 = vunpack.c.l.b16 %v2192
        %v2536 = vunpack.c.h.b16 %v2192
        %v2537 = vunpack.c.l.b16 %v2193
        %v2538 = vunpack.c.h.b16 %v2193
        %v2539 = vunpack.c.l.b16 %v2194
        %v2540 = vunpack.c.h.b16 %v2194
        %v2541 = vunpack.c.l.b16 %v2195
        %v2542 = vunpack.c.h.b16 %v2195
        %v2543 = vunpack.c.l.b16 %v2196
        %v2544 = vunpack.c.h.b16 %v2196
        %v2545 = vunpack.c.l.b16 %v2197
        %v2546 = vunpack.c.h.b16 %v2197
        %v2547 = vunpack.c.l.b16 %v2198
        %v2548 = vunpack.c.h.b16 %v2198
        %v2549 = vunpack.c.l.b16 %v2199
        %v2550 = vunpack.c.h.b16 %v2199
        %v2551 = vunpack.c.l.b16 %v2200
        %v2552 = vunpack.c.h.b16 %v2200
        %v2553 = vunpack.c.l.b16 %v2201
        %v2554 = vunpack.c.h.b16 %v2201
        %v2555 = vunpack.c.l.b16 %v2202
        %v2556 = vunpack.c.h.b16 %v2202
        %v2557 = vunpack.c.l.b16 %v2203
        %v2558 = vunpack.c.h.b16 %v2203
        %v2559 = vunpack.c.l.b16 %v2204
        %v2560 = vunpack.c.h.b16 %v2204
        %v2561 = vunpack.c.l.b16 %v2205
        %v2562 = vunpack.c.h.b16 %v2205
        %v2563 = vunpack.c.l.b16 %v2206
        %v2564 = vunpack.c.h.b16 %v2206
        %v2565 = vunpack.c.l.b16 %v2207
        %v2566 = vunpack.c.h.b16 %v2207
        %v2567 = vunpack.c.l.b16 %v2208
        %v2568 = vunpack.c.h.b16 %v2208
        %v2569 = vunpack.c.l.b16 %v2209
        %v2570 = vunpack.c.h.b16 %v2209
        %v2571 = vunpack.c.l.b16 %v2210
        %v2572 = vunpack.c.h.b16 %v2210
        %v2573 = vunpack.c.l.b16 %v2211
        %v2574 = vunpack.c.h.b16 %v2211
        %v2575 = vunpack.c.l.b16 %v2212
        %v2576 = vunpack.c.h.b16 %v2212
        %v2577 = vunpack.c.l.b16 %v2213
        %v2578 = vunpack.c.h.b16 %v2213
        %v2579 = vunpack.c.l.b16 %v2214
        %v2580 = vunpack.c.h.b16 %v2214
        %v2581 = vunpack.c.l.b16 %v2215
        %v2582 = vunpack.c.h.b16 %v2215
        %v2583 = vunpack.c.l.b16 %v2216
        %v2584 = vunpack.c.h.b16 %v2216
        %v2585 = vunpack.c.l.b16 %v2217
        %v2586 = vunpack.c.h.b16 %v2217
        %v2587 = vunpack.c.l.b16 %v2218
        %v2588 = vunpack.c.h.b16 %v2218
        %v2589 = vunpack.c.l.b16 %v2219
        %v2590 = vunpack.c.h.b16 %v2219
        %v2591 = vunpack.c.l.b16 %v2220
        %v2592 = vunpack.c.h.b16 %v2220
        %v2593 = vunpack.c.l.b16 %v2221
        %v2594 = vunpack.c.h.b16 %v2221
        %v2595 = vunpack.c.l.b16 %v2222
        %v2596 = vunpack.c.h.b16 %v2222
        %v2597 = vunpack.c.l.b16 %v2223
        %v2598 = vunpack.c.h.b16 %v2223
        %v2599 = vunpack.c.l.b16 %v2224
        %v2600 = vunpack.c.h.b16 %v2224
        %v2601 = vunpack.c.l.b16 %v2225
        %v2602 = vunpack.c.h.b16 %v2225
        %v2603 = vunpack.c.l.b16 %v2226
        %v2604 = vunpack.c.h.b16 %v2226
        %v2605 = vunpack.c.l.b16 %v2227
        %v2606 = vunpack.c.h.b16 %v2227
        %v2607 = vunpack.c.l.b16 %v2228
        %v2608 = vunpack.c.h.b16 %v2228
        %v2609 = vunpack.c.l.b16 %v2229
        %v2610 = vunpack.c.h.b16 %v2229
        %v2611 = vunpack.c.l.b16 %v2230
        %v2612 = vunpack.c.h.b16 %v2230
        %v2613 = vunpack.c.l.b16 %v2231
        %v2614 = vunpack.c.h.b16 %v2231
        %v2615 = vunpack.c.l.b16 %v2232
        %v2616 = vunpack.c.h.b16 %v2232
        %v2617 = vunpack.c.l.b16 %v2233
        %v2618 = vunpack.c.h.b16 %v2233
        %v2619 = vunpack.c.l.b16 %v2234
        %v2620 = vunpack.c.h.b16 %v2234
        %v2621 = vunpack.c.l.b16 %v2235
        %v2622 = vunpack.c.h.b16 %v2235
        %v2623 = vunpack.c.l.b16 %v2236
        %v2624 = vunpack.c.h.b16 %v2236
        %v2625 = vunpack.c.l.b16 %v2237
        %v2626 = vunpack.c.h.b16 %v2237
        %v2627 = vunpack.c.l.b16 %v2238
        %v2628 = vunpack.c.h.b16 %v2238
        %v2629 = vunpack.c.l.b16 %v2239
        %v2630 = vunpack.c.h.b16 %v2239
        %v2631 = vunpack.c.l.b16 %v2240
        %v2632 = vunpack.c.h.b16 %v2240
        %v2633 = vunpack.c.l.b16 %v2241
        %v2634 = vunpack.c.h.b16 %v2241
        %v2635 = vunpack.c.l.b16 %v2242
        %v2636 = vunpack.c.h.b16 %v2242
        %v2637 = vunpack.c.l.b16 %v2243
        %v2638 = vunpack.c.h.b16 %v2243
        %v2639 = vunpack.c.l.b16 %v2244
        %v2640 = vunpack.c.h.b16 %v2244
        %v2641 = vunpack.c.l.b16 %v2245
        %v2642 = vunpack.c.h.b16 %v2245
        %v2643 = vunpack.c.l.b16 %v2246
        %v2644 = vunpack.c.h.b16 %v2246
        %v2645 = vunpack.c.l.b16 %v2247
        %v2646 = vunpack.c.h.b16 %v2247
        %v2647 = vunpack.c.l.b16 %v2248
        %v2648 = vunpack.c.h.b16 %v2248
        %v2649 = vunpack.c.l.b16 %v2249
        %v2650 = vunpack.c.h.b16 %v2249
        %v2651 = vunpack.c.l.b16 %v2250
        %v2652 = vunpack.c.h.b16 %v2250
        %v2653 = vunpack.c.l.b16 %v2251
        %v2654 = vunpack.c.h.b16 %v2251
        %v2655 = vunpack.c.l.b16 %v2252
        %v2656 = vunpack.c.h.b16 %v2252
        %v2657 = vunpack.c.l.b16 %v2253
        %v2658 = vunpack.c.h.b16 %v2253
        %v2659 = vunpack.c.l.b16 %v2254
        %v2660 = vunpack.c.h.b16 %v2254
        %v2661 = vpack.c.b16 %v2409, %v2405
        %v2662 = vpack.c.b16 %v2410, %v2406
        %v2663 = vpack.c.b16 %v2411, %v2407
        %v2664 = vpack.c.b16 %v2412, %v2408
        %v2665 = vpack.c.b16 %v2417, %v2413
        %v2666 = vpack.c.b16 %v2418, %v2414
        %v2667 = vpack.c.b16 %v2419, %v2415
        %v2668 = vpack.c.b16 %v2420, %v2416
        %v2669 = vpack.c.b16 %v2425, %v2421
        %v2670 = vpack.c.b16 %v2426, %v2422
        %v2671 = vpack.c.b16 %v2427, %v2423
        %v2672 = vpack.c.b16 %v2428, %v2424
        %v2673 = vpack.c.b16 %v2433, %v2429
        %v2674 = vpack.c.b16 %v2434, %v2430
        %v2675 = vpack.c.b16 %v2435, %v2431
        %v2676 = vpack.c.b16 %v2436, %v2432
        %v2677 = vpack.c.b16 %v2441, %v2437
        %v2678 = vpack.c.b16 %v2442, %v2438
        %v2679 = vpack.c.b16 %v2443, %v2439
        %v2680 = vpack.c.b16 %v2444, %v2440
        %v2681 = vpack.c.b16 %v2449, %v2445
        %v2682 = vpack.c.b16 %v2450, %v2446
        %v2683 = vpack.c.b16 %v2451, %v2447
        %v2684 = vpack.c.b16 %v2452, %v2448
        %v2685 = vpack.c.b16 %v2457, %v2453
        %v2686 = vpack.c.b16 %v2458, %v2454
        %v2687 = vpack.c.b16 %v2459, %v2455
        %v2688 = vpack.c.b16 %v2460, %v2456
        %v2689 = vpack.c.b16 %v2465, %v2461
        %v2690 = vpack.c.b16 %v2466, %v2462
        %v2691 = vpack.c.b16 %v2467, %v2463
        %v2692 = vpack.c.b16 %v2468, %v2464
        %v2693 = vpack.c.b16 %v2473, %v2469
        %v2694 = vpack.c.b16 %v2474, %v2470
        %v2695 = vpack.c.b16 %v2475, %v2471
        %v2696 = vpack.c.b16 %v2476, %v2472
        %v2697 = vpack.c.b16 %v2481, %v2477
        %v2698 = vpack.c.b16 %v2482, %v2478
        %v2699 = vpack.c.b16 %v2483, %v2479
        %v2700 = vpack.c.b16 %v2484, %v2480
        %v2701 = vpack.c.b16 %v2489, %v2485
        %v2702 = vpack.c.b16 %v2490, %v2486
        %v2703 = vpack.c.b16 %v2491, %v2487
        %v2704 = vpack.c.b16 %v2492, %v2488
        %v2705 = vpack.c.b16 %v2497, %v2493
        %v2706 = vpack.c.b16 %v2498, %v2494
        %v2707 = vpack.c.b16 %v2499, %v2495
        %v2708 = vpack.c.b16 %v2500, %v2496
        %v2709 = vpack.c.b16 %v2505, %v2501
        %v2710 = vpack.c.b16 %v2506, %v2502
        %v2711 = vpack.c.b16 %v2507, %v2503
        %v2712 = vpack.c.b16 %v2508, %v2504
        %v2713 = vpack.c.b16 %v2513, %v2509
        %v2714 = vpack.c.b16 %v2514, %v2510
        %v2715 = vpack.c.b16 %v2515, %v2511
        %v2716 = vpack.c.b16 %v2516, %v2512
        %v2717 = vpack.c.b16 %v2521, %v2517
        %v2718 = vpack.c.b16 %v2522, %v2518
        %v2719 = vpack.c.b16 %v2523, %v2519
        %v2720 = vpack.c.b16 %v2524, %v2520
        %v2721 = vpack.c.b16 %v2529, %v2525
        %v2722 = vpack.c.b16 %v2530, %v2526
        %v2723 = vpack.c.b16 %v2531, %v2527
        %v2724 = vpack.c.b16 %v2532, %v2528
        %v2725 = vpack.c.b16 %v2537, %v2533
        %v2726 = vpack.c.b16 %v2538, %v2534
        %v2727 = vpack.c.b16 %v2539, %v2535
        %v2728 = vpack.c.b16 %v2540, %v2536
        %v2729 = vpack.c.b16 %v2545, %v2541
        %v2730 = vpack.c.b16 %v2546, %v2542
        %v2731 = vpack.c.b16 %v2547, %v2543
        %v2732 = vpack.c.b16 %v2548, %v2544
        %v2733 = vpack.c.b16 %v2553, %v2549
        %v2734 = vpack.c.b16 %v2554, %v2550
        %v2735 = vpack.c.b16 %v2555, %v2551
        %v2736 = vpack.c.b16 %v2556, %v2552
        %v2737 = vpack.c.b16 %v2561, %v2557
        %v2738 = vpack.c.b16 %v2562, %v2558
        %v2739 = vpack.c.b16 %v2563, %v2559
        %v2740 = vpack.c.b16 %v2564, %v2560
        %v2741 = vpack.c.b16 %v2569, %v2565
        %v2742 = vpack.c.b16 %v2570, %v2566
        %v2743 = vpack.c.b16 %v2571, %v2567
        %v2744 = vpack.c.b16 %v2572, %v2568
        %v2745 = vpack.c.b16 %v2577, %v2573
        %v2746 = vpack.c.b16 %v2578, %v2574
        %v2747 = vpack.c.b16 %v2579, %v2575
        %v2748 = vpack.c.b16 %v2580, %v2576
        %v2749 = vpack.c.b16 %v2585, %v2581
        %v2750 = vpack.c.b16 %v2586, %v2582
        %v2751 = vpack.c.b16 %v2587, %v2583
        %v2752 = vpack.c.b16 %v2588, %v2584
        %v2753 = vpack.c.b16 %v2593, %v2589
        %v2754 = vpack.c.b16 %v2594, %v2590
        %v2755 = vpack.c.b16 %v2595, %v2591
        %v2756 = vpack.c.b16 %v2596, %v2592
        %v2757 = vpack.c.b16 %v2601, %v2597
        %v2758 = vpack.c.b16 %v2602, %v2598
        %v2759 = vpack.c.b16 %v2603, %v2599
        %v2760 = vpack.c.b16 %v2604, %v2600
        %v2761 = vpack.c.b16 %v2609, %v2605
        %v2762 = vpack.c.b16 %v2610, %v2606
        %v2763 = vpack.c.b16 %v2611, %v2607
        %v2764 = vpack.c.b16 %v2612, %v2608
        %v2765 = vpack.c.b16 %v2617, %v2613
        %v2766 = vpack.c.b16 %v2618, %v2614
        %v2767 = vpack.c.b16 %v2619, %v2615
        %v2768 = vpack.c.b16 %v2620, %v2616
        %v2769 = vpack.c.b16 %v2625, %v2621
        %v2770 = vpack.c.b16 %v2626, %v2622
        %v2771 = vpack.c.b16 %v2627, %v2623
        %v2772 = vpack.c.b16 %v2628, %v2624
        %v2773 = vpack.c.b16 %v2633, %v2629
        %v2774 = vpack.c.b16 %v2634, %v2630
        %v2775 = vpack.c.b16 %v2635, %v2631
        %v2776 = vpack.c.b16 %v2636, %v2632
        %v2777 = vpack.c.b16 %v2641, %v2637
        %v2778 = vpack.c.b16 %v2642, %v2638
        %v2779 = vpack.c.b16 %v2643, %v2639
        %v2780 = vpack.c.b16 %v2644, %v2640
        %v2781 = vpack.c.b16 %v2649, %v2645
        %v2782 = vpack.c.b16 %v2650, %v2646
        %v2783 = vpack.c.b16 %v2651, %v2647
        %v2784 = vpack.c.b16 %v2652, %v2648
        %v2785 = vpack.c.b16 %v2657, %v2653
        %v2786 = vpack.c.b16 %v2658, %v2654
        %v2787 = vpack.c.b16 %v2659, %v2655
        %v2788 = vpack.c.b16 %v2660, %v2656
        %2917 = vmatprep.subr.bf16.mxu0 %v2690
        %2918 = vmatpush1.bf16.msra.mxu0 %v2689
        %2919 = vmatprep.subr.bf16.mxu0 %v2686
        %2920 = vmatpush1.bf16.msra.mxu0 %v2685
        %2921 = vmatprep.subr.bf16.mxu0 %v2682
        %2922 = vmatpush1.bf16.msra.mxu0 %v2681
        %2923 = vmatprep.subr.bf16.mxu0 %v2678
        %2924 = vmatpush1.bf16.msra.mxu0 %v2677
        %2925 = vmatprep.subr.bf16.mxu0 %v2674
        %2926 = vmatpush1.bf16.msra.mxu0 %v2673
        %2927 = vmatprep.subr.bf16.mxu0 %v2670
        %2928 = vmatpush1.bf16.msra.mxu0 %v2669
        %2929 = vmatprep.subr.bf16.mxu0 %v2666
        %2930 = vmatpush1.bf16.msra.mxu0 %v2665
        %2931 = vmatprep.subr.bf16.mxu0 %v2662
        %2932 = vmatpush1.bf16.msra.mxu0 %v2661
        %2933 = vmatprep.subr.bf16.mxu0 %v2722
        %2934 = vmatpush2.bf16.msra.mxu0 %v2721
        %2935 = vmatprep.subr.bf16.mxu0 %v2718
        %2936 = vmatpush2.bf16.msra.mxu0 %v2717
        %2937 = vmatprep.subr.bf16.mxu0 %v2714
        %2938 = vmatpush2.bf16.msra.mxu0 %v2713
        %2939 = vmatprep.subr.bf16.mxu0 %v2710
        %2940 = vmatpush2.bf16.msra.mxu0 %v2709
        %2941 = vmatprep.subr.bf16.mxu0 %v2706
        %2942 = vmatpush2.bf16.msra.mxu0 %v2705
        %2943 = vmatprep.subr.bf16.mxu0 %v2702
        %2944 = vmatpush2.bf16.msra.mxu0 %v2701
        %2945 = vmatprep.subr.bf16.mxu0 %v2698
        %2946 = vmatpush2.bf16.msra.mxu0 %v2697
        %2947 = vmatprep.subr.bf16.mxu0 %v2694
        %2948 = vmatpush2.bf16.msra.mxu0 %v2693
        %2949 = vmatprep.mubr.bf16.mxu0 %v2124
        %2950 = vmatmul.mubr.bf16.gmra.mxu0 %v2123
        %v2951 = vpop.f32.mrf.mxu0
        %v2952 = vadd.f32 %v2260, %v2951
        %v2953 = vpop.f32.mrf.mxu0
        %v2954 = vadd.f32 %v2264, %v2953
        %v2955 = vpop.f32.mrf.mxu0
        %v2956 = vpop.f32.mrf.mxu0
        %2957 = vdwg.mxu0
        %2958 = vmatprep.subr.bf16.mxu0 %v2754
        %2959 = vmatpush1.bf16.msra.mxu0 %v2753
        %2960 = vmatprep.subr.bf16.mxu0 %v2750
        %2961 = vmatpush1.bf16.msra.mxu0 %v2749
        %2962 = vmatprep.subr.bf16.mxu0 %v2746
        %2963 = vmatpush1.bf16.msra.mxu0 %v2745
        %2964 = vmatprep.subr.bf16.mxu0 %v2742
        %2965 = vmatpush1.bf16.msra.mxu0 %v2741
        %2966 = vmatprep.subr.bf16.mxu0 %v2738
        %2967 = vmatpush1.bf16.msra.mxu0 %v2737
        %2968 = vmatprep.subr.bf16.mxu0 %v2734
        %2969 = vmatpush1.bf16.msra.mxu0 %v2733
        %2970 = vmatprep.subr.bf16.mxu0 %v2730
        %2971 = vmatpush1.bf16.msra.mxu0 %v2729
        %2972 = vmatprep.subr.bf16.mxu0 %v2726
        %2973 = vmatpush1.bf16.msra.mxu0 %v2725
        %2974 = vmatprep.subr.bf16.mxu0 %v2786
        %2975 = vmatpush2.bf16.msra.mxu0 %v2785
        %2976 = vmatprep.subr.bf16.mxu0 %v2782
        %2977 = vmatpush2.bf16.msra.mxu0 %v2781
        %2978 = vmatprep.subr.bf16.mxu0 %v2778
        %2979 = vmatpush2.bf16.msra.mxu0 %v2777
        %2980 = vmatprep.subr.bf16.mxu0 %v2774
        %2981 = vmatpush2.bf16.msra.mxu0 %v2773
        %2982 = vmatprep.subr.bf16.mxu0 %v2770
        %2983 = vmatpush2.bf16.msra.mxu0 %v2769
        %2984 = vmatprep.subr.bf16.mxu0 %v2766
        %2985 = vmatpush2.bf16.msra.mxu0 %v2765
        %2986 = vmatprep.subr.bf16.mxu0 %v2762
        %2987 = vmatpush2.bf16.msra.mxu0 %v2761
        %2988 = vmatprep.subr.bf16.mxu0 %v2758
        %2989 = vmatpush2.bf16.msra.mxu0 %v2757
        %2990 = vmatprep.mubr.bf16.mxu0 %v2126
        %2991 = vmatmul.mubr.bf16.gmra.mxu0 %v2125
        %v2992 = vpop.f32.mrf.mxu0
        %v2993 = vadd.f32 %v2952, %v2992
        %v2994 = vpop.f32.mrf.mxu0
        %v2995 = vadd.f32 %v2954, %v2994
        %v2996 = vpop.f32.mrf.mxu0
        %v2997 = vpop.f32.mrf.mxu0
        %2998 = vdwg.mxu0
        %2999 = vmatprep.subr.bf16.mxu0 %v2692
        %3000 = vmatpush1.bf16.msra.mxu0 %v2691
        %3001 = vmatprep.subr.bf16.mxu0 %v2688
        %3002 = vmatpush1.bf16.msra.mxu0 %v2687
        %3003 = vmatprep.subr.bf16.mxu0 %v2684
        %3004 = vmatpush1.bf16.msra.mxu0 %v2683
        %3005 = vmatprep.subr.bf16.mxu0 %v2680
        %3006 = vmatpush1.bf16.msra.mxu0 %v2679
        %3007 = vmatprep.subr.bf16.mxu0 %v2676
        %3008 = vmatpush1.bf16.msra.mxu0 %v2675
        %3009 = vmatprep.subr.bf16.mxu0 %v2672
        %3010 = vmatpush1.bf16.msra.mxu0 %v2671
        %3011 = vmatprep.subr.bf16.mxu0 %v2668
        %3012 = vmatpush1.bf16.msra.mxu0 %v2667
        %3013 = vmatprep.subr.bf16.mxu0 %v2664
        %3014 = vmatpush1.bf16.msra.mxu0 %v2663
        %3015 = vmatprep.subr.bf16.mxu0 %v2724
        %3016 = vmatpush2.bf16.msra.mxu0 %v2723
        %3017 = vmatprep.subr.bf16.mxu0 %v2720
        %3018 = vmatpush2.bf16.msra.mxu0 %v2719
        %3019 = vmatprep.subr.bf16.mxu0 %v2716
        %3020 = vmatpush2.bf16.msra.mxu0 %v2715
        %3021 = vmatprep.subr.bf16.mxu0 %v2712
        %3022 = vmatpush2.bf16.msra.mxu0 %v2711
        %3023 = vmatprep.subr.bf16.mxu0 %v2708
        %3024 = vmatpush2.bf16.msra.mxu0 %v2707
        %3025 = vmatprep.subr.bf16.mxu0 %v2704
        %3026 = vmatpush2.bf16.msra.mxu0 %v2703
        %3027 = vmatprep.subr.bf16.mxu0 %v2700
        %3028 = vmatpush2.bf16.msra.mxu0 %v2699
        %3029 = vmatprep.subr.bf16.mxu0 %v2696
        %3030 = vmatpush2.bf16.msra.mxu0 %v2695
        %3031 = vmatprep.mubr.bf16.mxu0 %v2124
        %3032 = vmatmul.mubr.bf16.gmra.mxu0 %v2123
        %v3033 = vpop.f32.mrf.mxu0
        %v3034 = vadd.f32 %v2268, %v3033
        %v3035 = vpop.f32.mrf.mxu0
        %v3036 = vadd.f32 %v2272, %v3035
        %v3037 = vpop.f32.mrf.mxu0
        %v3038 = vpop.f32.mrf.mxu0
        %3039 = vdwg.mxu0
        %3040 = vmatprep.subr.bf16.mxu0 %v2756
        %3041 = vmatpush1.bf16.msra.mxu0 %v2755
        %3042 = vmatprep.subr.bf16.mxu0 %v2752
        %3043 = vmatpush1.bf16.msra.mxu0 %v2751
        %3044 = vmatprep.subr.bf16.mxu0 %v2748
        %3045 = vmatpush1.bf16.msra.mxu0 %v2747
        %3046 = vmatprep.subr.bf16.mxu0 %v2744
        %3047 = vmatpush1.bf16.msra.mxu0 %v2743
        %3048 = vmatprep.subr.bf16.mxu0 %v2740
        %3049 = vmatpush1.bf16.msra.mxu0 %v2739
        %3050 = vmatprep.subr.bf16.mxu0 %v2736
        %3051 = vmatpush1.bf16.msra.mxu0 %v2735
        %3052 = vmatprep.subr.bf16.mxu0 %v2732
        %3053 = vmatpush1.bf16.msra.mxu0 %v2731
        %3054 = vmatprep.subr.bf16.mxu0 %v2728
        %3055 = vmatpush1.bf16.msra.mxu0 %v2727
        %3056 = vmatprep.subr.bf16.mxu0 %v2788
        %3057 = vmatpush2.bf16.msra.mxu0 %v2787
        %3058 = vmatprep.subr.bf16.mxu0 %v2784
        %3059 = vmatpush2.bf16.msra.mxu0 %v2783
        %3060 = vmatprep.subr.bf16.mxu0 %v2780
        %3061 = vmatpush2.bf16.msra.mxu0 %v2779
        %3062 = vmatprep.subr.bf16.mxu0 %v2776
        %3063 = vmatpush2.bf16.msra.mxu0 %v2775
        %3064 = vmatprep.subr.bf16.mxu0 %v2772
        %3065 = vmatpush2.bf16.msra.mxu0 %v2771
        %3066 = vmatprep.subr.bf16.mxu0 %v2768
        %3067 = vmatpush2.bf16.msra.mxu0 %v2767
        %3068 = vmatprep.subr.bf16.mxu0 %v2764
        %3069 = vmatpush2.bf16.msra.mxu0 %v2763
        %3070 = vmatprep.subr.bf16.mxu0 %v2760
        %3071 = vmatpush2.bf16.msra.mxu0 %v2759
        %3072 = vmatprep.mubr.bf16.mxu0 %v2126
        %3073 = vmatmul.mubr.bf16.gmra.mxu0 %v2125
        %v3074 = vpop.f32.mrf.mxu0
        %v3075 = vadd.f32 %v3034, %v3074
        %v3076 = vpop.f32.mrf.mxu0
        %v3077 = vadd.f32 %v3036, %v3076
        %v3078 = vpop.f32.mrf.mxu0
        %v3079 = vpop.f32.mrf.mxu0
        %3080 = vdwg.mxu0
        %v3081 = vmul.f32 %v2993, 0.5
        %v3082 = vmul.f32 %v2995, 0.5
        %v3083 = vmul.f32 %v3075, 0.5
        %v3084 = vmul.f32 %v3077, 0.5
        %v3085 = vmul.f32 %v2993, %v2993
        %v3086 = vmul.f32 %v2995, %v2995
        %v3087 = vmul.f32 %v3075, %v3075
        %v3088 = vmul.f32 %v3077, %v3077
        %v3089 = vmul.f32 %v3085, %v2993
        %v3090 = vmul.f32 %v3086, %v2995
        %v3091 = vmul.f32 %v3087, %v3075
        %v3092 = vmul.f32 %v3088, %v3077
        %v3093 = vmul.f32 %v3089, 0.044715
        %v3094 = vmul.f32 %v3090, 0.044715
        %v3095 = vmul.f32 %v3091, 0.044715
        %v3096 = vmul.f32 %v3092, 0.044715
        %v3097 = vadd.f32 %v2993, %v3093
        %v3098 = vadd.f32 %v2995, %v3094
        %v3099 = vadd.f32 %v3075, %v3095
        %v3100 = vadd.f32 %v3077, %v3096
        %v3101 = vmul.f32 %v3097, 0.7978846
        %v3102 = vmul.f32 %v3098, 0.7978846
        %v3103 = vmul.f32 %v3099, 0.7978846
        %v3104 = vmul.f32 %v3100, 0.7978846
        %v3105 = vtanh.pop %v3101
        %v3106 = vtanh.pop %v3102
        %v3107 = vtanh.pop %v3103
        %v3108 = vtanh.pop %v3104
        %v3109 = vadd.f32 %v3105, 1.0
        %v3110 = vadd.f32 %v3106, 1.0
        %v3111 = vadd.f32 %v3107, 1.0
        %v3112 = vadd.f32 %v3108, 1.0
        %v3113 = vmul.f32 %v3081, %v3109
        %v3114 = vmul.f32 %v3082, %v3110
        %v3115 = vmul.f32 %v3083, %v3111
        %v3116 = vmul.f32 %v3084, %v3112
        %v3117 = vpack.c.bf16 %v3113, %v3113
        %v3118 = vpack.c.bf16 %v3114, %v3114
        %v3119 = vpack.c.bf16 %v3115, %v3115
        %v3120 = vpack.c.bf16 %v3116, %v3116
        %v3121 = vld [vmem:[%s699] sm:$0xff]
        %v3122 = vld [vmem:[%s699 + $0x8] sm:$0xff]
        %v3123 = vld [vmem:[%s699 + $0x10] sm:$0xff]
        %v3124 = vld [vmem:[%s699 + $0x18] sm:$0xff]
        %v3125 = vld [vmem:[%s699 + $0x20] sm:$0xff]
        %v3126 = vld [vmem:[%s699 + $0x28] sm:$0xff]
        %v3127 = vld [vmem:[%s699 + $0x30] sm:$0xff]
        %v3128 = vld [vmem:[%s699 + $0x38] sm:$0xff]
        %v3129 = vld [vmem:[%s699 + $0x40] sm:$0xff]
        %v3130 = vld [vmem:[%s699 + $0x48] sm:$0xff]
        %v3131 = vld [vmem:[%s699 + $0x50] sm:$0xff]
        %v3132 = vld [vmem:[%s699 + $0x58] sm:$0xff]
        %v3133 = vld [vmem:[%s699 + $0x60] sm:$0xff]
        %v3134 = vld [vmem:[%s699 + $0x68] sm:$0xff]
        %v3135 = vld [vmem:[%s699 + $0x70] sm:$0xff]
        %v3136 = vld [vmem:[%s699 + $0x78] sm:$0xff]
        %v3137 = vld [vmem:[%s699 + $0x80] sm:$0xff]
        %v3138 = vld [vmem:[%s699 + $0x88] sm:$0xff]
        %v3139 = vld [vmem:[%s699 + $0x90] sm:$0xff]
        %v3140 = vld [vmem:[%s699 + $0x98] sm:$0xff]
        %v3141 = vld [vmem:[%s699 + $0xa0] sm:$0xff]
        %v3142 = vld [vmem:[%s699 + $0xa8] sm:$0xff]
        %v3143 = vld [vmem:[%s699 + $0xb0] sm:$0xff]
        %v3144 = vld [vmem:[%s699 + $0xb8] sm:$0xff]
        %v3145 = vld [vmem:[%s699 + $0xc0] sm:$0xff]
        %v3146 = vld [vmem:[%s699 + $0xc8] sm:$0xff]
        %v3147 = vld [vmem:[%s699 + $0xd0] sm:$0xff]
        %v3148 = vld [vmem:[%s699 + $0xd8] sm:$0xff]
        %v3149 = vld [vmem:[%s699 + $0xe0] sm:$0xff]
        %v3150 = vld [vmem:[%s699 + $0xe8] sm:$0xff]
        %v3151 = vld [vmem:[%s699 + $0xf0] sm:$0xff]
        %v3152 = vld [vmem:[%s699 + $0xf8] sm:$0xff]
        %v3153 = vld [vmem:[%s699 + $0x100] sm:$0xff]
        %v3154 = vld [vmem:[%s699 + $0x108] sm:$0xff]
        %v3155 = vld [vmem:[%s699 + $0x110] sm:$0xff]
        %v3156 = vld [vmem:[%s699 + $0x118] sm:$0xff]
        %v3157 = vld [vmem:[%s699 + $0x120] sm:$0xff]
        %v3158 = vld [vmem:[%s699 + $0x128] sm:$0xff]
        %v3159 = vld [vmem:[%s699 + $0x130] sm:$0xff]
        %v3160 = vld [vmem:[%s699 + $0x138] sm:$0xff]
        %v3161 = vld [vmem:[%s699 + $0x140] sm:$0xff]
        %v3162 = vld [vmem:[%s699 + $0x148] sm:$0xff]
        %v3163 = vld [vmem:[%s699 + $0x150] sm:$0xff]
        %v3164 = vld [vmem:[%s699 + $0x158] sm:$0xff]
        %v3165 = vld [vmem:[%s699 + $0x160] sm:$0xff]
        %v3166 = vld [vmem:[%s699 + $0x168] sm:$0xff]
        %v3167 = vld [vmem:[%s699 + $0x170] sm:$0xff]
        %v3168 = vld [vmem:[%s699 + $0x178] sm:$0xff]
        %v3169 = vld [vmem:[%s699 + $0x180] sm:$0xff]
        %v3170 = vld [vmem:[%s699 + $0x188] sm:$0xff]
        %v3171 = vld [vmem:[%s699 + $0x190] sm:$0xff]
        %v3172 = vld [vmem:[%s699 + $0x198] sm:$0xff]
        %v3173 = vld [vmem:[%s699 + $0x1a0] sm:$0xff]
        %v3174 = vld [vmem:[%s699 + $0x1a8] sm:$0xff]
        %v3175 = vld [vmem:[%s699 + $0x1b0] sm:$0xff]
        %v3176 = vld [vmem:[%s699 + $0x1b8] sm:$0xff]
        %v3177 = vld [vmem:[%s699 + $0x1c0] sm:$0xff]
        %v3178 = vld [vmem:[%s699 + $0x1c8] sm:$0xff]
        %v3179 = vld [vmem:[%s699 + $0x1d0] sm:$0xff]
        %v3180 = vld [vmem:[%s699 + $0x1d8] sm:$0xff]
        %v3181 = vld [vmem:[%s699 + $0x1e0] sm:$0xff]
        %v3182 = vld [vmem:[%s699 + $0x1e8] sm:$0xff]
        %v3183 = vld [vmem:[%s699 + $0x1f0] sm:$0xff]
        %v3184 = vld [vmem:[%s699 + $0x1f8] sm:$0xff]
        %v3185 = vld [vmem:[%s699 + $0x200] sm:$0xff]
        %v3186 = vld [vmem:[%s699 + $0x208] sm:$0xff]
        %v3187 = vld [vmem:[%s699 + $0x210] sm:$0xff]
        %v3188 = vld [vmem:[%s699 + $0x218] sm:$0xff]
        %v3189 = vld [vmem:[%s699 + $0x220] sm:$0xff]
        %v3190 = vld [vmem:[%s699 + $0x228] sm:$0xff]
        %v3191 = vld [vmem:[%s699 + $0x230] sm:$0xff]
        %v3192 = vld [vmem:[%s699 + $0x238] sm:$0xff]
        %v3193 = vld [vmem:[%s699 + $0x240] sm:$0xff]
        %v3194 = vld [vmem:[%s699 + $0x248] sm:$0xff]
        %v3195 = vld [vmem:[%s699 + $0x250] sm:$0xff]
        %v3196 = vld [vmem:[%s699 + $0x258] sm:$0xff]
        %v3197 = vld [vmem:[%s699 + $0x260] sm:$0xff]
        %v3198 = vld [vmem:[%s699 + $0x268] sm:$0xff]
        %v3199 = vld [vmem:[%s699 + $0x270] sm:$0xff]
        %v3200 = vld [vmem:[%s699 + $0x278] sm:$0xff]
        %v3201 = vld [vmem:[%s699 + $0x280] sm:$0xff]
        %v3202 = vld [vmem:[%s699 + $0x288] sm:$0xff]
        %v3203 = vld [vmem:[%s699 + $0x290] sm:$0xff]
        %v3204 = vld [vmem:[%s699 + $0x298] sm:$0xff]
        %v3205 = vld [vmem:[%s699 + $0x2a0] sm:$0xff]
        %v3206 = vld [vmem:[%s699 + $0x2a8] sm:$0xff]
        %v3207 = vld [vmem:[%s699 + $0x2b0] sm:$0xff]
        %v3208 = vld [vmem:[%s699 + $0x2b8] sm:$0xff]
        %v3209 = vld [vmem:[%s699 + $0x2c0] sm:$0xff]
        %v3210 = vld [vmem:[%s699 + $0x2c8] sm:$0xff]
        %v3211 = vld [vmem:[%s699 + $0x2d0] sm:$0xff]
        %v3212 = vld [vmem:[%s699 + $0x2d8] sm:$0xff]
        %v3213 = vld [vmem:[%s699 + $0x2e0] sm:$0xff]
        %v3214 = vld [vmem:[%s699 + $0x2e8] sm:$0xff]
        %v3215 = vld [vmem:[%s699 + $0x2f0] sm:$0xff]
        %v3216 = vld [vmem:[%s699 + $0x2f8] sm:$0xff]
        %v3217 = vld [vmem:[%s699 + $0x300] sm:$0xff]
        %v3218 = vld [vmem:[%s699 + $0x308] sm:$0xff]
        %v3219 = vld [vmem:[%s699 + $0x310] sm:$0xff]
        %v3220 = vld [vmem:[%s699 + $0x318] sm:$0xff]
        %v3221 = vld [vmem:[%s699 + $0x320] sm:$0xff]
        %v3222 = vld [vmem:[%s699 + $0x328] sm:$0xff]
        %v3223 = vld [vmem:[%s699 + $0x330] sm:$0xff]
        %v3224 = vld [vmem:[%s699 + $0x338] sm:$0xff]
        %v3225 = vld [vmem:[%s699 + $0x340] sm:$0xff]
        %v3226 = vld [vmem:[%s699 + $0x348] sm:$0xff]
        %v3227 = vld [vmem:[%s699 + $0x350] sm:$0xff]
        %v3228 = vld [vmem:[%s699 + $0x358] sm:$0xff]
        %v3229 = vld [vmem:[%s699 + $0x360] sm:$0xff]
        %v3230 = vld [vmem:[%s699 + $0x368] sm:$0xff]
        %v3231 = vld [vmem:[%s699 + $0x370] sm:$0xff]
        %v3232 = vld [vmem:[%s699 + $0x378] sm:$0xff]
        %v3233 = vld [vmem:[%s699 + $0x380] sm:$0xff]
        %v3234 = vld [vmem:[%s699 + $0x388] sm:$0xff]
        %v3235 = vld [vmem:[%s699 + $0x390] sm:$0xff]
        %v3236 = vld [vmem:[%s699 + $0x398] sm:$0xff]
        %v3237 = vld [vmem:[%s699 + $0x3a0] sm:$0xff]
        %v3238 = vld [vmem:[%s699 + $0x3a8] sm:$0xff]
        %v3239 = vld [vmem:[%s699 + $0x3b0] sm:$0xff]
        %v3240 = vld [vmem:[%s699 + $0x3b8] sm:$0xff]
        %v3241 = vld [vmem:[%s699 + $0x3c0] sm:$0xff]
        %v3242 = vld [vmem:[%s699 + $0x3c8] sm:$0xff]
        %v3243 = vld [vmem:[%s699 + $0x3d0] sm:$0xff]
        %v3244 = vld [vmem:[%s699 + $0x3d8] sm:$0xff]
        %v3245 = vld [vmem:[%s699 + $0x3e0] sm:$0xff]
        %v3246 = vld [vmem:[%s699 + $0x3e8] sm:$0xff]
        %v3247 = vld [vmem:[%s699 + $0x3f0] sm:$0xff]
        %v3248 = vld [vmem:[%s699 + $0x3f8] sm:$0xff]
        %v3249 = vld [vmem:[%s806] sm:$0xf]
        %v3251 = vlaneseq
        %v3252 = vshrl.u32 %v3251, 7
        %v3253 = vsub.s32 0, %v3252
        %v3254 = vrot.slane %v3249, %v3253
        %v3255 = vlaneseq
        %v3256 = vshrl.u32 %v3255, 7
        %v3257 = vsub.s32 1, %v3256
        %v3258 = vrot.slane %v3249, %v3257
        %v3259 = vlaneseq
        %v3260 = vshrl.u32 %v3259, 7
        %v3261 = vsub.s32 2, %v3260
        %v3262 = vrot.slane %v3249, %v3261
        %v3263 = vlaneseq
        %v3264 = vshrl.u32 %v3263, 7
        %v3265 = vsub.s32 3, %v3264
        %v3266 = vrot.slane %v3249, %v3265
        %v3399 = vunpack.c.l.b16 %v3121
        %v3400 = vunpack.c.h.b16 %v3121
        %v3401 = vunpack.c.l.b16 %v3122
        %v3402 = vunpack.c.h.b16 %v3122
        %v3403 = vunpack.c.l.b16 %v3123
        %v3404 = vunpack.c.h.b16 %v3123
        %v3405 = vunpack.c.l.b16 %v3124
        %v3406 = vunpack.c.h.b16 %v3124
        %v3407 = vunpack.c.l.b16 %v3125
        %v3408 = vunpack.c.h.b16 %v3125
        %v3409 = vunpack.c.l.b16 %v3126
        %v3410 = vunpack.c.h.b16 %v3126
        %v3411 = vunpack.c.l.b16 %v3127
        %v3412 = vunpack.c.h.b16 %v3127
        %v3413 = vunpack.c.l.b16 %v3128
        %v3414 = vunpack.c.h.b16 %v3128
        %v3415 = vunpack.c.l.b16 %v3129
        %v3416 = vunpack.c.h.b16 %v3129
        %v3417 = vunpack.c.l.b16 %v3130
        %v3418 = vunpack.c.h.b16 %v3130
        %v3419 = vunpack.c.l.b16 %v3131
        %v3420 = vunpack.c.h.b16 %v3131
        %v3421 = vunpack.c.l.b16 %v3132
        %v3422 = vunpack.c.h.b16 %v3132
        %v3423 = vunpack.c.l.b16 %v3133
        %v3424 = vunpack.c.h.b16 %v3133
        %v3425 = vunpack.c.l.b16 %v3134
        %v3426 = vunpack.c.h.b16 %v3134
        %v3427 = vunpack.c.l.b16 %v3135
        %v3428 = vunpack.c.h.b16 %v3135
        %v3429 = vunpack.c.l.b16 %v3136
        %v3430 = vunpack.c.h.b16 %v3136
        %v3431 = vunpack.c.l.b16 %v3137
        %v3432 = vunpack.c.h.b16 %v3137
        %v3433 = vunpack.c.l.b16 %v3138
        %v3434 = vunpack.c.h.b16 %v3138
        %v3435 = vunpack.c.l.b16 %v3139
        %v3436 = vunpack.c.h.b16 %v3139
        %v3437 = vunpack.c.l.b16 %v3140
        %v3438 = vunpack.c.h.b16 %v3140
        %v3439 = vunpack.c.l.b16 %v3141
        %v3440 = vunpack.c.h.b16 %v3141
        %v3441 = vunpack.c.l.b16 %v3142
        %v3442 = vunpack.c.h.b16 %v3142
        %v3443 = vunpack.c.l.b16 %v3143
        %v3444 = vunpack.c.h.b16 %v3143
        %v3445 = vunpack.c.l.b16 %v3144
        %v3446 = vunpack.c.h.b16 %v3144
        %v3447 = vunpack.c.l.b16 %v3145
        %v3448 = vunpack.c.h.b16 %v3145
        %v3449 = vunpack.c.l.b16 %v3146
        %v3450 = vunpack.c.h.b16 %v3146
        %v3451 = vunpack.c.l.b16 %v3147
        %v3452 = vunpack.c.h.b16 %v3147
        %v3453 = vunpack.c.l.b16 %v3148
        %v3454 = vunpack.c.h.b16 %v3148
        %v3455 = vunpack.c.l.b16 %v3149
        %v3456 = vunpack.c.h.b16 %v3149
        %v3457 = vunpack.c.l.b16 %v3150
        %v3458 = vunpack.c.h.b16 %v3150
        %v3459 = vunpack.c.l.b16 %v3151
        %v3460 = vunpack.c.h.b16 %v3151
        %v3461 = vunpack.c.l.b16 %v3152
        %v3462 = vunpack.c.h.b16 %v3152
        %v3463 = vunpack.c.l.b16 %v3153
        %v3464 = vunpack.c.h.b16 %v3153
        %v3465 = vunpack.c.l.b16 %v3154
        %v3466 = vunpack.c.h.b16 %v3154
        %v3467 = vunpack.c.l.b16 %v3155
        %v3468 = vunpack.c.h.b16 %v3155
        %v3469 = vunpack.c.l.b16 %v3156
        %v3470 = vunpack.c.h.b16 %v3156
        %v3471 = vunpack.c.l.b16 %v3157
        %v3472 = vunpack.c.h.b16 %v3157
        %v3473 = vunpack.c.l.b16 %v3158
        %v3474 = vunpack.c.h.b16 %v3158
        %v3475 = vunpack.c.l.b16 %v3159
        %v3476 = vunpack.c.h.b16 %v3159
        %v3477 = vunpack.c.l.b16 %v3160
        %v3478 = vunpack.c.h.b16 %v3160
        %v3479 = vunpack.c.l.b16 %v3161
        %v3480 = vunpack.c.h.b16 %v3161
        %v3481 = vunpack.c.l.b16 %v3162
        %v3482 = vunpack.c.h.b16 %v3162
        %v3483 = vunpack.c.l.b16 %v3163
        %v3484 = vunpack.c.h.b16 %v3163
        %v3485 = vunpack.c.l.b16 %v3164
        %v3486 = vunpack.c.h.b16 %v3164
        %v3487 = vunpack.c.l.b16 %v3165
        %v3488 = vunpack.c.h.b16 %v3165
        %v3489 = vunpack.c.l.b16 %v3166
        %v3490 = vunpack.c.h.b16 %v3166
        %v3491 = vunpack.c.l.b16 %v3167
        %v3492 = vunpack.c.h.b16 %v3167
        %v3493 = vunpack.c.l.b16 %v3168
        %v3494 = vunpack.c.h.b16 %v3168
        %v3495 = vunpack.c.l.b16 %v3169
        %v3496 = vunpack.c.h.b16 %v3169
        %v3497 = vunpack.c.l.b16 %v3170
        %v3498 = vunpack.c.h.b16 %v3170
        %v3499 = vunpack.c.l.b16 %v3171
        %v3500 = vunpack.c.h.b16 %v3171
        %v3501 = vunpack.c.l.b16 %v3172
        %v3502 = vunpack.c.h.b16 %v3172
        %v3503 = vunpack.c.l.b16 %v3173
        %v3504 = vunpack.c.h.b16 %v3173
        %v3505 = vunpack.c.l.b16 %v3174
        %v3506 = vunpack.c.h.b16 %v3174
        %v3507 = vunpack.c.l.b16 %v3175
        %v3508 = vunpack.c.h.b16 %v3175
        %v3509 = vunpack.c.l.b16 %v3176
        %v3510 = vunpack.c.h.b16 %v3176
        %v3511 = vunpack.c.l.b16 %v3177
        %v3512 = vunpack.c.h.b16 %v3177
        %v3513 = vunpack.c.l.b16 %v3178
        %v3514 = vunpack.c.h.b16 %v3178
        %v3515 = vunpack.c.l.b16 %v3179
        %v3516 = vunpack.c.h.b16 %v3179
        %v3517 = vunpack.c.l.b16 %v3180
        %v3518 = vunpack.c.h.b16 %v3180
        %v3519 = vunpack.c.l.b16 %v3181
        %v3520 = vunpack.c.h.b16 %v3181
        %v3521 = vunpack.c.l.b16 %v3182
        %v3522 = vunpack.c.h.b16 %v3182
        %v3523 = vunpack.c.l.b16 %v3183
        %v3524 = vunpack.c.h.b16 %v3183
        %v3525 = vunpack.c.l.b16 %v3184
        %v3526 = vunpack.c.h.b16 %v3184
        %v3527 = vunpack.c.l.b16 %v3185
        %v3528 = vunpack.c.h.b16 %v3185
        %v3529 = vunpack.c.l.b16 %v3186
        %v3530 = vunpack.c.h.b16 %v3186
        %v3531 = vunpack.c.l.b16 %v3187
        %v3532 = vunpack.c.h.b16 %v3187
        %v3533 = vunpack.c.l.b16 %v3188
        %v3534 = vunpack.c.h.b16 %v3188
        %v3535 = vunpack.c.l.b16 %v3189
        %v3536 = vunpack.c.h.b16 %v3189
        %v3537 = vunpack.c.l.b16 %v3190
        %v3538 = vunpack.c.h.b16 %v3190
        %v3539 = vunpack.c.l.b16 %v3191
        %v3540 = vunpack.c.h.b16 %v3191
        %v3541 = vunpack.c.l.b16 %v3192
        %v3542 = vunpack.c.h.b16 %v3192
        %v3543 = vunpack.c.l.b16 %v3193
        %v3544 = vunpack.c.h.b16 %v3193
        %v3545 = vunpack.c.l.b16 %v3194
        %v3546 = vunpack.c.h.b16 %v3194
        %v3547 = vunpack.c.l.b16 %v3195
        %v3548 = vunpack.c.h.b16 %v3195
        %v3549 = vunpack.c.l.b16 %v3196
        %v3550 = vunpack.c.h.b16 %v3196
        %v3551 = vunpack.c.l.b16 %v3197
        %v3552 = vunpack.c.h.b16 %v3197
        %v3553 = vunpack.c.l.b16 %v3198
        %v3554 = vunpack.c.h.b16 %v3198
        %v3555 = vunpack.c.l.b16 %v3199
        %v3556 = vunpack.c.h.b16 %v3199
        %v3557 = vunpack.c.l.b16 %v3200
        %v3558 = vunpack.c.h.b16 %v3200
        %v3559 = vunpack.c.l.b16 %v3201
        %v3560 = vunpack.c.h.b16 %v3201
        %v3561 = vunpack.c.l.b16 %v3202
        %v3562 = vunpack.c.h.b16 %v3202
        %v3563 = vunpack.c.l.b16 %v3203
        %v3564 = vunpack.c.h.b16 %v3203
        %v3565 = vunpack.c.l.b16 %v3204
        %v3566 = vunpack.c.h.b16 %v3204
        %v3567 = vunpack.c.l.b16 %v3205
        %v3568 = vunpack.c.h.b16 %v3205
        %v3569 = vunpack.c.l.b16 %v3206
        %v3570 = vunpack.c.h.b16 %v3206
        %v3571 = vunpack.c.l.b16 %v3207
        %v3572 = vunpack.c.h.b16 %v3207
        %v3573 = vunpack.c.l.b16 %v3208
        %v3574 = vunpack.c.h.b16 %v3208
        %v3575 = vunpack.c.l.b16 %v3209
        %v3576 = vunpack.c.h.b16 %v3209
        %v3577 = vunpack.c.l.b16 %v3210
        %v3578 = vunpack.c.h.b16 %v3210
        %v3579 = vunpack.c.l.b16 %v3211
        %v3580 = vunpack.c.h.b16 %v3211
        %v3581 = vunpack.c.l.b16 %v3212
        %v3582 = vunpack.c.h.b16 %v3212
        %v3583 = vunpack.c.l.b16 %v3213
        %v3584 = vunpack.c.h.b16 %v3213
        %v3585 = vunpack.c.l.b16 %v3214
        %v3586 = vunpack.c.h.b16 %v3214
        %v3587 = vunpack.c.l.b16 %v3215
        %v3588 = vunpack.c.h.b16 %v3215
        %v3589 = vunpack.c.l.b16 %v3216
        %v3590 = vunpack.c.h.b16 %v3216
        %v3591 = vunpack.c.l.b16 %v3217
        %v3592 = vunpack.c.h.b16 %v3217
        %v3593 = vunpack.c.l.b16 %v3218
        %v3594 = vunpack.c.h.b16 %v3218
        %v3595 = vunpack.c.l.b16 %v3219
        %v3596 = vunpack.c.h.b16 %v3219
        %v3597 = vunpack.c.l.b16 %v3220
        %v3598 = vunpack.c.h.b16 %v3220
        %v3599 = vunpack.c.l.b16 %v3221
        %v3600 = vunpack.c.h.b16 %v3221
        %v3601 = vunpack.c.l.b16 %v3222
        %v3602 = vunpack.c.h.b16 %v3222
        %v3603 = vunpack.c.l.b16 %v3223
        %v3604 = vunpack.c.h.b16 %v3223
        %v3605 = vunpack.c.l.b16 %v3224
        %v3606 = vunpack.c.h.b16 %v3224
        %v3607 = vunpack.c.l.b16 %v3225
        %v3608 = vunpack.c.h.b16 %v3225
        %v3609 = vunpack.c.l.b16 %v3226
        %v3610 = vunpack.c.h.b16 %v3226
        %v3611 = vunpack.c.l.b16 %v3227
        %v3612 = vunpack.c.h.b16 %v3227
        %v3613 = vunpack.c.l.b16 %v3228
        %v3614 = vunpack.c.h.b16 %v3228
        %v3615 = vunpack.c.l.b16 %v3229
        %v3616 = vunpack.c.h.b16 %v3229
        %v3617 = vunpack.c.l.b16 %v3230
        %v3618 = vunpack.c.h.b16 %v3230
        %v3619 = vunpack.c.l.b16 %v3231
        %v3620 = vunpack.c.h.b16 %v3231
        %v3621 = vunpack.c.l.b16 %v3232
        %v3622 = vunpack.c.h.b16 %v3232
        %v3623 = vunpack.c.l.b16 %v3233
        %v3624 = vunpack.c.h.b16 %v3233
        %v3625 = vunpack.c.l.b16 %v3234
        %v3626 = vunpack.c.h.b16 %v3234
        %v3627 = vunpack.c.l.b16 %v3235
        %v3628 = vunpack.c.h.b16 %v3235
        %v3629 = vunpack.c.l.b16 %v3236
        %v3630 = vunpack.c.h.b16 %v3236
        %v3631 = vunpack.c.l.b16 %v3237
        %v3632 = vunpack.c.h.b16 %v3237
        %v3633 = vunpack.c.l.b16 %v3238
        %v3634 = vunpack.c.h.b16 %v3238
        %v3635 = vunpack.c.l.b16 %v3239
        %v3636 = vunpack.c.h.b16 %v3239
        %v3637 = vunpack.c.l.b16 %v3240
        %v3638 = vunpack.c.h.b16 %v3240
        %v3639 = vunpack.c.l.b16 %v3241
        %v3640 = vunpack.c.h.b16 %v3241
        %v3641 = vunpack.c.l.b16 %v3242
        %v3642 = vunpack.c.h.b16 %v3242
        %v3643 = vunpack.c.l.b16 %v3243
        %v3644 = vunpack.c.h.b16 %v3243
        %v3645 = vunpack.c.l.b16 %v3244
        %v3646 = vunpack.c.h.b16 %v3244
        %v3647 = vunpack.c.l.b16 %v3245
        %v3648 = vunpack.c.h.b16 %v3245
        %v3649 = vunpack.c.l.b16 %v3246
        %v3650 = vunpack.c.h.b16 %v3246
        %v3651 = vunpack.c.l.b16 %v3247
        %v3652 = vunpack.c.h.b16 %v3247
        %v3653 = vunpack.c.l.b16 %v3248
        %v3654 = vunpack.c.h.b16 %v3248
        %v3655 = vpack.c.b16 %v3403, %v3399
        %v3656 = vpack.c.b16 %v3404, %v3400
        %v3657 = vpack.c.b16 %v3405, %v3401
        %v3658 = vpack.c.b16 %v3406, %v3402
        %v3659 = vpack.c.b16 %v3411, %v3407
        %v3660 = vpack.c.b16 %v3412, %v3408
        %v3661 = vpack.c.b16 %v3413, %v3409
        %v3662 = vpack.c.b16 %v3414, %v3410
        %v3663 = vpack.c.b16 %v3419, %v3415
        %v3664 = vpack.c.b16 %v3420, %v3416
        %v3665 = vpack.c.b16 %v3421, %v3417
        %v3666 = vpack.c.b16 %v3422, %v3418
        %v3667 = vpack.c.b16 %v3427, %v3423
        %v3668 = vpack.c.b16 %v3428, %v3424
        %v3669 = vpack.c.b16 %v3429, %v3425
        %v3670 = vpack.c.b16 %v3430, %v3426
        %v3671 = vpack.c.b16 %v3435, %v3431
        %v3672 = vpack.c.b16 %v3436, %v3432
        %v3673 = vpack.c.b16 %v3437, %v3433
        %v3674 = vpack.c.b16 %v3438, %v3434
        %v3675 = vpack.c.b16 %v3443, %v3439
        %v3676 = vpack.c.b16 %v3444, %v3440
        %v3677 = vpack.c.b16 %v3445, %v3441
        %v3678 = vpack.c.b16 %v3446, %v3442
        %v3679 = vpack.c.b16 %v3451, %v3447
        %v3680 = vpack.c.b16 %v3452, %v3448
        %v3681 = vpack.c.b16 %v3453, %v3449
        %v3682 = vpack.c.b16 %v3454, %v3450
        %v3683 = vpack.c.b16 %v3459, %v3455
        %v3684 = vpack.c.b16 %v3460, %v3456
        %v3685 = vpack.c.b16 %v3461, %v3457
        %v3686 = vpack.c.b16 %v3462, %v3458
        %v3687 = vpack.c.b16 %v3467, %v3463
        %v3688 = vpack.c.b16 %v3468, %v3464
        %v3689 = vpack.c.b16 %v3469, %v3465
        %v3690 = vpack.c.b16 %v3470, %v3466
        %v3691 = vpack.c.b16 %v3475, %v3471
        %v3692 = vpack.c.b16 %v3476, %v3472
        %v3693 = vpack.c.b16 %v3477, %v3473
        %v3694 = vpack.c.b16 %v3478, %v3474
        %v3695 = vpack.c.b16 %v3483, %v3479
        %v3696 = vpack.c.b16 %v3484, %v3480
        %v3697 = vpack.c.b16 %v3485, %v3481
        %v3698 = vpack.c.b16 %v3486, %v3482
        %v3699 = vpack.c.b16 %v3491, %v3487
        %v3700 = vpack.c.b16 %v3492, %v3488
        %v3701 = vpack.c.b16 %v3493, %v3489
        %v3702 = vpack.c.b16 %v3494, %v3490
        %v3703 = vpack.c.b16 %v3499, %v3495
        %v3704 = vpack.c.b16 %v3500, %v3496
        %v3705 = vpack.c.b16 %v3501, %v3497
        %v3706 = vpack.c.b16 %v3502, %v3498
        %v3707 = vpack.c.b16 %v3507, %v3503
        %v3708 = vpack.c.b16 %v3508, %v3504
        %v3709 = vpack.c.b16 %v3509, %v3505
        %v3710 = vpack.c.b16 %v3510, %v3506
        %v3711 = vpack.c.b16 %v3515, %v3511
        %v3712 = vpack.c.b16 %v3516, %v3512
        %v3713 = vpack.c.b16 %v3517, %v3513
        %v3714 = vpack.c.b16 %v3518, %v3514
        %v3715 = vpack.c.b16 %v3523, %v3519
        %v3716 = vpack.c.b16 %v3524, %v3520
        %v3717 = vpack.c.b16 %v3525, %v3521
        %v3718 = vpack.c.b16 %v3526, %v3522
        %v3719 = vpack.c.b16 %v3531, %v3527
        %v3720 = vpack.c.b16 %v3532, %v3528
        %v3721 = vpack.c.b16 %v3533, %v3529
        %v3722 = vpack.c.b16 %v3534, %v3530
        %v3723 = vpack.c.b16 %v3539, %v3535
        %v3724 = vpack.c.b16 %v3540, %v3536
        %v3725 = vpack.c.b16 %v3541, %v3537
        %v3726 = vpack.c.b16 %v3542, %v3538
        %v3727 = vpack.c.b16 %v3547, %v3543
        %v3728 = vpack.c.b16 %v3548, %v3544
        %v3729 = vpack.c.b16 %v3549, %v3545
        %v3730 = vpack.c.b16 %v3550, %v3546
        %v3731 = vpack.c.b16 %v3555, %v3551
        %v3732 = vpack.c.b16 %v3556, %v3552
        %v3733 = vpack.c.b16 %v3557, %v3553
        %v3734 = vpack.c.b16 %v3558, %v3554
        %v3735 = vpack.c.b16 %v3563, %v3559
        %v3736 = vpack.c.b16 %v3564, %v3560
        %v3737 = vpack.c.b16 %v3565, %v3561
        %v3738 = vpack.c.b16 %v3566, %v3562
        %v3739 = vpack.c.b16 %v3571, %v3567
        %v3740 = vpack.c.b16 %v3572, %v3568
        %v3741 = vpack.c.b16 %v3573, %v3569
        %v3742 = vpack.c.b16 %v3574, %v3570
        %v3743 = vpack.c.b16 %v3579, %v3575
        %v3744 = vpack.c.b16 %v3580, %v3576
        %v3745 = vpack.c.b16 %v3581, %v3577
        %v3746 = vpack.c.b16 %v3582, %v3578
        %v3747 = vpack.c.b16 %v3587, %v3583
        %v3748 = vpack.c.b16 %v3588, %v3584
        %v3749 = vpack.c.b16 %v3589, %v3585
        %v3750 = vpack.c.b16 %v3590, %v3586
        %v3751 = vpack.c.b16 %v3595, %v3591
        %v3752 = vpack.c.b16 %v3596, %v3592
        %v3753 = vpack.c.b16 %v3597, %v3593
        %v3754 = vpack.c.b16 %v3598, %v3594
        %v3755 = vpack.c.b16 %v3603, %v3599
        %v3756 = vpack.c.b16 %v3604, %v3600
        %v3757 = vpack.c.b16 %v3605, %v3601
        %v3758 = vpack.c.b16 %v3606, %v3602
        %v3759 = vpack.c.b16 %v3611, %v3607
        %v3760 = vpack.c.b16 %v3612, %v3608
        %v3761 = vpack.c.b16 %v3613, %v3609
        %v3762 = vpack.c.b16 %v3614, %v3610
        %v3763 = vpack.c.b16 %v3619, %v3615
        %v3764 = vpack.c.b16 %v3620, %v3616
        %v3765 = vpack.c.b16 %v3621, %v3617
        %v3766 = vpack.c.b16 %v3622, %v3618
        %v3767 = vpack.c.b16 %v3627, %v3623
        %v3768 = vpack.c.b16 %v3628, %v3624
        %v3769 = vpack.c.b16 %v3629, %v3625
        %v3770 = vpack.c.b16 %v3630, %v3626
        %v3771 = vpack.c.b16 %v3635, %v3631
        %v3772 = vpack.c.b16 %v3636, %v3632
        %v3773 = vpack.c.b16 %v3637, %v3633
        %v3774 = vpack.c.b16 %v3638, %v3634
        %v3775 = vpack.c.b16 %v3643, %v3639
        %v3776 = vpack.c.b16 %v3644, %v3640
        %v3777 = vpack.c.b16 %v3645, %v3641
        %v3778 = vpack.c.b16 %v3646, %v3642
        %v3779 = vpack.c.b16 %v3651, %v3647
        %v3780 = vpack.c.b16 %v3652, %v3648
        %v3781 = vpack.c.b16 %v3653, %v3649
        %v3782 = vpack.c.b16 %v3654, %v3650
        %3911 = vmatprep.subr.bf16.mxu0 %v3684
        %3912 = vmatpush1.bf16.msra.mxu0 %v3683
        %3913 = vmatprep.subr.bf16.mxu0 %v3680
        %3914 = vmatpush1.bf16.msra.mxu0 %v3679
        %3915 = vmatprep.subr.bf16.mxu0 %v3676
        %3916 = vmatpush1.bf16.msra.mxu0 %v3675
        %3917 = vmatprep.subr.bf16.mxu0 %v3672
        %3918 = vmatpush1.bf16.msra.mxu0 %v3671
        %3919 = vmatprep.subr.bf16.mxu0 %v3668
        %3920 = vmatpush1.bf16.msra.mxu0 %v3667
        %3921 = vmatprep.subr.bf16.mxu0 %v3664
        %3922 = vmatpush1.bf16.msra.mxu0 %v3663
        %3923 = vmatprep.subr.bf16.mxu0 %v3660
        %3924 = vmatpush1.bf16.msra.mxu0 %v3659
        %3925 = vmatprep.subr.bf16.mxu0 %v3656
        %3926 = vmatpush1.bf16.msra.mxu0 %v3655
        %3927 = vmatprep.subr.bf16.mxu0 %v3716
        %3928 = vmatpush2.bf16.msra.mxu0 %v3715
        %3929 = vmatprep.subr.bf16.mxu0 %v3712
        %3930 = vmatpush2.bf16.msra.mxu0 %v3711
        %3931 = vmatprep.subr.bf16.mxu0 %v3708
        %3932 = vmatpush2.bf16.msra.mxu0 %v3707
        %3933 = vmatprep.subr.bf16.mxu0 %v3704
        %3934 = vmatpush2.bf16.msra.mxu0 %v3703
        %3935 = vmatprep.subr.bf16.mxu0 %v3700
        %3936 = vmatpush2.bf16.msra.mxu0 %v3699
        %3937 = vmatprep.subr.bf16.mxu0 %v3696
        %3938 = vmatpush2.bf16.msra.mxu0 %v3695
        %3939 = vmatprep.subr.bf16.mxu0 %v3692
        %3940 = vmatpush2.bf16.msra.mxu0 %v3691
        %3941 = vmatprep.subr.bf16.mxu0 %v3688
        %3942 = vmatpush2.bf16.msra.mxu0 %v3687
        %3943 = vmatprep.mubr.bf16.mxu0 %v3118
        %3944 = vmatmul.mubr.bf16.gmra.mxu0 %v3117
        %v3945 = vpop.f32.mrf.mxu0
        %v3946 = vadd.f32 %v3254, %v3945
        %v3947 = vpop.f32.mrf.mxu0
        %v3948 = vadd.f32 %v3258, %v3947
        %v3949 = vpop.f32.mrf.mxu0
        %v3950 = vpop.f32.mrf.mxu0
        %3951 = vdwg.mxu0
        %3952 = vmatprep.subr.bf16.mxu0 %v3748
        %3953 = vmatpush1.bf16.msra.mxu0 %v3747
        %3954 = vmatprep.subr.bf16.mxu0 %v3744
        %3955 = vmatpush1.bf16.msra.mxu0 %v3743
        %3956 = vmatprep.subr.bf16.mxu0 %v3740
        %3957 = vmatpush1.bf16.msra.mxu0 %v3739
        %3958 = vmatprep.subr.bf16.mxu0 %v3736
        %3959 = vmatpush1.bf16.msra.mxu0 %v3735
        %3960 = vmatprep.subr.bf16.mxu0 %v3732
        %3961 = vmatpush1.bf16.msra.mxu0 %v3731
        %3962 = vmatprep.subr.bf16.mxu0 %v3728
        %3963 = vmatpush1.bf16.msra.mxu0 %v3727
        %3964 = vmatprep.subr.bf16.mxu0 %v3724
        %3965 = vmatpush1.bf16.msra.mxu0 %v3723
        %3966 = vmatprep.subr.bf16.mxu0 %v3720
        %3967 = vmatpush1.bf16.msra.mxu0 %v3719
        %3968 = vmatprep.subr.bf16.mxu0 %v3780
        %3969 = vmatpush2.bf16.msra.mxu0 %v3779
        %3970 = vmatprep.subr.bf16.mxu0 %v3776
        %3971 = vmatpush2.bf16.msra.mxu0 %v3775
        %3972 = vmatprep.subr.bf16.mxu0 %v3772
        %3973 = vmatpush2.bf16.msra.mxu0 %v3771
        %3974 = vmatprep.subr.bf16.mxu0 %v3768
        %3975 = vmatpush2.bf16.msra.mxu0 %v3767
        %3976 = vmatprep.subr.bf16.mxu0 %v3764
        %3977 = vmatpush2.bf16.msra.mxu0 %v3763
        %3978 = vmatprep.subr.bf16.mxu0 %v3760
        %3979 = vmatpush2.bf16.msra.mxu0 %v3759
        %3980 = vmatprep.subr.bf16.mxu0 %v3756
        %3981 = vmatpush2.bf16.msra.mxu0 %v3755
        %3982 = vmatprep.subr.bf16.mxu0 %v3752
        %3983 = vmatpush2.bf16.msra.mxu0 %v3751
        %3984 = vmatprep.mubr.bf16.mxu0 %v3120
        %3985 = vmatmul.mubr.bf16.gmra.mxu0 %v3119
        %v3986 = vpop.f32.mrf.mxu0
        %v3987 = vadd.f32 %v3946, %v3986
        %v3988 = vpop.f32.mrf.mxu0
        %v3989 = vadd.f32 %v3948, %v3988
        %v3990 = vpop.f32.mrf.mxu0
        %v3991 = vpop.f32.mrf.mxu0
        %3992 = vdwg.mxu0
        %3993 = vmatprep.subr.bf16.mxu0 %v3686
        %3994 = vmatpush1.bf16.msra.mxu0 %v3685
        %3995 = vmatprep.subr.bf16.mxu0 %v3682
        %3996 = vmatpush1.bf16.msra.mxu0 %v3681
        %3997 = vmatprep.subr.bf16.mxu0 %v3678
        %3998 = vmatpush1.bf16.msra.mxu0 %v3677
        %3999 = vmatprep.subr.bf16.mxu0 %v3674
        %4000 = vmatpush1.bf16.msra.mxu0 %v3673
        %4001 = vmatprep.subr.bf16.mxu0 %v3670
        %4002 = vmatpush1.bf16.msra.mxu0 %v3669
        %4003 = vmatprep.subr.bf16.mxu0 %v3666
        %4004 = vmatpush1.bf16.msra.mxu0 %v3665
        %4005 = vmatprep.subr.bf16.mxu0 %v3662
        %4006 = vmatpush1.bf16.msra.mxu0 %v3661
        %4007 = vmatprep.subr.bf16.mxu0 %v3658
        %4008 = vmatpush1.bf16.msra.mxu0 %v3657
        %4009 = vmatprep.subr.bf16.mxu0 %v3718
        %4010 = vmatpush2.bf16.msra.mxu0 %v3717
        %4011 = vmatprep.subr.bf16.mxu0 %v3714
        %4012 = vmatpush2.bf16.msra.mxu0 %v3713
        %4013 = vmatprep.subr.bf16.mxu0 %v3710
        %4014 = vmatpush2.bf16.msra.mxu0 %v3709
        %4015 = vmatprep.subr.bf16.mxu0 %v3706
        %4016 = vmatpush2.bf16.msra.mxu0 %v3705
        %4017 = vmatprep.subr.bf16.mxu0 %v3702
        %4018 = vmatpush2.bf16.msra.mxu0 %v3701
        %4019 = vmatprep.subr.bf16.mxu0 %v3698
        %4020 = vmatpush2.bf16.msra.mxu0 %v3697
        %4021 = vmatprep.subr.bf16.mxu0 %v3694
        %4022 = vmatpush2.bf16.msra.mxu0 %v3693
        %4023 = vmatprep.subr.bf16.mxu0 %v3690
        %4024 = vmatpush2.bf16.msra.mxu0 %v3689
        %4025 = vmatprep.mubr.bf16.mxu0 %v3118
        %4026 = vmatmul.mubr.bf16.gmra.mxu0 %v3117
        %v4027 = vpop.f32.mrf.mxu0
        %v4028 = vadd.f32 %v3262, %v4027
        %v4029 = vpop.f32.mrf.mxu0
        %v4030 = vadd.f32 %v3266, %v4029
        %v4031 = vpop.f32.mrf.mxu0
        %v4032 = vpop.f32.mrf.mxu0
        %4033 = vdwg.mxu0
        %4034 = vmatprep.subr.bf16.mxu0 %v3750
        %4035 = vmatpush1.bf16.msra.mxu0 %v3749
        %4036 = vmatprep.subr.bf16.mxu0 %v3746
        %4037 = vmatpush1.bf16.msra.mxu0 %v3745
        %4038 = vmatprep.subr.bf16.mxu0 %v3742
        %4039 = vmatpush1.bf16.msra.mxu0 %v3741
        %4040 = vmatprep.subr.bf16.mxu0 %v3738
        %4041 = vmatpush1.bf16.msra.mxu0 %v3737
        %4042 = vmatprep.subr.bf16.mxu0 %v3734
        %4043 = vmatpush1.bf16.msra.mxu0 %v3733
        %4044 = vmatprep.subr.bf16.mxu0 %v3730
        %4045 = vmatpush1.bf16.msra.mxu0 %v3729
        %4046 = vmatprep.subr.bf16.mxu0 %v3726
        %4047 = vmatpush1.bf16.msra.mxu0 %v3725
        %4048 = vmatprep.subr.bf16.mxu0 %v3722
        %4049 = vmatpush1.bf16.msra.mxu0 %v3721
        %4050 = vmatprep.subr.bf16.mxu0 %v3782
        %4051 = vmatpush2.bf16.msra.mxu0 %v3781
        %4052 = vmatprep.subr.bf16.mxu0 %v3778
        %4053 = vmatpush2.bf16.msra.mxu0 %v3777
        %4054 = vmatprep.subr.bf16.mxu0 %v3774
        %4055 = vmatpush2.bf16.msra.mxu0 %v3773
        %4056 = vmatprep.subr.bf16.mxu0 %v3770
        %4057 = vmatpush2.bf16.msra.mxu0 %v3769
        %4058 = vmatprep.subr.bf16.mxu0 %v3766
        %4059 = vmatpush2.bf16.msra.mxu0 %v3765
        %4060 = vmatprep.subr.bf16.mxu0 %v3762
        %4061 = vmatpush2.bf16.msra.mxu0 %v3761
        %4062 = vmatprep.subr.bf16.mxu0 %v3758
        %4063 = vmatpush2.bf16.msra.mxu0 %v3757
        %4064 = vmatprep.subr.bf16.mxu0 %v3754
        %4065 = vmatpush2.bf16.msra.mxu0 %v3753
        %4066 = vmatprep.mubr.bf16.mxu0 %v3120
        %4067 = vmatmul.mubr.bf16.gmra.mxu0 %v3119
        %v4068 = vpop.f32.mrf.mxu0
        %v4069 = vadd.f32 %v4028, %v4068
        %v4070 = vpop.f32.mrf.mxu0
        %v4071 = vadd.f32 %v4030, %v4070
        %v4072 = vpop.f32.mrf.mxu0
        %v4073 = vpop.f32.mrf.mxu0
        %4074 = vdwg.mxu0
        %v4075 = vmul.f32 %v3987, 0.5
        %v4076 = vmul.f32 %v3989, 0.5
        %v4077 = vmul.f32 %v4069, 0.5
        %v4078 = vmul.f32 %v4071, 0.5
        %v4079 = vmul.f32 %v3987, %v3987
        %v4080 = vmul.f32 %v3989, %v3989
        %v4081 = vmul.f32 %v4069, %v4069
        %v4082 = vmul.f32 %v4071, %v4071
        %v4083 = vmul.f32 %v4079, %v3987
        %v4084 = vmul.f32 %v4080, %v3989
        %v4085 = vmul.f32 %v4081, %v4069
        %v4086 = vmul.f32 %v4082, %v4071
        %v4087 = vmul.f32 %v4083, 0.044715
        %v4088 = vmul.f32 %v4084, 0.044715
        %v4089 = vmul.f32 %v4085, 0.044715
        %v4090 = vmul.f32 %v4086, 0.044715
        %v4091 = vadd.f32 %v3987, %v4087
        %v4092 = vadd.f32 %v3989, %v4088
        %v4093 = vadd.f32 %v4069, %v4089
        %v4094 = vadd.f32 %v4071, %v4090
        %v4095 = vmul.f32 %v4091, 0.7978846
        %v4096 = vmul.f32 %v4092, 0.7978846
        %v4097 = vmul.f32 %v4093, 0.7978846
        %v4098 = vmul.f32 %v4094, 0.7978846
        %v4099 = vtanh.pop %v4095
        %v4100 = vtanh.pop %v4096
        %v4101 = vtanh.pop %v4097
        %v4102 = vtanh.pop %v4098
        %v4103 = vadd.f32 %v4099, 1.0
        %v4104 = vadd.f32 %v4100, 1.0
        %v4105 = vadd.f32 %v4101, 1.0
        %v4106 = vadd.f32 %v4102, 1.0
        %v4107 = vmul.f32 %v4075, %v4103
        %v4108 = vmul.f32 %v4076, %v4104
        %v4109 = vmul.f32 %v4077, %v4105
        %v4110 = vmul.f32 %v4078, %v4106
        %v4111 = vpack.c.bf16 %v4107, %v4107
        %v4112 = vpack.c.bf16 %v4108, %v4108
        %v4113 = vpack.c.bf16 %v4109, %v4109
        %v4114 = vpack.c.bf16 %v4110, %v4110
        %v4115 = vld [vmem:[%s708] sm:$0xf]
        %v4116 = vld [vmem:[%s708 + $0x4] sm:$0xf]
        %v4117 = vld [vmem:[%s708 + $0x8] sm:$0xf]
        %v4118 = vld [vmem:[%s708 + $0xc] sm:$0xf]
        %v4119 = vld [vmem:[%s708 + $0x10] sm:$0xf]
        %v4120 = vld [vmem:[%s708 + $0x14] sm:$0xf]
        %v4121 = vld [vmem:[%s708 + $0x18] sm:$0xf]
        %v4122 = vld [vmem:[%s708 + $0x1c] sm:$0xf]
        %v4123 = vld [vmem:[%s708 + $0x20] sm:$0xf]
        %v4124 = vld [vmem:[%s708 + $0x24] sm:$0xf]
        %v4125 = vld [vmem:[%s708 + $0x28] sm:$0xf]
        %v4126 = vld [vmem:[%s708 + $0x2c] sm:$0xf]
        %v4127 = vld [vmem:[%s708 + $0x30] sm:$0xf]
        %v4128 = vld [vmem:[%s708 + $0x34] sm:$0xf]
        %v4129 = vld [vmem:[%s708 + $0x38] sm:$0xf]
        %v4130 = vld [vmem:[%s708 + $0x3c] sm:$0xf]
        %v4131 = vld [vmem:[%s708 + $0x40] sm:$0xf]
        %v4132 = vld [vmem:[%s708 + $0x44] sm:$0xf]
        %v4133 = vld [vmem:[%s708 + $0x48] sm:$0xf]
        %v4134 = vld [vmem:[%s708 + $0x4c] sm:$0xf]
        %v4135 = vld [vmem:[%s708 + $0x50] sm:$0xf]
        %v4136 = vld [vmem:[%s708 + $0x54] sm:$0xf]
        %v4137 = vld [vmem:[%s708 + $0x58] sm:$0xf]
        %v4138 = vld [vmem:[%s708 + $0x5c] sm:$0xf]
        %v4139 = vld [vmem:[%s708 + $0x60] sm:$0xf]
        %v4140 = vld [vmem:[%s708 + $0x64] sm:$0xf]
        %v4141 = vld [vmem:[%s708 + $0x68] sm:$0xf]
        %v4142 = vld [vmem:[%s708 + $0x6c] sm:$0xf]
        %v4143 = vld [vmem:[%s708 + $0x70] sm:$0xf]
        %v4144 = vld [vmem:[%s708 + $0x74] sm:$0xf]
        %v4145 = vld [vmem:[%s708 + $0x78] sm:$0xf]
        %v4146 = vld [vmem:[%s708 + $0x7c] sm:$0xf]
        %v4147 = vld [vmem:[%s708 + $0x80] sm:$0xf]
        %v4148 = vld [vmem:[%s708 + $0x84] sm:$0xf]
        %v4149 = vld [vmem:[%s708 + $0x88] sm:$0xf]
        %v4150 = vld [vmem:[%s708 + $0x8c] sm:$0xf]
        %v4151 = vld [vmem:[%s708 + $0x90] sm:$0xf]
        %v4152 = vld [vmem:[%s708 + $0x94] sm:$0xf]
        %v4153 = vld [vmem:[%s708 + $0x98] sm:$0xf]
        %v4154 = vld [vmem:[%s708 + $0x9c] sm:$0xf]
        %v4155 = vld [vmem:[%s708 + $0xa0] sm:$0xf]
        %v4156 = vld [vmem:[%s708 + $0xa4] sm:$0xf]
        %v4157 = vld [vmem:[%s708 + $0xa8] sm:$0xf]
        %v4158 = vld [vmem:[%s708 + $0xac] sm:$0xf]
        %v4159 = vld [vmem:[%s708 + $0xb0] sm:$0xf]
        %v4160 = vld [vmem:[%s708 + $0xb4] sm:$0xf]
        %v4161 = vld [vmem:[%s708 + $0xb8] sm:$0xf]
        %v4162 = vld [vmem:[%s708 + $0xbc] sm:$0xf]
        %v4163 = vld [vmem:[%s708 + $0xc0] sm:$0xf]
        %v4164 = vld [vmem:[%s708 + $0xc4] sm:$0xf]
        %v4165 = vld [vmem:[%s708 + $0xc8] sm:$0xf]
        %v4166 = vld [vmem:[%s708 + $0xcc] sm:$0xf]
        %v4167 = vld [vmem:[%s708 + $0xd0] sm:$0xf]
        %v4168 = vld [vmem:[%s708 + $0xd4] sm:$0xf]
        %v4169 = vld [vmem:[%s708 + $0xd8] sm:$0xf]
        %v4170 = vld [vmem:[%s708 + $0xdc] sm:$0xf]
        %v4171 = vld [vmem:[%s708 + $0xe0] sm:$0xf]
        %v4172 = vld [vmem:[%s708 + $0xe4] sm:$0xf]
        %v4173 = vld [vmem:[%s708 + $0xe8] sm:$0xf]
        %v4174 = vld [vmem:[%s708 + $0xec] sm:$0xf]
        %v4175 = vld [vmem:[%s708 + $0xf0] sm:$0xf]
        %v4176 = vld [vmem:[%s708 + $0xf4] sm:$0xf]
        %v4177 = vld [vmem:[%s708 + $0xf8] sm:$0xf]
        %v4178 = vld [vmem:[%s708 + $0xfc] sm:$0xf]
        %v4179 = vld [vmem:[%s809] sm:$0x1]
        %v4181 = vlaneseq
        %v4182 = vshrl.u32 %v4181, 7
        %v4183 = vsub.s32 0, %v4182
        %v4184 = vrot.slane %v4179, %v4183
        %v4250 = vunpack.c.l.b16 %v4115
        %v4251 = vunpack.c.l.b16 %v4116
        %v4252 = vunpack.c.l.b16 %v4117
        %v4253 = vunpack.c.l.b16 %v4118
        %v4254 = vunpack.c.l.b16 %v4119
        %v4255 = vunpack.c.l.b16 %v4120
        %v4256 = vunpack.c.l.b16 %v4121
        %v4257 = vunpack.c.l.b16 %v4122
        %v4258 = vunpack.c.l.b16 %v4123
        %v4259 = vunpack.c.l.b16 %v4124
        %v4260 = vunpack.c.l.b16 %v4125
        %v4261 = vunpack.c.l.b16 %v4126
        %v4262 = vunpack.c.l.b16 %v4127
        %v4263 = vunpack.c.l.b16 %v4128
        %v4264 = vunpack.c.l.b16 %v4129
        %v4265 = vunpack.c.l.b16 %v4130
        %v4266 = vunpack.c.l.b16 %v4131
        %v4267 = vunpack.c.l.b16 %v4132
        %v4268 = vunpack.c.l.b16 %v4133
        %v4269 = vunpack.c.l.b16 %v4134
        %v4270 = vunpack.c.l.b16 %v4135
        %v4271 = vunpack.c.l.b16 %v4136
        %v4272 = vunpack.c.l.b16 %v4137
        %v4273 = vunpack.c.l.b16 %v4138
        %v4274 = vunpack.c.l.b16 %v4139
        %v4275 = vunpack.c.l.b16 %v4140
        %v4276 = vunpack.c.l.b16 %v4141
        %v4277 = vunpack.c.l.b16 %v4142
        %v4278 = vunpack.c.l.b16 %v4143
        %v4279 = vunpack.c.l.b16 %v4144
        %v4280 = vunpack.c.l.b16 %v4145
        %v4281 = vunpack.c.l.b16 %v4146
        %v4282 = vunpack.c.l.b16 %v4147
        %v4283 = vunpack.c.l.b16 %v4148
        %v4284 = vunpack.c.l.b16 %v4149
        %v4285 = vunpack.c.l.b16 %v4150
        %v4286 = vunpack.c.l.b16 %v4151
        %v4287 = vunpack.c.l.b16 %v4152
        %v4288 = vunpack.c.l.b16 %v4153
        %v4289 = vunpack.c.l.b16 %v4154
        %v4290 = vunpack.c.l.b16 %v4155
        %v4291 = vunpack.c.l.b16 %v4156
        %v4292 = vunpack.c.l.b16 %v4157
        %v4293 = vunpack.c.l.b16 %v4158
        %v4294 = vunpack.c.l.b16 %v4159
        %v4295 = vunpack.c.l.b16 %v4160
        %v4296 = vunpack.c.l.b16 %v4161
        %v4297 = vunpack.c.l.b16 %v4162
        %v4298 = vunpack.c.l.b16 %v4163
        %v4299 = vunpack.c.l.b16 %v4164
        %v4300 = vunpack.c.l.b16 %v4165
        %v4301 = vunpack.c.l.b16 %v4166
        %v4302 = vunpack.c.l.b16 %v4167
        %v4303 = vunpack.c.l.b16 %v4168
        %v4304 = vunpack.c.l.b16 %v4169
        %v4305 = vunpack.c.l.b16 %v4170
        %v4306 = vunpack.c.l.b16 %v4171
        %v4307 = vunpack.c.l.b16 %v4172
        %v4308 = vunpack.c.l.b16 %v4173
        %v4309 = vunpack.c.l.b16 %v4174
        %v4310 = vunpack.c.l.b16 %v4175
        %v4311 = vunpack.c.l.b16 %v4176
        %v4312 = vunpack.c.l.b16 %v4177
        %v4313 = vunpack.c.l.b16 %v4178
        %v4314 = vpack.c.b16 %v4251, %v4250
        %v4315 = vpack.c.b16 %v4253, %v4252
        %v4316 = vpack.c.b16 %v4255, %v4254
        %v4317 = vpack.c.b16 %v4257, %v4256
        %v4318 = vpack.c.b16 %v4259, %v4258
        %v4319 = vpack.c.b16 %v4261, %v4260
        %v4320 = vpack.c.b16 %v4263, %v4262
        %v4321 = vpack.c.b16 %v4265, %v4264
        %v4322 = vpack.c.b16 %v4267, %v4266
        %v4323 = vpack.c.b16 %v4269, %v4268
        %v4324 = vpack.c.b16 %v4271, %v4270
        %v4325 = vpack.c.b16 %v4273, %v4272
        %v4326 = vpack.c.b16 %v4275, %v4274
        %v4327 = vpack.c.b16 %v4277, %v4276
        %v4328 = vpack.c.b16 %v4279, %v4278
        %v4329 = vpack.c.b16 %v4281, %v4280
        %v4330 = vpack.c.b16 %v4283, %v4282
        %v4331 = vpack.c.b16 %v4285, %v4284
        %v4332 = vpack.c.b16 %v4287, %v4286
        %v4333 = vpack.c.b16 %v4289, %v4288
        %v4334 = vpack.c.b16 %v4291, %v4290
        %v4335 = vpack.c.b16 %v4293, %v4292
        %v4336 = vpack.c.b16 %v4295, %v4294
        %v4337 = vpack.c.b16 %v4297, %v4296
        %v4338 = vpack.c.b16 %v4299, %v4298
        %v4339 = vpack.c.b16 %v4301, %v4300
        %v4340 = vpack.c.b16 %v4303, %v4302
        %v4341 = vpack.c.b16 %v4305, %v4304
        %v4342 = vpack.c.b16 %v4307, %v4306
        %v4343 = vpack.c.b16 %v4309, %v4308
        %v4344 = vpack.c.b16 %v4311, %v4310
        %v4345 = vpack.c.b16 %v4313, %v4312
        %4378 = vmatprep.subr.bf16.mxu0 0
        %4379 = vmatpush1.bf16.msra.mxu0 %v4321
        %4380 = vmatprep.subr.bf16.mxu0 0
        %4381 = vmatpush1.bf16.msra.mxu0 %v4320
        %4382 = vmatprep.subr.bf16.mxu0 0
        %4383 = vmatpush1.bf16.msra.mxu0 %v4319
        %4384 = vmatprep.subr.bf16.mxu0 0
        %4385 = vmatpush1.bf16.msra.mxu0 %v4318
        %4386 = vmatprep.subr.bf16.mxu0 0
        %4387 = vmatpush1.bf16.msra.mxu0 %v4317
        %4388 = vmatprep.subr.bf16.mxu0 0
        %4389 = vmatpush1.bf16.msra.mxu0 %v4316
        %4390 = vmatprep.subr.bf16.mxu0 0
        %4391 = vmatpush1.bf16.msra.mxu0 %v4315
        %4392 = vmatprep.subr.bf16.mxu0 0
        %4393 = vmatpush1.bf16.msra.mxu0 %v4314
        %4394 = vmatprep.subr.bf16.mxu0 0
        %4395 = vmatpush2.bf16.msra.mxu0 %v4329
        %4396 = vmatprep.subr.bf16.mxu0 0
        %4397 = vmatpush2.bf16.msra.mxu0 %v4328
        %4398 = vmatprep.subr.bf16.mxu0 0
        %4399 = vmatpush2.bf16.msra.mxu0 %v4327
        %4400 = vmatprep.subr.bf16.mxu0 0
        %4401 = vmatpush2.bf16.msra.mxu0 %v4326
        %4402 = vmatprep.subr.bf16.mxu0 0
        %4403 = vmatpush2.bf16.msra.mxu0 %v4325
        %4404 = vmatprep.subr.bf16.mxu0 0
        %4405 = vmatpush2.bf16.msra.mxu0 %v4324
        %4406 = vmatprep.subr.bf16.mxu0 0
        %4407 = vmatpush2.bf16.msra.mxu0 %v4323
        %4408 = vmatprep.subr.bf16.mxu0 0
        %4409 = vmatpush2.bf16.msra.mxu0 %v4322
        %4410 = vmatprep.mubr.bf16.mxu0 %v4112
        %4411 = vmatmul.mubr.bf16.gmra.mxu0 %v4111
        %v4412 = vpop.f32.mrf.mxu0
        %v4413 = vadd.f32 %v4184, %v4412
        %v4414 = vpop.f32.mrf.mxu0
        %v4415 = vpop.f32.mrf.mxu0
        %v4416 = vpop.f32.mrf.mxu0
        %4417 = vdwg.mxu0
        %4418 = vmatprep.subr.bf16.mxu0 0
        %4419 = vmatpush1.bf16.msra.mxu0 %v4337
        %4420 = vmatprep.subr.bf16.mxu0 0
        %4421 = vmatpush1.bf16.msra.mxu0 %v4336
        %4422 = vmatprep.subr.bf16.mxu0 0
        %4423 = vmatpush1.bf16.msra.mxu0 %v4335
        %4424 = vmatprep.subr.bf16.mxu0 0
        %4425 = vmatpush1.bf16.msra.mxu0 %v4334
        %4426 = vmatprep.subr.bf16.mxu0 0
        %4427 = vmatpush1.bf16.msra.mxu0 %v4333
        %4428 = vmatprep.subr.bf16.mxu0 0
        %4429 = vmatpush1.bf16.msra.mxu0 %v4332
        %4430 = vmatprep.subr.bf16.mxu0 0
        %4431 = vmatpush1.bf16.msra.mxu0 %v4331
        %4432 = vmatprep.subr.bf16.mxu0 0
        %4433 = vmatpush1.bf16.msra.mxu0 %v4330
        %4434 = vmatprep.subr.bf16.mxu0 0
        %4435 = vmatpush2.bf16.msra.mxu0 %v4345
        %4436 = vmatprep.subr.bf16.mxu0 0
        %4437 = vmatpush2.bf16.msra.mxu0 %v4344
        %4438 = vmatprep.subr.bf16.mxu0 0
        %4439 = vmatpush2.bf16.msra.mxu0 %v4343
        %4440 = vmatprep.subr.bf16.mxu0 0
        %4441 = vmatpush2.bf16.msra.mxu0 %v4342
        %4442 = vmatprep.subr.bf16.mxu0 0
        %4443 = vmatpush2.bf16.msra.mxu0 %v4341
        %4444 = vmatprep.subr.bf16.mxu0 0
        %4445 = vmatpush2.bf16.msra.mxu0 %v4340
        %4446 = vmatprep.subr.bf16.mxu0 0
        %4447 = vmatpush2.bf16.msra.mxu0 %v4339
        %4448 = vmatprep.subr.bf16.mxu0 0
        %4449 = vmatpush2.bf16.msra.mxu0 %v4338
        %4450 = vmatprep.mubr.bf16.mxu0 %v4114
        %4451 = vmatmul.mubr.bf16.gmra.mxu0 %v4113
        %v4452 = vpop.f32.mrf.mxu0
        %v4453 = vadd.f32 %v4413, %v4452
        %v4454 = vpop.f32.mrf.mxu0
        %v4455 = vpop.f32.mrf.mxu0
        %v4456 = vpop.f32.mrf.mxu0
        %4457 = vdwg.mxu0
        %vm4458 = vcmask 7168
        %4459 = vst.msk [vmem:[%s816] sm:$0xff] %vm4458, %v4453
        %p4460 = scmp.lt.s32.totalorder %s30, 1
        %s4461 = scalar_select %p4460, %s30, 1
        %p4462 = scmp.lt.s32.totalorder %s31, 0
        %s4463 = scalar_select %p4462, %s31, 0
        %s4464 = sadd.s32 %s4463, %s4461
        %s4465 = smul.addr %s4464, 8
        %s4466 = scalar_lea.vmem %s13, %s4465
        // Predicated region
        $region113: #{tpu_custom_call.1} parent=71 // pred_check
          %p4467 = pneg %p396
        $region114: #{tpu_custom_call.1} parent=71 // pred_check_branch
          %4469 = sbr.rel (%p4467) target = $region116
        $region115: #{tpu_custom_call.1} parent=71 // pred_region
          _
        $region116: #{tpu_custom_call.1} parent=71 // pred_fallthru
          _
      $region72: #{tpu_custom_call.1} parent=5 // pred_fallthru
        _
      %p4470 = scmp.le.s32.totalorder 2, %s21
      // Predicated region
      $region117: #{tpu_custom_call.1} parent=5 // pred_check
        %p4471 = pneg %p4470
      $region118: #{tpu_custom_call.1} parent=5 // pred_check_branch
        %4473 = sbr.rel (%p4471) target = $region120
      $region119: #{tpu_custom_call.1} parent=5 // pred_region
        %s4474 = ssub.s32 %s21, 2
        // Predicated region
        $region121: #{tpu_custom_call.1} parent=119 // pred_check
          %p4475 = pneg %p402
        $region122: #{tpu_custom_call.1} parent=119 // pred_check_branch
          %4477 = sbr.rel (%p4475) target = $region124
        $region123: #{tpu_custom_call.1} parent=119 // pred_region
          %p4478 = scmp.lt.s32.totalorder %s32, 1
          %s4479 = scalar_select %p4478, %s32, 1
          %p4480 = scmp.lt.s32.totalorder %s33, 0
          %s4481 = scalar_select %p4480, %s33, 0
          %s4482 = sadd.s32 %s4481, %s4479
          %s4483 = smul.addr %s4482, 8
          %s4484 = scalar_lea.vmem %s13, %s4483
        $region124: #{tpu_custom_call.1} parent=119 // pred_fallthru
          _
      $region120: #{tpu_custom_call.1} parent=5 // pred_fallthru
        _
    $region6: #{tpu_custom_call.1} parent=1 // loop_footer
      %s25 = sadd.s32 1, %s21
    $region7: #{tpu_custom_call.1} parent=1 // loop_footer_branch
      %20 = sbr.rel target = $region3
    $region8: #{tpu_custom_call.1} parent=1 // loop_exit
      _
    %4485 = vsyncpa [#allocation3], 1
    %s4486 = scalar_lea.sflag [#allocation3], 1
    %4487 = vsyncpa %s4486, 1
    %4488 = vsyncpa [#allocation5], 1

</llo_original>
